<compile_context>
chip_gen: v7x
topology: tpu7x:2x2x1
jax: 0.10.0
libtpu: 0.0.40
codegen_flags: <defaults>
</compile_context>

<pallas_src>
import functools
import math

import jax
import jax.numpy as jnp
from jax.experimental import pallas as pl
from jax.experimental.pallas import tpu as pltpu

LN_EPS = 1e-5


def _layer_norm(v, g, b):
    mu = jnp.mean(v, axis=-1, keepdims=True)
    var = jnp.mean((v - mu) ** 2, axis=-1, keepdims=True)
    return (v - mu) * jax.lax.rsqrt(var + LN_EPS) * g + b


def _block_kernel(x_ref,
                  ln1g_ref, ln1b_ref,
                  wq_ref, bq_ref, wkv_ref, bkv_ref,
                  wo_ref, bo_ref,
                  ln2g_ref, ln2b_ref,
                  wfc_ref, bfc_ref,
                  wpr_ref, bpr_ref,
                  o_ref,
                  k_sc, v_sc, q_sc,
                  *, n_head):
    # grid = (batch, L // tL).  x block is the full sequence of one batch element,
    # output block is one tL-row tile of it.
    L = x_ref.shape[1]
    E = x_ref.shape[2]
    tL = o_ref.shape[1]
    hd = E // n_head
    lt = pl.program_id(1)

    # ---- K/V for the whole sequence: computed once per batch element (first
    # sequence tile) and cached head-major in bf16 VMEM scratch.
    @pl.when(lt == 0)
    def _():
        xf = x_ref[0].astype(jnp.float32)                              # (L, E)
        h = _layer_norm(xf, ln1g_ref[...], ln1b_ref[...])
        kv = jnp.dot(h.astype(jnp.bfloat16), wkv_ref[...],
                     preferred_element_type=jnp.float32) + bkv_ref[...]  # (L, 2E) f32
        for hi in range(n_head):  # static: layout-only stores, once per batch element
            k_sc[hi] = kv[:, hi * hd:(hi + 1) * hd].astype(jnp.bfloat16)
            v_sc[hi] = kv[:, E + hi * hd:E + (hi + 1) * hd].astype(jnp.bfloat16)

    # ---- query tile: rows [lt*tL, lt*tL + tL) of the sequence
    row0 = pl.multiple_of(lt * tL, 8)
    x_tile = x_ref[0, pl.ds(row0, tL), :].astype(jnp.float32)          # (tL, E)

    hq = _layer_norm(x_tile, ln1g_ref[...], ln1b_ref[...])
    # 1/sqrt(hd) is already folded into wq / bq.
    q = jnp.dot(hq.astype(jnp.bfloat16), wq_ref[...],
                preferred_element_type=jnp.float32) + bq_ref[...]      # (tL, E)
    for hi in range(n_head):
        q_sc[hi] = q[:, hi * hd:(hi + 1) * hd].astype(jnp.bfloat16)

    qh = q_sc[...]                                                     # (H, tL, hd) bf16
    kh = k_sc[...]                                                     # (H, L, hd)  bf16
    vh = v_sc[...]                                                     # (H, L, hd)  bf16

    # ---- batched multi-head attention (heads = batch dim of a single dot_general)
    s = jnp.einsum("hqd,hkd->hqk", qh, kh,
                   preferred_element_type=jnp.float32)                 # (H, tL, L)
    s = s - jnp.max(s, axis=-1, keepdims=True)
    p = jnp.exp(s)
    p = p * pl.reciprocal(jnp.sum(p, axis=-1, keepdims=True), approx=True)
    o = jnp.einsum("hqk,hkd->hqd", p.astype(jnp.bfloat16), vh,
                   preferred_element_type=jnp.float32)                 # (H, tL, hd)
    attn = jnp.concatenate([o[hi] for hi in range(n_head)], axis=-1)   # (tL, E)
    attn = jnp.dot(attn.astype(jnp.bfloat16), wo_ref[...],
                   preferred_element_type=jnp.float32) + bo_ref[...]
    x1 = x_tile + attn

    # ---- MLP branch: LN2 -> c_fc -> QuickGELU -> c_proj
    h2 = _layer_norm(x1, ln2g_ref[...], ln2b_ref[...])
    f = jnp.dot(h2.astype(jnp.bfloat16), wfc_ref[...],
                preferred_element_type=jnp.float32) + bfc_ref[...]     # (tL, 4E)
    f = f * jax.nn.sigmoid(1.702 * f)                                  # QuickGELU (f32)
    m = jnp.dot(f.astype(jnp.bfloat16), wpr_ref[...],
                preferred_element_type=jnp.float32) + bpr_ref[...]     # (tL, E)

    o_ref[0] = (x1 + m).astype(o_ref.dtype)


def init_params(key, d_model, n_head):
    del n_head
    ks = jax.random.split(key, 6)
    E = d_model
    std = 0.02
    params = dict(
        ln1_g=jnp.ones((1, E), jnp.float32),
        ln1_b=jnp.zeros((1, E), jnp.float32),
        # nn.MultiheadAttention: in_proj_weight (3E, E), in_proj_bias (3E,)
        w_qkv=std * jax.random.normal(ks[0], (3 * E, E), jnp.float32),
        b_qkv=std * jax.random.normal(ks[1], (3 * E,), jnp.float32),
        # out_proj: Linear(E, E)
        w_o=std * jax.random.normal(ks[2], (E, E), jnp.float32),
        b_o=jnp.zeros((E,), jnp.float32),
        ln2_g=jnp.ones((1, E), jnp.float32),
        ln2_b=jnp.zeros((1, E), jnp.float32),
        # mlp: c_fc Linear(E, 4E), c_proj Linear(4E, E)
        w_fc=std * jax.random.normal(ks[3], (4 * E, E), jnp.float32),
        b_fc=std * jax.random.normal(ks[4], (4 * E,), jnp.float32),
        w_pr=std * jax.random.normal(ks[5], (E, 4 * E), jnp.float32),
        b_pr=jnp.zeros((E,), jnp.float32),
    )
    return params


def _prep_weights(params, d_model, n_head):
    """Transpose to row-major matmul form, fold the 1/sqrt(hd) scale into the Q
    projection, and cast matmul weights to bf16 (biases / LN params stay f32)."""
    E = d_model
    hd = E // n_head
    scale = 1.0 / math.sqrt(hd)
    wq_t = (params["w_qkv"][:E, :].T * scale).astype(jnp.bfloat16)      # (E, E)
    bq = (params["b_qkv"][:E] * scale).reshape(1, E).astype(jnp.float32)
    wkv_t = params["w_qkv"][E:, :].T.astype(jnp.bfloat16)               # (E, 2E)
    bkv = params["b_qkv"][E:].reshape(1, 2 * E).astype(jnp.float32)
    wo_t = params["w_o"].T.astype(jnp.bfloat16)                         # (E, E)
    bo = params["b_o"].reshape(1, E).astype(jnp.float32)
    wfc_t = params["w_fc"].T.astype(jnp.bfloat16)                       # (E, 4E)
    bfc = params["b_fc"].reshape(1, 4 * E).astype(jnp.float32)
    wpr_t = params["w_pr"].T.astype(jnp.bfloat16)                       # (4E, E)
    bpr = params["b_pr"].reshape(1, E).astype(jnp.float32)
    return [params["ln1_g"], params["ln1_b"],
            wq_t, bq, wkv_t, bkv, wo_t, bo,
            params["ln2_g"], params["ln2_b"],
            wfc_t, bfc, wpr_t, bpr]


def _round_up(x, m):
    return (x + m - 1) // m * m


def residual_attention_block_batch_first(x_nle, params, n_head, seq_tile=None):
    """Batch-first entry point: x_nle is (N, L, E) f32.  No HBM transposes."""
    N, L, E = x_nle.shape
    assert E % n_head == 0
    hd = E // n_head
    if seq_tile is None:
        seq_tile = L if L <= 256 else 256
    tL = seq_tile
    assert L % tL == 0 and tL % 8 == 0, "seq_tile must divide L and be a multiple of 8"
    # TODO(synk): pad/mask ragged sequence lengths instead of asserting divisibility.

    weights = _prep_weights(params, E, n_head)

    def full_spec(a):
        return pl.BlockSpec(a.shape, lambda b, lt, _nd=a.ndim: (0,) * _nd)

    # Explicit VMEM budget: x/out blocks (f32, double-buffered), bf16 weights
    # (double-buffered worst case), head-major K/V/Q scratch (lane-padded), and
    # headroom for the in-kernel (H,tL,L)/(tL,4E) intermediates.
    hd_pad = _round_up(hd, 128)
    est = (4 * (2 * L * E + 2 * tL * E)
           + 2 * 2 * (9 * E * E + 9 * E)
           + 2 * (2 * n_head * L * hd_pad + n_head * tL * hd_pad)
           + 4 * (L * 3 * E + 2 * n_head * tL * L + 2 * tL * 4 * E + tL * 3 * E))
    vmem_limit = int(min(100 * 2**20, max(4 * est, 32 * 2**20)))

    out = pl.pallas_call(
        functools.partial(_block_kernel, n_head=n_head),
        out_shape=jax.ShapeDtypeStruct((N, L, E), x_nle.dtype),
        grid_spec=pltpu.PrefetchScalarGridSpec(
            num_scalar_prefetch=0,
            grid=(N, L // tL),
            in_specs=[pl.BlockSpec((1, L, E), lambda b, lt: (b, 0, 0))]
                     + [full_spec(w) for w in weights],
            out_specs=pl.BlockSpec((1, tL, E), lambda b, lt: (b, lt, 0)),
            scratch_shapes=[pltpu.VMEM((n_head, L, hd), jnp.bfloat16),   # K (head-major)
                            pltpu.VMEM((n_head, L, hd), jnp.bfloat16),   # V (head-major)
                            pltpu.VMEM((n_head, tL, hd), jnp.bfloat16)], # Q tile
        ),
        compiler_params=pltpu.CompilerParams(
            dimension_semantics=("parallel", "arbitrary"),
            vmem_limit_bytes=vmem_limit),
    )(x_nle, *weights)
    return out


def residual_attention_block(x_lne, params, n_head, seq_tile=None):
    """PyTorch-layout wrapper: x_lne is (L, N, E) seq-first like nn.MultiheadAttention.
    Returns (out, None) like the module's (x, memory).  Prefer the batch-first entry
    point above when the surrounding model can keep (N, L, E) to avoid the transposes."""
    out = residual_attention_block_batch_first(
        jnp.transpose(x_lne, (1, 0, 2)), params, n_head, seq_tile)
    return jnp.transpose(out, (1, 0, 2)), None


def _reference(x_lne, params, n_head):
    """Pure-JAX f32 reference mirroring the PyTorch forward, for correctness check."""
    L, N, E = x_lne.shape
    hd = E // n_head
    x = x_lne.astype(jnp.float32)

    def ln(v, g, b):
        mu = jnp.mean(v, -1, keepdims=True)
        var = jnp.mean((v - mu) ** 2, -1, keepdims=True)
        return (v - mu) * jax.lax.rsqrt(var + LN_EPS) * g[0] + b[0]

    h = ln(x, params["ln1_g"], params["ln1_b"])
    qkv = jnp.einsum("lne,fe->lnf", h, params["w_qkv"]) + params["b_qkv"]
    q, k, v = qkv[..., :E], qkv[..., E:2 * E], qkv[..., 2 * E:]

    def split(t):  # (L,N,E) -> (N, n_head, L, hd)
        return jnp.transpose(t.reshape(L, N, n_head, hd), (1, 2, 0, 3))

    qh, kh, vh = split(q), split(k), split(v)
    s = jnp.einsum("nhld,nhmd->nhlm", qh, kh) / math.sqrt(hd)
    p = jax.nn.softmax(s, axis=-1)
    o = jnp.einsum("nhlm,nhmd->nhld", p, vh)
    o = jnp.transpose(o, (2, 0, 1, 3)).reshape(L, N, E)
    attn = jnp.einsum("lne,fe->lnf", o, params["w_o"]) + params["b_o"]
    x = x + attn

    h2 = ln(x, params["ln2_g"], params["ln2_b"])
    f = jnp.einsum("lne,fe->lnf", h2, params["w_fc"]) + params["b_fc"]
    f = f * jax.nn.sigmoid(1.702 * f)
    m = jnp.einsum("lnf,ef->lne", f, params["w_pr"]) + params["b_pr"]
    return x + m


if __name__ == "__main__":
    # Small but lane-aligned shapes: seq=128 (two 64-row tiles), batch=2,
    # d_model=128, heads=4 (head_dim=32).
    L, N, E, H = 128, 2, 128, 4
    key = jax.random.PRNGKey(0)
    kx, kp = jax.random.split(key)
    x = jax.random.normal(kx, (L, N, E), jnp.float32)
    params = init_params(kp, E, H)

    out, memory = residual_attention_block(x, params, H, seq_tile=64)
    out = jax.block_until_ready(out)

    ref = _reference(x, params, H)
    assert out.shape == (L, N, E)
    err = float(jnp.max(jnp.abs(out - ref)))
    # bf16 MXU inputs + approx reciprocal -> relaxed tolerance vs the f32 reference.
    assert err < 2e-2, f"mismatch vs pure-JAX reference: {err}"
    print("KERNEL_OK")
</pallas_src>

<mosaic_0001>
module attributes {stable_mosaic.version = 11 : i64} {
  func.func @_block_kernel(%arg0: i32, %arg1: i32, %arg2: memref<1x128x128xf32, #tpu.memory_space<vmem>>, %arg3: memref<1x128xf32, #tpu.memory_space<vmem>>, %arg4: memref<1x128xf32, #tpu.memory_space<vmem>>, %arg5: memref<128x128xbf16, #tpu.memory_space<vmem>>, %arg6: memref<1x128xf32, #tpu.memory_space<vmem>>, %arg7: memref<128x256xbf16, #tpu.memory_space<vmem>>, %arg8: memref<1x256xf32, #tpu.memory_space<vmem>>, %arg9: memref<128x128xbf16, #tpu.memory_space<vmem>>, %arg10: memref<1x128xf32, #tpu.memory_space<vmem>>, %arg11: memref<1x128xf32, #tpu.memory_space<vmem>>, %arg12: memref<1x128xf32, #tpu.memory_space<vmem>>, %arg13: memref<128x512xbf16, #tpu.memory_space<vmem>>, %arg14: memref<1x512xf32, #tpu.memory_space<vmem>>, %arg15: memref<512x128xbf16, #tpu.memory_space<vmem>>, %arg16: memref<1x128xf32, #tpu.memory_space<vmem>>, %arg17: memref<1x64x128xf32, #tpu.memory_space<vmem>>, %arg18: memref<4x128x32xbf16, #tpu.memory_space<vmem>>, %arg19: memref<4x128x32xbf16, #tpu.memory_space<vmem>>, %arg20: memref<4x64x32xbf16, #tpu.memory_space<vmem>>) attributes {dimension_semantics = [#tpu.dimension_semantics<parallel>, #tpu.dimension_semantics<arbitrary>], iteration_bounds = array<i64: 2, 2>, scalar_prefetch = 0 : i64, scratch_operands = 3 : i64, tpu.core_type = #tpu.core_type<tc>, window_params = [{transform_indices = @transform_0, window_bounds = array<i64: 1, 128, 128>}, {pipeline_mode = #tpu.pipeline_mode<synchronous>, transform_indices = @transform_1, window_bounds = array<i64: 1, 128>}, {pipeline_mode = #tpu.pipeline_mode<synchronous>, transform_indices = @transform_2, window_bounds = array<i64: 1, 128>}, {pipeline_mode = #tpu.pipeline_mode<synchronous>, transform_indices = @transform_3, window_bounds = array<i64: 128, 128>}, {pipeline_mode = #tpu.pipeline_mode<synchronous>, transform_indices = @transform_4, window_bounds = array<i64: 1, 128>}, {pipeline_mode = #tpu.pipeline_mode<synchronous>, transform_indices = @transform_5, window_bounds = array<i64: 128, 256>}, {pipeline_mode = #tpu.pipeline_mode<synchronous>, transform_indices = @transform_6, window_bounds = array<i64: 1, 256>}, {pipeline_mode = #tpu.pipeline_mode<synchronous>, transform_indices = @transform_7, window_bounds = array<i64: 128, 128>}, {pipeline_mode = #tpu.pipeline_mode<synchronous>, transform_indices = @transform_8, window_bounds = array<i64: 1, 128>}, {pipeline_mode = #tpu.pipeline_mode<synchronous>, transform_indices = @transform_9, window_bounds = array<i64: 1, 128>}, {pipeline_mode = #tpu.pipeline_mode<synchronous>, transform_indices = @transform_10, window_bounds = array<i64: 1, 128>}, {pipeline_mode = #tpu.pipeline_mode<synchronous>, transform_indices = @transform_11, window_bounds = array<i64: 128, 512>}, {pipeline_mode = #tpu.pipeline_mode<synchronous>, transform_indices = @transform_12, window_bounds = array<i64: 1, 512>}, {pipeline_mode = #tpu.pipeline_mode<synchronous>, transform_indices = @transform_13, window_bounds = array<i64: 512, 128>}, {pipeline_mode = #tpu.pipeline_mode<synchronous>, transform_indices = @transform_14, window_bounds = array<i64: 1, 128>}, {transform_indices = @transform_15, window_bounds = array<i64: 1, 64, 128>}]} {
    %c0_i32 = arith.constant 0 : i32
    %0 = arith.cmpi eq, %arg1, %c0_i32 : i32
    %1 = arith.extui %0 : i1 to i32
    %c0_i32_0 = arith.constant 0 : i32
    %2 = arith.cmpi ne, %1, %c0_i32_0 : i32
    scf.if %2 {
      %c0_66 = arith.constant 0 : index
      %c0_67 = arith.constant 0 : index
      %c0_68 = arith.constant 0 : index
      %138 = vector.load %arg2[%c0_66, %c0_67, %c0_68] : memref<1x128x128xf32, #tpu.memory_space<vmem>>, vector<1x128x128xf32>
      %139 = vector.shape_cast %138 : vector<1x128x128xf32> to vector<128x128xf32>
      %c0_69 = arith.constant 0 : index
      %c0_70 = arith.constant 0 : index
      %140 = vector.load %arg3[%c0_69, %c0_70] : memref<1x128xf32, #tpu.memory_space<vmem>>, vector<1x128xf32>
      %c0_71 = arith.constant 0 : index
      %c0_72 = arith.constant 0 : index
      %141 = vector.load %arg4[%c0_71, %c0_72] : memref<1x128xf32, #tpu.memory_space<vmem>>, vector<1x128xf32>
      %cst_73 = arith.constant dense<0.000000e+00> : vector<128xf32>
      %142 = vector.multi_reduction <add>, %139, %cst_73 [1] : vector<128x128xf32> to vector<128xf32>
      %143 = vector.shape_cast %142 : vector<128xf32> to vector<128x1xf32>
      %cst_74 = arith.constant 1.280000e+02 : f32
      %144 = vector.broadcast %cst_74 : f32 to vector<128x1xf32>
      %145 = arith.divf %143, %144 : vector<128x1xf32>
      %146 = vector.broadcast %145 : vector<128x1xf32> to vector<128x128xf32>
      %147 = arith.subf %139, %146 : vector<128x128xf32>
      %148 = arith.mulf %147, %147 : vector<128x128xf32>
      %cst_75 = arith.constant dense<0.000000e+00> : vector<128xf32>
      %149 = vector.multi_reduction <add>, %148, %cst_75 [1] : vector<128x128xf32> to vector<128xf32>
      %150 = vector.shape_cast %149 : vector<128xf32> to vector<128x1xf32>
      %cst_76 = arith.constant 1.280000e+02 : f32
      %151 = vector.broadcast %cst_76 : f32 to vector<128x1xf32>
      %152 = arith.divf %150, %151 : vector<128x1xf32>
      %153 = vector.broadcast %145 : vector<128x1xf32> to vector<128x128xf32>
      %154 = arith.subf %139, %153 : vector<128x128xf32>
      %cst_77 = arith.constant 9.99999974E-6 : f32
      %155 = vector.broadcast %cst_77 : f32 to vector<128x1xf32>
      %156 = arith.addf %152, %155 : vector<128x1xf32>
      %157 = math.rsqrt %156 : vector<128x1xf32>
      %158 = vector.broadcast %157 : vector<128x1xf32> to vector<128x128xf32>
      %159 = arith.mulf %154, %158 : vector<128x128xf32>
      %160 = vector.broadcast %140 : vector<1x128xf32> to vector<128x128xf32>
      %161 = arith.mulf %159, %160 : vector<128x128xf32>
      %162 = vector.broadcast %141 : vector<1x128xf32> to vector<128x128xf32>
      %163 = arith.addf %161, %162 : vector<128x128xf32>
      %164 = arith.truncf %163 : vector<128x128xf32> to vector<128x128xbf16>
      %c0_78 = arith.constant 0 : index
      %c0_79 = arith.constant 0 : index
      %165 = vector.load %arg7[%c0_78, %c0_79] : memref<128x256xbf16, #tpu.memory_space<vmem>>, vector<128x256xbf16>
      %cst_80 = arith.constant dense<0.000000e+00> : vector<128x256xf32>
      %166 = tpu.matmul %164, %165, %cst_80 {dimension_numbers = #tpu.dot_dimension_numbers<[1], [0], [0], [1], [0, 0, 1, 1], [], []>} : vector<128x128xbf16>, vector<128x256xbf16>, vector<128x256xf32> -> vector<128x256xf32>
      %c0_81 = arith.constant 0 : index
      %c0_82 = arith.constant 0 : index
      %167 = vector.load %arg8[%c0_81, %c0_82] : memref<1x256xf32, #tpu.memory_space<vmem>>, vector<1x256xf32>
      %168 = vector.broadcast %167 : vector<1x256xf32> to vector<128x256xf32>
      %169 = arith.addf %166, %168 : vector<128x256xf32>
      %170 = vector.extract_strided_slice %169 {offsets = [0, 0], sizes = [128, 32], strides = [1, 1]} : vector<128x256xf32> to vector<128x32xf32>
      %171 = arith.truncf %170 : vector<128x32xf32> to vector<128x32xbf16>
      %c0_83 = arith.constant 0 : index
      %c0_84 = arith.constant 0 : index
      %c0_85 = arith.constant 0 : index
      %172 = vector.load %arg18[%c0_83, %c0_84, %c0_85] : memref<4x128x32xbf16, #tpu.memory_space<vmem>>, vector<1x128x32xbf16>
      %173 = vector.shape_cast %172 : vector<1x128x32xbf16> to vector<128x32xbf16>
      %174 = vector.shape_cast %171 : vector<128x32xbf16> to vector<1x128x32xbf16>
      tpu.vector_store %arg18[%c0_83, %c0_84, %c0_85], %174 {strides = array<i32>} : memref<4x128x32xbf16, #tpu.memory_space<vmem>>, vector<1x128x32xbf16>,
      %175 = vector.extract_strided_slice %169 {offsets = [0, 128], sizes = [128, 32], strides = [1, 1]} : vector<128x256xf32> to vector<128x32xf32>
      %176 = arith.truncf %175 : vector<128x32xf32> to vector<128x32xbf16>
      %c0_86 = arith.constant 0 : index
      %c0_87 = arith.constant 0 : index
      %c0_88 = arith.constant 0 : index
      %177 = vector.load %arg19[%c0_86, %c0_87, %c0_88] : memref<4x128x32xbf16, #tpu.memory_space<vmem>>, vector<1x128x32xbf16>
      %178 = vector.shape_cast %177 : vector<1x128x32xbf16> to vector<128x32xbf16>
      %179 = vector.shape_cast %176 : vector<128x32xbf16> to vector<1x128x32xbf16>
      tpu.vector_store %arg19[%c0_86, %c0_87, %c0_88], %179 {strides = array<i32>} : memref<4x128x32xbf16, #tpu.memory_space<vmem>>, vector<1x128x32xbf16>,
      %180 = vector.extract_strided_slice %169 {offsets = [0, 32], sizes = [128, 32], strides = [1, 1]} : vector<128x256xf32> to vector<128x32xf32>
      %181 = arith.truncf %180 : vector<128x32xf32> to vector<128x32xbf16>
      %c1_89 = arith.constant 1 : index
      %c0_90 = arith.constant 0 : index
      %c0_91 = arith.constant 0 : index
      %182 = vector.load %arg18[%c1_89, %c0_90, %c0_91] : memref<4x128x32xbf16, #tpu.memory_space<vmem>>, vector<1x128x32xbf16>
      %183 = vector.shape_cast %182 : vector<1x128x32xbf16> to vector<128x32xbf16>
      %184 = vector.shape_cast %181 : vector<128x32xbf16> to vector<1x128x32xbf16>
      tpu.vector_store %arg18[%c1_89, %c0_90, %c0_91], %184 {strides = array<i32>} : memref<4x128x32xbf16, #tpu.memory_space<vmem>>, vector<1x128x32xbf16>,
      %185 = vector.extract_strided_slice %169 {offsets = [0, 160], sizes = [128, 32], strides = [1, 1]} : vector<128x256xf32> to vector<128x32xf32>
      %186 = arith.truncf %185 : vector<128x32xf32> to vector<128x32xbf16>
      %c1_92 = arith.constant 1 : index
      %c0_93 = arith.constant 0 : index
      %c0_94 = arith.constant 0 : index
      %187 = vector.load %arg19[%c1_92, %c0_93, %c0_94] : memref<4x128x32xbf16, #tpu.memory_space<vmem>>, vector<1x128x32xbf16>
      %188 = vector.shape_cast %187 : vector<1x128x32xbf16> to vector<128x32xbf16>
      %189 = vector.shape_cast %186 : vector<128x32xbf16> to vector<1x128x32xbf16>
      tpu.vector_store %arg19[%c1_92, %c0_93, %c0_94], %189 {strides = array<i32>} : memref<4x128x32xbf16, #tpu.memory_space<vmem>>, vector<1x128x32xbf16>,
      %190 = vector.extract_strided_slice %169 {offsets = [0, 64], sizes = [128, 32], strides = [1, 1]} : vector<128x256xf32> to vector<128x32xf32>
      %191 = arith.truncf %190 : vector<128x32xf32> to vector<128x32xbf16>
      %c2_95 = arith.constant 2 : index
      %c0_96 = arith.constant 0 : index
      %c0_97 = arith.constant 0 : index
      %192 = vector.load %arg18[%c2_95, %c0_96, %c0_97] : memref<4x128x32xbf16, #tpu.memory_space<vmem>>, vector<1x128x32xbf16>
      %193 = vector.shape_cast %192 : vector<1x128x32xbf16> to vector<128x32xbf16>
      %194 = vector.shape_cast %191 : vector<128x32xbf16> to vector<1x128x32xbf16>
      tpu.vector_store %arg18[%c2_95, %c0_96, %c0_97], %194 {strides = array<i32>} : memref<4x128x32xbf16, #tpu.memory_space<vmem>>, vector<1x128x32xbf16>,
      %195 = vector.extract_strided_slice %169 {offsets = [0, 192], sizes = [128, 32], strides = [1, 1]} : vector<128x256xf32> to vector<128x32xf32>
      %196 = arith.truncf %195 : vector<128x32xf32> to vector<128x32xbf16>
      %c2_98 = arith.constant 2 : index
      %c0_99 = arith.constant 0 : index
      %c0_100 = arith.constant 0 : index
      %197 = vector.load %arg19[%c2_98, %c0_99, %c0_100] : memref<4x128x32xbf16, #tpu.memory_space<vmem>>, vector<1x128x32xbf16>
      %198 = vector.shape_cast %197 : vector<1x128x32xbf16> to vector<128x32xbf16>
      %199 = vector.shape_cast %196 : vector<128x32xbf16> to vector<1x128x32xbf16>
      tpu.vector_store %arg19[%c2_98, %c0_99, %c0_100], %199 {strides = array<i32>} : memref<4x128x32xbf16, #tpu.memory_space<vmem>>, vector<1x128x32xbf16>,
      %200 = vector.extract_strided_slice %169 {offsets = [0, 96], sizes = [128, 32], strides = [1, 1]} : vector<128x256xf32> to vector<128x32xf32>
      %201 = arith.truncf %200 : vector<128x32xf32> to vector<128x32xbf16>
      %c3_101 = arith.constant 3 : index
      %c0_102 = arith.constant 0 : index
      %c0_103 = arith.constant 0 : index
      %202 = vector.load %arg18[%c3_101, %c0_102, %c0_103] : memref<4x128x32xbf16, #tpu.memory_space<vmem>>, vector<1x128x32xbf16>
      %203 = vector.shape_cast %202 : vector<1x128x32xbf16> to vector<128x32xbf16>
      %204 = vector.shape_cast %201 : vector<128x32xbf16> to vector<1x128x32xbf16>
      tpu.vector_store %arg18[%c3_101, %c0_102, %c0_103], %204 {strides = array<i32>} : memref<4x128x32xbf16, #tpu.memory_space<vmem>>, vector<1x128x32xbf16>,
      %205 = vector.extract_strided_slice %169 {offsets = [0, 224], sizes = [128, 32], strides = [1, 1]} : vector<128x256xf32> to vector<128x32xf32>
      %206 = arith.truncf %205 : vector<128x32xf32> to vector<128x32xbf16>
      %c3_104 = arith.constant 3 : index
      %c0_105 = arith.constant 0 : index
      %c0_106 = arith.constant 0 : index
      %207 = vector.load %arg19[%c3_104, %c0_105, %c0_106] : memref<4x128x32xbf16, #tpu.memory_space<vmem>>, vector<1x128x32xbf16>
      %208 = vector.shape_cast %207 : vector<1x128x32xbf16> to vector<128x32xbf16>
      %209 = vector.shape_cast %206 : vector<128x32xbf16> to vector<1x128x32xbf16>
      tpu.vector_store %arg19[%c3_104, %c0_105, %c0_106], %209 {strides = array<i32>} : memref<4x128x32xbf16, #tpu.memory_space<vmem>>, vector<1x128x32xbf16>,
    } else {
    }
    %c64_i32 = arith.constant 64 : i32
    %3 = arith.muli %arg1, %c64_i32 : i32
    %4 = tpu.assume_multiple %3, 8 : i32
    %c0 = arith.constant 0 : index
    %5 = arith.index_cast %4 : i32 to index
    %c0_1 = arith.constant 0 : index
    %6 = vector.load %arg2[%c0, %5, %c0_1] : memref<1x128x128xf32, #tpu.memory_space<vmem>>, vector<1x64x128xf32>
    %7 = vector.shape_cast %6 : vector<1x64x128xf32> to vector<64x128xf32>
    %c0_2 = arith.constant 0 : index
    %c0_3 = arith.constant 0 : index
    %8 = vector.load %arg3[%c0_2, %c0_3] : memref<1x128xf32, #tpu.memory_space<vmem>>, vector<1x128xf32>
    %c0_4 = arith.constant 0 : index
    %c0_5 = arith.constant 0 : index
    %9 = vector.load %arg4[%c0_4, %c0_5] : memref<1x128xf32, #tpu.memory_space<vmem>>, vector<1x128xf32>
    %cst = arith.constant dense<0.000000e+00> : vector<64xf32>
    %10 = vector.multi_reduction <add>, %7, %cst [1] : vector<64x128xf32> to vector<64xf32>
    %11 = vector.shape_cast %10 : vector<64xf32> to vector<64x1xf32>
    %cst_6 = arith.constant 1.280000e+02 : f32
    %12 = vector.broadcast %cst_6 : f32 to vector<64x1xf32>
    %13 = arith.divf %11, %12 : vector<64x1xf32>
    %14 = vector.broadcast %13 : vector<64x1xf32> to vector<64x128xf32>
    %15 = arith.subf %7, %14 : vector<64x128xf32>
    %16 = arith.mulf %15, %15 : vector<64x128xf32>
    %cst_7 = arith.constant dense<0.000000e+00> : vector<64xf32>
    %17 = vector.multi_reduction <add>, %16, %cst_7 [1] : vector<64x128xf32> to vector<64xf32>
    %18 = vector.shape_cast %17 : vector<64xf32> to vector<64x1xf32>
    %cst_8 = arith.constant 1.280000e+02 : f32
    %19 = vector.broadcast %cst_8 : f32 to vector<64x1xf32>
    %20 = arith.divf %18, %19 : vector<64x1xf32>
    %21 = vector.broadcast %13 : vector<64x1xf32> to vector<64x128xf32>
    %22 = arith.subf %7, %21 : vector<64x128xf32>
    %cst_9 = arith.constant 9.99999974E-6 : f32
    %23 = vector.broadcast %cst_9 : f32 to vector<64x1xf32>
    %24 = arith.addf %20, %23 : vector<64x1xf32>
    %25 = math.rsqrt %24 : vector<64x1xf32>
    %26 = vector.broadcast %25 : vector<64x1xf32> to vector<64x128xf32>
    %27 = arith.mulf %22, %26 : vector<64x128xf32>
    %28 = vector.broadcast %8 : vector<1x128xf32> to vector<64x128xf32>
    %29 = arith.mulf %27, %28 : vector<64x128xf32>
    %30 = vector.broadcast %9 : vector<1x128xf32> to vector<64x128xf32>
    %31 = arith.addf %29, %30 : vector<64x128xf32>
    %32 = arith.truncf %31 : vector<64x128xf32> to vector<64x128xbf16>
    %c0_10 = arith.constant 0 : index
    %c0_11 = arith.constant 0 : index
    %33 = vector.load %arg5[%c0_10, %c0_11] : memref<128x128xbf16, #tpu.memory_space<vmem>>, vector<128x128xbf16>
    %cst_12 = arith.constant dense<0.000000e+00> : vector<64x128xf32>
    %34 = tpu.matmul %32, %33, %cst_12 {dimension_numbers = #tpu.dot_dimension_numbers<[1], [0], [0], [1], [0, 0, 1, 1], [], []>} : vector<64x128xbf16>, vector<128x128xbf16>, vector<64x128xf32> -> vector<64x128xf32>
    %c0_13 = arith.constant 0 : index
    %c0_14 = arith.constant 0 : index
    %35 = vector.load %arg6[%c0_13, %c0_14] : memref<1x128xf32, #tpu.memory_space<vmem>>, vector<1x128xf32>
    %36 = vector.broadcast %35 : vector<1x128xf32> to vector<64x128xf32>
    %37 = arith.addf %34, %36 : vector<64x128xf32>
    %38 = vector.extract_strided_slice %37 {offsets = [0, 0], sizes = [64, 32], strides = [1, 1]} : vector<64x128xf32> to vector<64x32xf32>
    %39 = arith.truncf %38 : vector<64x32xf32> to vector<64x32xbf16>
    %c0_15 = arith.constant 0 : index
    %c0_16 = arith.constant 0 : index
    %c0_17 = arith.constant 0 : index
    %40 = vector.load %arg20[%c0_15, %c0_16, %c0_17] : memref<4x64x32xbf16, #tpu.memory_space<vmem>>, vector<1x64x32xbf16>
    %41 = vector.shape_cast %40 : vector<1x64x32xbf16> to vector<64x32xbf16>
    %42 = vector.shape_cast %39 : vector<64x32xbf16> to vector<1x64x32xbf16>
    tpu.vector_store %arg20[%c0_15, %c0_16, %c0_17], %42 {strides = array<i32>} : memref<4x64x32xbf16, #tpu.memory_space<vmem>>, vector<1x64x32xbf16>,
    %43 = vector.extract_strided_slice %37 {offsets = [0, 32], sizes = [64, 32], strides = [1, 1]} : vector<64x128xf32> to vector<64x32xf32>
    %44 = arith.truncf %43 : vector<64x32xf32> to vector<64x32xbf16>
    %c1 = arith.constant 1 : index
    %c0_18 = arith.constant 0 : index
    %c0_19 = arith.constant 0 : index
    %45 = vector.load %arg20[%c1, %c0_18, %c0_19] : memref<4x64x32xbf16, #tpu.memory_space<vmem>>, vector<1x64x32xbf16>
    %46 = vector.shape_cast %45 : vector<1x64x32xbf16> to vector<64x32xbf16>
    %47 = vector.shape_cast %44 : vector<64x32xbf16> to vector<1x64x32xbf16>
    tpu.vector_store %arg20[%c1, %c0_18, %c0_19], %47 {strides = array<i32>} : memref<4x64x32xbf16, #tpu.memory_space<vmem>>, vector<1x64x32xbf16>,
    %48 = vector.extract_strided_slice %37 {offsets = [0, 64], sizes = [64, 32], strides = [1, 1]} : vector<64x128xf32> to vector<64x32xf32>
    %49 = arith.truncf %48 : vector<64x32xf32> to vector<64x32xbf16>
    %c2 = arith.constant 2 : index
    %c0_20 = arith.constant 0 : index
    %c0_21 = arith.constant 0 : index
    %50 = vector.load %arg20[%c2, %c0_20, %c0_21] : memref<4x64x32xbf16, #tpu.memory_space<vmem>>, vector<1x64x32xbf16>
    %51 = vector.shape_cast %50 : vector<1x64x32xbf16> to vector<64x32xbf16>
    %52 = vector.shape_cast %49 : vector<64x32xbf16> to vector<1x64x32xbf16>
    tpu.vector_store %arg20[%c2, %c0_20, %c0_21], %52 {strides = array<i32>} : memref<4x64x32xbf16, #tpu.memory_space<vmem>>, vector<1x64x32xbf16>,
    %53 = vector.extract_strided_slice %37 {offsets = [0, 96], sizes = [64, 32], strides = [1, 1]} : vector<64x128xf32> to vector<64x32xf32>
    %54 = arith.truncf %53 : vector<64x32xf32> to vector<64x32xbf16>
    %c3 = arith.constant 3 : index
    %c0_22 = arith.constant 0 : index
    %c0_23 = arith.constant 0 : index
    %55 = vector.load %arg20[%c3, %c0_22, %c0_23] : memref<4x64x32xbf16, #tpu.memory_space<vmem>>, vector<1x64x32xbf16>
    %56 = vector.shape_cast %55 : vector<1x64x32xbf16> to vector<64x32xbf16>
    %57 = vector.shape_cast %54 : vector<64x32xbf16> to vector<1x64x32xbf16>
    tpu.vector_store %arg20[%c3, %c0_22, %c0_23], %57 {strides = array<i32>} : memref<4x64x32xbf16, #tpu.memory_space<vmem>>, vector<1x64x32xbf16>,
    %c0_24 = arith.constant 0 : index
    %c0_25 = arith.constant 0 : index
    %c0_26 = arith.constant 0 : index
    %58 = vector.load %arg20[%c0_24, %c0_25, %c0_26] : memref<4x64x32xbf16, #tpu.memory_space<vmem>>, vector<4x64x32xbf16>
    %c0_27 = arith.constant 0 : index
    %c0_28 = arith.constant 0 : index
    %c0_29 = arith.constant 0 : index
    %59 = vector.load %arg18[%c0_27, %c0_28, %c0_29] : memref<4x128x32xbf16, #tpu.memory_space<vmem>>, vector<4x128x32xbf16>
    %c0_30 = arith.constant 0 : index
    %c0_31 = arith.constant 0 : index
    %c0_32 = arith.constant 0 : index
    %60 = vector.load %arg19[%c0_30, %c0_31, %c0_32] : memref<4x128x32xbf16, #tpu.memory_space<vmem>>, vector<4x128x32xbf16>
    "tpu.trace_start"() <{level = 10 : i32, message = "hqd,hkd->hqk"}> : () -> ()
    %cst_33 = arith.constant dense<0.000000e+00> : vector<4x64x128xf32>
    %61 = tpu.matmul %58, %59, %cst_33 {dimension_numbers = #tpu.dot_dimension_numbers<[2], [2], [1], [1], [0, 0, 0, 1, 1, 1], [0], [0]>} : vector<4x64x32xbf16>, vector<4x128x32xbf16>, vector<4x64x128xf32> -> vector<4x64x128xf32>
    "tpu.trace_stop"() : () -> ()
    %cst_34 = arith.constant dense<0xFF800000> : vector<4x64xf32>
    %62 = vector.multi_reduction <maximumf>, %61, %cst_34 [2] : vector<4x64x128xf32> to vector<4x64xf32>
    %63 = vector.shape_cast %62 : vector<4x64xf32> to vector<4x64x1xf32>
    %64 = vector.broadcast %63 : vector<4x64x1xf32> to vector<4x64x128xf32>
    %65 = arith.subf %61, %64 : vector<4x64x128xf32>
    %66 = math.exp %65 : vector<4x64x128xf32>
    %cst_35 = arith.constant dense<0.000000e+00> : vector<4x64xf32>
    %67 = vector.multi_reduction <add>, %66, %cst_35 [2] : vector<4x64x128xf32> to vector<4x64xf32>
    %68 = vector.shape_cast %67 : vector<4x64xf32> to vector<4x64x1xf32>
    %69 = tpu.reciprocal %68 {approx = true} : vector<4x64x1xf32> -> vector<4x64x1xf32>
    %70 = vector.broadcast %69 : vector<4x64x1xf32> to vector<4x64x128xf32>
    %71 = arith.mulf %66, %70 : vector<4x64x128xf32>
    %72 = arith.truncf %71 : vector<4x64x128xf32> to vector<4x64x128xbf16>
    "tpu.trace_start"() <{level = 10 : i32, message = "hqk,hkd->hqd"}> : () -> ()
    %cst_36 = arith.constant dense<0.000000e+00> : vector<4x64x32xf32>
    %73 = tpu.matmul %72, %60, %cst_36 {dimension_numbers = #tpu.dot_dimension_numbers<[2], [1], [1], [2], [0, 0, 0, 1, 1, 2], [0], [0]>} : vector<4x64x128xbf16>, vector<4x128x32xbf16>, vector<4x64x32xf32> -> vector<4x64x32xf32>
    "tpu.trace_stop"() : () -> ()
    %74 = vector.extract_strided_slice %73 {offsets = [0, 0, 0], sizes = [1, 64, 32], strides = [1, 1, 1]} : vector<4x64x32xf32> to vector<1x64x32xf32>
    %75 = vector.shape_cast %74 : vector<1x64x32xf32> to vector<64x32xf32>
    %76 = vector.extract_strided_slice %73 {offsets = [1, 0, 0], sizes = [1, 64, 32], strides = [1, 1, 1]} : vector<4x64x32xf32> to vector<1x64x32xf32>
    %77 = vector.shape_cast %76 : vector<1x64x32xf32> to vector<64x32xf32>
    %78 = vector.extract_strided_slice %73 {offsets = [2, 0, 0], sizes = [1, 64, 32], strides = [1, 1, 1]} : vector<4x64x32xf32> to vector<1x64x32xf32>
    %79 = vector.shape_cast %78 : vector<1x64x32xf32> to vector<64x32xf32>
    %80 = vector.extract_strided_slice %73 {offsets = [3, 0, 0], sizes = [1, 64, 32], strides = [1, 1, 1]} : vector<4x64x32xf32> to vector<1x64x32xf32>
    %81 = vector.shape_cast %80 : vector<1x64x32xf32> to vector<64x32xf32>
    %82 = tpu.concatenate %75, %77, %79, %81 in 1 : vector<64x32xf32>, vector<64x32xf32>, vector<64x32xf32>, vector<64x32xf32> -> vector<64x128xf32>
    %83 = arith.truncf %82 : vector<64x128xf32> to vector<64x128xbf16>
    %c0_37 = arith.constant 0 : index
    %c0_38 = arith.constant 0 : index
    %84 = vector.load %arg9[%c0_37, %c0_38] : memref<128x128xbf16, #tpu.memory_space<vmem>>, vector<128x128xbf16>
    %cst_39 = arith.constant dense<0.000000e+00> : vector<64x128xf32>
    %85 = tpu.matmul %83, %84, %cst_39 {dimension_numbers = #tpu.dot_dimension_numbers<[1], [0], [0], [1], [0, 0, 1, 1], [], []>} : vector<64x128xbf16>, vector<128x128xbf16>, vector<64x128xf32> -> vector<64x128xf32>
    %c0_40 = arith.constant 0 : index
    %c0_41 = arith.constant 0 : index
    %86 = vector.load %arg10[%c0_40, %c0_41] : memref<1x128xf32, #tpu.memory_space<vmem>>, vector<1x128xf32>
    %87 = vector.broadcast %86 : vector<1x128xf32> to vector<64x128xf32>
    %88 = arith.addf %85, %87 : vector<64x128xf32>
    %89 = arith.addf %7, %88 : vector<64x128xf32>
    %c0_42 = arith.constant 0 : index
    %c0_43 = arith.constant 0 : index
    %90 = vector.load %arg11[%c0_42, %c0_43] : memref<1x128xf32, #tpu.memory_space<vmem>>, vector<1x128xf32>
    %c0_44 = arith.constant 0 : index
    %c0_45 = arith.constant 0 : index
    %91 = vector.load %arg12[%c0_44, %c0_45] : memref<1x128xf32, #tpu.memory_space<vmem>>, vector<1x128xf32>
    %cst_46 = arith.constant dense<0.000000e+00> : vector<64xf32>
    %92 = vector.multi_reduction <add>, %89, %cst_46 [1] : vector<64x128xf32> to vector<64xf32>
    %93 = vector.shape_cast %92 : vector<64xf32> to vector<64x1xf32>
    %cst_47 = arith.constant 1.280000e+02 : f32
    %94 = vector.broadcast %cst_47 : f32 to vector<64x1xf32>
    %95 = arith.divf %93, %94 : vector<64x1xf32>
    %96 = vector.broadcast %95 : vector<64x1xf32> to vector<64x128xf32>
    %97 = arith.subf %89, %96 : vector<64x128xf32>
    %98 = arith.mulf %97, %97 : vector<64x128xf32>
    %cst_48 = arith.constant dense<0.000000e+00> : vector<64xf32>
    %99 = vector.multi_reduction <add>, %98, %cst_48 [1] : vector<64x128xf32> to vector<64xf32>
    %100 = vector.shape_cast %99 : vector<64xf32> to vector<64x1xf32>
    %cst_49 = arith.constant 1.280000e+02 : f32
    %101 = vector.broadcast %cst_49 : f32 to vector<64x1xf32>
    %102 = arith.divf %100, %101 : vector<64x1xf32>
    %103 = vector.broadcast %95 : vector<64x1xf32> to vector<64x128xf32>
    %104 = arith.subf %89, %103 : vector<64x128xf32>
    %cst_50 = arith.constant 9.99999974E-6 : f32
    %105 = vector.broadcast %cst_50 : f32 to vector<64x1xf32>
    %106 = arith.addf %102, %105 : vector<64x1xf32>
    %107 = math.rsqrt %106 : vector<64x1xf32>
    %108 = vector.broadcast %107 : vector<64x1xf32> to vector<64x128xf32>
    %109 = arith.mulf %104, %108 : vector<64x128xf32>
    %110 = vector.broadcast %90 : vector<1x128xf32> to vector<64x128xf32>
    %111 = arith.mulf %109, %110 : vector<64x128xf32>
    %112 = vector.broadcast %91 : vector<1x128xf32> to vector<64x128xf32>
    %113 = arith.addf %111, %112 : vector<64x128xf32>
    %114 = arith.truncf %113 : vector<64x128xf32> to vector<64x128xbf16>
    %c0_51 = arith.constant 0 : index
    %c0_52 = arith.constant 0 : index
    %115 = vector.load %arg13[%c0_51, %c0_52] : memref<128x512xbf16, #tpu.memory_space<vmem>>, vector<128x512xbf16>
    %cst_53 = arith.constant dense<0.000000e+00> : vector<64x512xf32>
    %116 = tpu.matmul %114, %115, %cst_53 {dimension_numbers = #tpu.dot_dimension_numbers<[1], [0], [0], [1], [0, 0, 1, 1], [], []>} : vector<64x128xbf16>, vector<128x512xbf16>, vector<64x512xf32> -> vector<64x512xf32>
    %c0_54 = arith.constant 0 : index
    %c0_55 = arith.constant 0 : index
    %117 = vector.load %arg14[%c0_54, %c0_55] : memref<1x512xf32, #tpu.memory_space<vmem>>, vector<1x512xf32>
    %118 = vector.broadcast %117 : vector<1x512xf32> to vector<64x512xf32>
    %119 = arith.addf %116, %118 : vector<64x512xf32>
    %cst_56 = arith.constant 1.702000e+00 : f32
    %120 = vector.broadcast %cst_56 : f32 to vector<64x512xf32>
    %121 = arith.mulf %120, %119 : vector<64x512xf32>
    %122 = arith.negf %121 : vector<64x512xf32>
    %123 = math.exp %122 : vector<64x512xf32>
    %cst_57 = arith.constant 1.000000e+00 : f32
    %124 = vector.broadcast %cst_57 : f32 to vector<64x512xf32>
    %125 = arith.addf %124, %123 : vector<64x512xf32>
    %126 = arith.divf %124, %125 : vector<64x512xf32>
    %127 = arith.mulf %119, %126 : vector<64x512xf32>
    %128 = arith.truncf %127 : vector<64x512xf32> to vector<64x512xbf16>
    %c0_58 = arith.constant 0 : index
    %c0_59 = arith.constant 0 : index
    %129 = vector.load %arg15[%c0_58, %c0_59] : memref<512x128xbf16, #tpu.memory_space<vmem>>, vector<512x128xbf16>
    %cst_60 = arith.constant dense<0.000000e+00> : vector<64x128xf32>
    %130 = tpu.matmul %128, %129, %cst_60 {dimension_numbers = #tpu.dot_dimension_numbers<[1], [0], [0], [1], [0, 0, 1, 1], [], []>} : vector<64x512xbf16>, vector<512x128xbf16>, vector<64x128xf32> -> vector<64x128xf32>
    %c0_61 = arith.constant 0 : index
    %c0_62 = arith.constant 0 : index
    %131 = vector.load %arg16[%c0_61, %c0_62] : memref<1x128xf32, #tpu.memory_space<vmem>>, vector<1x128xf32>
    %132 = vector.broadcast %131 : vector<1x128xf32> to vector<64x128xf32>
    %133 = arith.addf %130, %132 : vector<64x128xf32>
    %134 = arith.addf %89, %133 : vector<64x128xf32>
    %c0_63 = arith.constant 0 : index
    %c0_64 = arith.constant 0 : index
    %c0_65 = arith.constant 0 : index
    %135 = vector.load %arg17[%c0_63, %c0_64, %c0_65] : memref<1x64x128xf32, #tpu.memory_space<vmem>>, vector<1x64x128xf32>
    %136 = vector.shape_cast %135 : vector<1x64x128xf32> to vector<64x128xf32>
    %137 = vector.shape_cast %134 : vector<64x128xf32> to vector<1x64x128xf32>
    tpu.vector_store %arg17[%c0_63, %c0_64, %c0_65], %137 {strides = array<i32>} : memref<1x64x128xf32, #tpu.memory_space<vmem>>, vector<1x64x128xf32>,
    return
  }
  func.func @transform_0(%arg0: i32, %arg1: i32) -> (i32, i32, i32) {
    %c0_i32 = arith.constant 0 : i32
    %c0_i32_0 = arith.constant 0 : i32
    %c0_i32_1 = arith.constant 0 : i32
    return %arg0, %c0_i32, %c0_i32_0 : i32, i32, i32
  }
  func.func @transform_1(%arg0: i32, %arg1: i32) -> (i32, i32) {
    %c0_i32 = arith.constant 0 : i32
    %c0_i32_0 = arith.constant 0 : i32
    %c0_i32_1 = arith.constant 0 : i32
    return %c0_i32, %c0_i32_0 : i32, i32
  }
  func.func @transform_2(%arg0: i32, %arg1: i32) -> (i32, i32) {
    %c0_i32 = arith.constant 0 : i32
    %c0_i32_0 = arith.constant 0 : i32
    %c0_i32_1 = arith.constant 0 : i32
    return %c0_i32, %c0_i32_0 : i32, i32
  }
  func.func @transform_3(%arg0: i32, %arg1: i32) -> (i32, i32) {
    %c0_i32 = arith.constant 0 : i32
    %c0_i32_0 = arith.constant 0 : i32
    %c0_i32_1 = arith.constant 0 : i32
    return %c0_i32, %c0_i32_0 : i32, i32
  }
  func.func @transform_4(%arg0: i32, %arg1: i32) -> (i32, i32) {
    %c0_i32 = arith.constant 0 : i32
    %c0_i32_0 = arith.constant 0 : i32
    %c0_i32_1 = arith.constant 0 : i32
    return %c0_i32, %c0_i32_0 : i32, i32
  }
  func.func @transform_5(%arg0: i32, %arg1: i32) -> (i32, i32) {
    %c0_i32 = arith.constant 0 : i32
    %c0_i32_0 = arith.constant 0 : i32
    %c0_i32_1 = arith.constant 0 : i32
    return %c0_i32, %c0_i32_0 : i32, i32
  }
  func.func @transform_6(%arg0: i32, %arg1: i32) -> (i32, i32) {
    %c0_i32 = arith.constant 0 : i32
    %c0_i32_0 = arith.constant 0 : i32
    %c0_i32_1 = arith.constant 0 : i32
    return %c0_i32, %c0_i32_0 : i32, i32
  }
  func.func @transform_7(%arg0: i32, %arg1: i32) -> (i32, i32) {
    %c0_i32 = arith.constant 0 : i32
    %c0_i32_0 = arith.constant 0 : i32
    %c0_i32_1 = arith.constant 0 : i32
    return %c0_i32, %c0_i32_0 : i32, i32
  }
  func.func @transform_8(%arg0: i32, %arg1: i32) -> (i32, i32) {
    %c0_i32 = arith.constant 0 : i32
    %c0_i32_0 = arith.constant 0 : i32
    %c0_i32_1 = arith.constant 0 : i32
    return %c0_i32, %c0_i32_0 : i32, i32
  }
  func.func @transform_9(%arg0: i32, %arg1: i32) -> (i32, i32) {
    %c0_i32 = arith.constant 0 : i32
    %c0_i32_0 = arith.constant 0 : i32
    %c0_i32_1 = arith.constant 0 : i32
    return %c0_i32, %c0_i32_0 : i32, i32
  }
  func.func @transform_10(%arg0: i32, %arg1: i32) -> (i32, i32) {
    %c0_i32 = arith.constant 0 : i32
    %c0_i32_0 = arith.constant 0 : i32
    %c0_i32_1 = arith.constant 0 : i32
    return %c0_i32, %c0_i32_0 : i32, i32
  }
  func.func @transform_11(%arg0: i32, %arg1: i32) -> (i32, i32) {
    %c0_i32 = arith.constant 0 : i32
    %c0_i32_0 = arith.constant 0 : i32
    %c0_i32_1 = arith.constant 0 : i32
    return %c0_i32, %c0_i32_0 : i32, i32
  }
  func.func @transform_12(%arg0: i32, %arg1: i32) -> (i32, i32) {
    %c0_i32 = arith.constant 0 : i32
    %c0_i32_0 = arith.constant 0 : i32
    %c0_i32_1 = arith.constant 0 : i32
    return %c0_i32, %c0_i32_0 : i32, i32
  }
  func.func @transform_13(%arg0: i32, %arg1: i32) -> (i32, i32) {
    %c0_i32 = arith.constant 0 : i32
    %c0_i32_0 = arith.constant 0 : i32
    %c0_i32_1 = arith.constant 0 : i32
    return %c0_i32, %c0_i32_0 : i32, i32
  }
  func.func @transform_14(%arg0: i32, %arg1: i32) -> (i32, i32) {
    %c0_i32 = arith.constant 0 : i32
    %c0_i32_0 = arith.constant 0 : i32
    %c0_i32_1 = arith.constant 0 : i32
    return %c0_i32, %c0_i32_0 : i32, i32
  }
  func.func @transform_15(%arg0: i32, %arg1: i32) -> (i32, i32, i32) {
    %c0_i32 = arith.constant 0 : i32
    %c0_i32_0 = arith.constant 0 : i32
    return %arg0, %arg1, %c0_i32 : i32, i32, i32
  }
}

</mosaic_0001>

<llo_original>
// kernel: tpu_custom_call.1
$region0: #{tpu_custom_call.1}
  #allocation0 [shape = 'u32[]', space=smem, size = 0x4, offset = 0x4, fixed_abs, tag = 'smem constant byte address 0x4 - core index']
  #allocation1 [shape = 'u32[144,128]{1,0:T(1,128)}', space=vmem, size = 0x12000, scoped, tag = 'internal scratch']
  #allocation2 [shape = 'bf16[4,128,32]{2,1,0:T(16,128)(2,1)}', space=vmem, size = 0x20000, scoped, tag = 'scratch operand']
  #allocation3 [shape = 'bf16[4,128,32]{2,1,0:T(16,128)(2,1)}', space=vmem, size = 0x20000, scoped, tag = 'scratch operand']
  #allocation4 [shape = 'bf16[4,64,32]{2,1,0:T(16,128)(2,1)}', space=vmem, size = 0x10000, scoped, tag = 'scratch operand']
  %s0 = inlined_call_operand.hbm [shape: f32[2,128,128], index: 0, kind: input, shape index: {}]
  %s1 = inlined_call_operand.vmem [shape: f32[1,128], index: 1, kind: input, shape index: {}]
  %s2 = inlined_call_operand.hbm [shape: f32[1,128], index: 2, kind: input, shape index: {}]
  %s3 = inlined_call_operand.hbm [shape: bf16[128,128], index: 3, kind: input, shape index: {}]
  %s4 = inlined_call_operand.vmem [shape: f32[1,128], index: 4, kind: input, shape index: {}]
  %s5 = inlined_call_operand.hbm [shape: bf16[128,256], index: 5, kind: input, shape index: {}]
  %s6 = inlined_call_operand.vmem [shape: f32[1,256], index: 6, kind: input, shape index: {}]
  %s7 = inlined_call_operand.hbm [shape: bf16[128,128], index: 7, kind: input, shape index: {}]
  %s8 = inlined_call_operand.vmem [shape: f32[1,128], index: 8, kind: input, shape index: {}]
  %s9 = inlined_call_operand.vmem [shape: f32[1,128], index: 9, kind: input, shape index: {}]
  %s10 = inlined_call_operand.vmem [shape: f32[1,128], index: 10, kind: input, shape index: {}]
  %s11 = inlined_call_operand.hbm [shape: bf16[128,512], index: 11, kind: input, shape index: {}]
  %s12 = inlined_call_operand.vmem [shape: f32[1,512], index: 12, kind: input, shape index: {}]
  %s13 = inlined_call_operand.hbm [shape: bf16[512,128], index: 13, kind: input, shape index: {}]
  %s14 = inlined_call_operand.vmem [shape: f32[1,128], index: 14, kind: input, shape index: {}]
  %s15 = inlined_call_operand.hbm [shape: f32[2,128,128], index: 15, kind: output, shape index: {}]
  %s16 = sld [smem:[#allocation0]]
  $region125: #{tpu_custom_call.1} parent=0
    _
  %s18 = ssub.s32 1, %s16
  %s19 = scalar_select 0, %s18, %s16
  $region1: #{tpu_custom_call.1} parent=0
    #allocation5 [shape = 'u8[131072]{0}', space=vmem, size = 0x20000, scoped, tag = 'input window, operand 0']
    #allocation6 [shape = 's32[2]{0}', space=sflag, size = 0x8, scoped, tag = 'scoped memory for tpu_custom_call.1']
    #allocation7 [shape = 's32[2]{0}', space=sflag, size = 0x8, scoped, tag = 'scoped memory for tpu_custom_call.1']
    #allocation8 [shape = 'u8[512]{0}', space=vmem, size = 0x400, scoped, tag = 'input window, operand 2, single buffered']
    #allocation9 [shape = 's32[1]{0}', space=sflag, size = 0x4, scoped, tag = 'scoped memory for tpu_custom_call.1']
    #allocation10 [shape = 'u8[32768]{0}', space=vmem, size = 0x8000, scoped, tag = 'input window, operand 3, single buffered']
    #allocation11 [shape = 'u8[65536]{0}', space=vmem, size = 0x10000, scoped, tag = 'input window, operand 5, single buffered']
    #allocation12 [shape = 's32[1]{0}', space=sflag, size = 0x4, scoped, tag = 'scoped memory for tpu_custom_call.1']
    #allocation13 [shape = 'u8[32768]{0}', space=vmem, size = 0x8000, scoped, tag = 'input window, operand 7, single buffered']
    #allocation14 [shape = 'u8[131072]{0}', space=vmem, size = 0x20000, scoped, tag = 'input window, operand 11, single buffered']
    #allocation15 [shape = 's32[1]{0}', space=sflag, size = 0x4, scoped, tag = 'scoped memory for tpu_custom_call.1']
    #allocation16 [shape = 'u8[131072]{0}', space=vmem, size = 0x20000, scoped, tag = 'input window, operand 13, single buffered']
    #allocation17 [shape = 'u8[65536]{0}', space=vmem, size = 0x10000, scoped, tag = 'output window, operand 0']
    %20 = vsyncpa [#allocation6], 0
    %s21 = scalar_lea.sflag [#allocation6], 1
    %22 = vsyncpa %s21, 0
    %23 = vsyncpa [#allocation9], 0
    %24 = vsyncpa [#allocation12], 0
    %25 = vsyncpa [#allocation15], 0
    %26 = vsyncpa [#allocation7], 0
    %s27 = scalar_lea.sflag [#allocation7], 1
    %28 = vsyncpa %s27, 0
    loop: start=0, step=1, limit=6
    $region2: #{tpu_custom_call.1} parent=1 // loop_pre_header
      _
    $region3: #{tpu_custom_call.1} parent=1 // loop_header
      %s30 = sphi 0, %s34
      %p31 = scmp.ge.s32.totalorder %s30, 6
      %s37 = sphi 0, %s49
      %s38 = sphi 0, %s45
      %s39 = sphi 0, %s37
      %s40 = sphi 0, %s38
      %s41 = sphi 0, %s39
      %s42 = sphi 0, %s40
      %s52 = sphi 0, %s54
      %s55 = sphi 0, %s52
      %s56 = sphi 0, %s55
      %s72 = sphi 0, %s56
      %s76 = sphi 0, %s76
      %s78 = sphi 0, %s76
      %s79 = sphi 0, %s78
      %s93 = sphi 0, %s79
      %s97 = sphi 0, %s97
      %s99 = sphi 0, %s97
      %s100 = sphi 0, %s99
      %s114 = sphi 0, %s100
      %s118 = sphi 0, %s118
      %s120 = sphi 0, %s118
      %s121 = sphi 0, %s120
      %s135 = sphi 0, %s121
      %s139 = sphi 0, %s139
      %s141 = sphi 0, %s139
      %s142 = sphi 0, %s141
      %s156 = sphi 0, %s142
      %s160 = sphi 0, %s160
      %s162 = sphi 0, %s160
      %s163 = sphi 0, %s162
      %s177 = sphi 0, %s163
      %s181 = sphi 0, %s181
      %s183 = sphi 0, %s181
      %s184 = sphi 0, %s183
      %s198 = sphi 0, %s184
      %s202 = sphi 0, %s202
      %s204 = sphi 0, %s202
      %s205 = sphi 0, %s204
      %s219 = sphi 0, %s205
      %s223 = sphi 0, %s223
      %s225 = sphi 0, %s223
      %s226 = sphi 0, %s225
      %s240 = sphi 0, %s226
      %s244 = sphi 0, %s244
      %s246 = sphi 0, %s244
      %s247 = sphi 0, %s246
      %s261 = sphi 0, %s247
      %s265 = sphi 0, %s265
      %s267 = sphi 0, %s265
      %s268 = sphi 0, %s267
      %s282 = sphi 0, %s268
      %s286 = sphi 0, %s286
      %s288 = sphi 0, %s286
      %s289 = sphi 0, %s288
      %s303 = sphi 0, %s289
      %s307 = sphi 0, %s307
      %s309 = sphi 0, %s307
      %s310 = sphi 0, %s309
      %s324 = sphi 0, %s310
      %s328 = sphi 0, %s328
      %s330 = sphi 0, %s328
      %s331 = sphi 0, %s330
      %s345 = sphi 0, %s331
      %s349 = sphi 0, %s349
      %s351 = sphi 0, %s349
      %s352 = sphi 0, %s351
      %s366 = sphi 0, %s352
      %s374 = sphi 0, %s376
      %s377 = sphi 0, %s374
      %s378 = sphi 0, %s377
      %s394 = sphi 0, %s378
    $region4: #{tpu_custom_call.1} parent=1 // loop_header_branch
      %33 = sbr.rel (%p31) target = $region8
    $region5: #{tpu_custom_call.1} parent=1 // loop_body
      %s35 = ssub.s32 %s30, 1
      %s36 = ssub.s32 %s30, 2
      %s43 = sadd.s32 1, %s38
      %p44 = scmp.ge.s32.totalorder %s43, 2
      %s45 = scalar_select %p44, 0, %s43
      %s46 = sadd.s32 1, %s37
      %s47 = scalar_select %p44, %s46, %s37
      %p48 = scmp.ge.s32.totalorder %s47, 2
      %s49 = scalar_select %p48, 0, %s47
      %s50 = ssub.s32 %s37, %s49
      %p51 = scmp.eq.s32.totalorder %s50, 0
      %s53 = sadd.s32 %s52, 1
      %s54 = scalar_select %p51, %s52, %s53
      %p57 = pneg %p51
      %p58 = scmp.eq.s32.totalorder %s30, 3
      %p59 = por %p57, %p58
      %p60 = scmp.ne.s32.totalorder %s52, %s55
      %p61 = scmp.eq.s32.totalorder %s30, 0
      %p62 = por %p60, %p61
      %p63 = scmp.ne.s32.totalorder %s52, %s55
      %p64 = scmp.eq.s32.totalorder %s35, 3
      %p65 = por %p63, %p64
      %p66 = scmp.ne.s32.totalorder %s55, %s56
      %p67 = scmp.eq.s32.totalorder %s35, 0
      %p68 = por %p66, %p67
      %p69 = scmp.ne.s32.totalorder %s55, %s56
      %p70 = scmp.eq.s32.totalorder %s36, 3
      %p71 = por %p69, %p70
      %p73 = scmp.ne.s32.totalorder %s56, %s72
      %p74 = scmp.eq.s32.totalorder %s36, 0
      %p75 = por %p73, %p74
      %s77 = sadd.s32 %s76, 1
      %p80 = scmp.eq.s32.totalorder %s30, 3
      %p81 = scmp.ne.s32.totalorder %s76, %s78
      %p82 = scmp.eq.s32.totalorder %s30, 0
      %p83 = por %p81, %p82
      %p84 = scmp.ne.s32.totalorder %s76, %s78
      %p85 = scmp.eq.s32.totalorder %s35, 3
      %p86 = por %p84, %p85
      %p87 = scmp.ne.s32.totalorder %s78, %s79
      %p88 = scmp.eq.s32.totalorder %s35, 0
      %p89 = por %p87, %p88
      %p90 = scmp.ne.s32.totalorder %s78, %s79
      %p91 = scmp.eq.s32.totalorder %s36, 3
      %p92 = por %p90, %p91
      %p94 = scmp.ne.s32.totalorder %s79, %s93
      %p95 = scmp.eq.s32.totalorder %s36, 0
      %p96 = por %p94, %p95
      %s98 = sadd.s32 %s97, 1
      %p101 = scmp.eq.s32.totalorder %s30, 3
      %p102 = scmp.ne.s32.totalorder %s97, %s99
      %p103 = scmp.eq.s32.totalorder %s30, 0
      %p104 = por %p102, %p103
      %p105 = scmp.ne.s32.totalorder %s97, %s99
      %p106 = scmp.eq.s32.totalorder %s35, 3
      %p107 = por %p105, %p106
      %p108 = scmp.ne.s32.totalorder %s99, %s100
      %p109 = scmp.eq.s32.totalorder %s35, 0
      %p110 = por %p108, %p109
      %p111 = scmp.ne.s32.totalorder %s99, %s100
      %p112 = scmp.eq.s32.totalorder %s36, 3
      %p113 = por %p111, %p112
      %p115 = scmp.ne.s32.totalorder %s100, %s114
      %p116 = scmp.eq.s32.totalorder %s36, 0
      %p117 = por %p115, %p116
      %s119 = sadd.s32 %s118, 1
      %p122 = scmp.eq.s32.totalorder %s30, 3
      %p123 = scmp.ne.s32.totalorder %s118, %s120
      %p124 = scmp.eq.s32.totalorder %s30, 0
      %p125 = por %p123, %p124
      %p126 = scmp.ne.s32.totalorder %s118, %s120
      %p127 = scmp.eq.s32.totalorder %s35, 3
      %p128 = por %p126, %p127
      %p129 = scmp.ne.s32.totalorder %s120, %s121
      %p130 = scmp.eq.s32.totalorder %s35, 0
      %p131 = por %p129, %p130
      %p132 = scmp.ne.s32.totalorder %s120, %s121
      %p133 = scmp.eq.s32.totalorder %s36, 3
      %p134 = por %p132, %p133
      %p136 = scmp.ne.s32.totalorder %s121, %s135
      %p137 = scmp.eq.s32.totalorder %s36, 0
      %p138 = por %p136, %p137
      %s140 = sadd.s32 %s139, 1
      %p143 = scmp.eq.s32.totalorder %s30, 3
      %p144 = scmp.ne.s32.totalorder %s139, %s141
      %p145 = scmp.eq.s32.totalorder %s30, 0
      %p146 = por %p144, %p145
      %p147 = scmp.ne.s32.totalorder %s139, %s141
      %p148 = scmp.eq.s32.totalorder %s35, 3
      %p149 = por %p147, %p148
      %p150 = scmp.ne.s32.totalorder %s141, %s142
      %p151 = scmp.eq.s32.totalorder %s35, 0
      %p152 = por %p150, %p151
      %p153 = scmp.ne.s32.totalorder %s141, %s142
      %p154 = scmp.eq.s32.totalorder %s36, 3
      %p155 = por %p153, %p154
      %p157 = scmp.ne.s32.totalorder %s142, %s156
      %p158 = scmp.eq.s32.totalorder %s36, 0
      %p159 = por %p157, %p158
      %s161 = sadd.s32 %s160, 1
      %p164 = scmp.eq.s32.totalorder %s30, 3
      %p165 = scmp.ne.s32.totalorder %s160, %s162
      %p166 = scmp.eq.s32.totalorder %s30, 0
      %p167 = por %p165, %p166
      %p168 = scmp.ne.s32.totalorder %s160, %s162
      %p169 = scmp.eq.s32.totalorder %s35, 3
      %p170 = por %p168, %p169
      %p171 = scmp.ne.s32.totalorder %s162, %s163
      %p172 = scmp.eq.s32.totalorder %s35, 0
      %p173 = por %p171, %p172
      %p174 = scmp.ne.s32.totalorder %s162, %s163
      %p175 = scmp.eq.s32.totalorder %s36, 3
      %p176 = por %p174, %p175
      %p178 = scmp.ne.s32.totalorder %s163, %s177
      %p179 = scmp.eq.s32.totalorder %s36, 0
      %p180 = por %p178, %p179
      %s182 = sadd.s32 %s181, 1
      %p185 = scmp.eq.s32.totalorder %s30, 3
      %p186 = scmp.ne.s32.totalorder %s181, %s183
      %p187 = scmp.eq.s32.totalorder %s30, 0
      %p188 = por %p186, %p187
      %p189 = scmp.ne.s32.totalorder %s181, %s183
      %p190 = scmp.eq.s32.totalorder %s35, 3
      %p191 = por %p189, %p190
      %p192 = scmp.ne.s32.totalorder %s183, %s184
      %p193 = scmp.eq.s32.totalorder %s35, 0
      %p194 = por %p192, %p193
      %p195 = scmp.ne.s32.totalorder %s183, %s184
      %p196 = scmp.eq.s32.totalorder %s36, 3
      %p197 = por %p195, %p196
      %p199 = scmp.ne.s32.totalorder %s184, %s198
      %p200 = scmp.eq.s32.totalorder %s36, 0
      %p201 = por %p199, %p200
      %s203 = sadd.s32 %s202, 1
      %p206 = scmp.eq.s32.totalorder %s30, 3
      %p207 = scmp.ne.s32.totalorder %s202, %s204
      %p208 = scmp.eq.s32.totalorder %s30, 0
      %p209 = por %p207, %p208
      %p210 = scmp.ne.s32.totalorder %s202, %s204
      %p211 = scmp.eq.s32.totalorder %s35, 3
      %p212 = por %p210, %p211
      %p213 = scmp.ne.s32.totalorder %s204, %s205
      %p214 = scmp.eq.s32.totalorder %s35, 0
      %p215 = por %p213, %p214
      %p216 = scmp.ne.s32.totalorder %s204, %s205
      %p217 = scmp.eq.s32.totalorder %s36, 3
      %p218 = por %p216, %p217
      %p220 = scmp.ne.s32.totalorder %s205, %s219
      %p221 = scmp.eq.s32.totalorder %s36, 0
      %p222 = por %p220, %p221
      %s224 = sadd.s32 %s223, 1
      %p227 = scmp.eq.s32.totalorder %s30, 3
      %p228 = scmp.ne.s32.totalorder %s223, %s225
      %p229 = scmp.eq.s32.totalorder %s30, 0
      %p230 = por %p228, %p229
      %p231 = scmp.ne.s32.totalorder %s223, %s225
      %p232 = scmp.eq.s32.totalorder %s35, 3
      %p233 = por %p231, %p232
      %p234 = scmp.ne.s32.totalorder %s225, %s226
      %p235 = scmp.eq.s32.totalorder %s35, 0
      %p236 = por %p234, %p235
      %p237 = scmp.ne.s32.totalorder %s225, %s226
      %p238 = scmp.eq.s32.totalorder %s36, 3
      %p239 = por %p237, %p238
      %p241 = scmp.ne.s32.totalorder %s226, %s240
      %p242 = scmp.eq.s32.totalorder %s36, 0
      %p243 = por %p241, %p242
      %s245 = sadd.s32 %s244, 1
      %p248 = scmp.eq.s32.totalorder %s30, 3
      %p249 = scmp.ne.s32.totalorder %s244, %s246
      %p250 = scmp.eq.s32.totalorder %s30, 0
      %p251 = por %p249, %p250
      %p252 = scmp.ne.s32.totalorder %s244, %s246
      %p253 = scmp.eq.s32.totalorder %s35, 3
      %p254 = por %p252, %p253
      %p255 = scmp.ne.s32.totalorder %s246, %s247
      %p256 = scmp.eq.s32.totalorder %s35, 0
      %p257 = por %p255, %p256
      %p258 = scmp.ne.s32.totalorder %s246, %s247
      %p259 = scmp.eq.s32.totalorder %s36, 3
      %p260 = por %p258, %p259
      %p262 = scmp.ne.s32.totalorder %s247, %s261
      %p263 = scmp.eq.s32.totalorder %s36, 0
      %p264 = por %p262, %p263
      %s266 = sadd.s32 %s265, 1
      %p269 = scmp.eq.s32.totalorder %s30, 3
      %p270 = scmp.ne.s32.totalorder %s265, %s267
      %p271 = scmp.eq.s32.totalorder %s30, 0
      %p272 = por %p270, %p271
      %p273 = scmp.ne.s32.totalorder %s265, %s267
      %p274 = scmp.eq.s32.totalorder %s35, 3
      %p275 = por %p273, %p274
      %p276 = scmp.ne.s32.totalorder %s267, %s268
      %p277 = scmp.eq.s32.totalorder %s35, 0
      %p278 = por %p276, %p277
      %p279 = scmp.ne.s32.totalorder %s267, %s268
      %p280 = scmp.eq.s32.totalorder %s36, 3
      %p281 = por %p279, %p280
      %p283 = scmp.ne.s32.totalorder %s268, %s282
      %p284 = scmp.eq.s32.totalorder %s36, 0
      %p285 = por %p283, %p284
      %s287 = sadd.s32 %s286, 1
      %p290 = scmp.eq.s32.totalorder %s30, 3
      %p291 = scmp.ne.s32.totalorder %s286, %s288
      %p292 = scmp.eq.s32.totalorder %s30, 0
      %p293 = por %p291, %p292
      %p294 = scmp.ne.s32.totalorder %s286, %s288
      %p295 = scmp.eq.s32.totalorder %s35, 3
      %p296 = por %p294, %p295
      %p297 = scmp.ne.s32.totalorder %s288, %s289
      %p298 = scmp.eq.s32.totalorder %s35, 0
      %p299 = por %p297, %p298
      %p300 = scmp.ne.s32.totalorder %s288, %s289
      %p301 = scmp.eq.s32.totalorder %s36, 3
      %p302 = por %p300, %p301
      %p304 = scmp.ne.s32.totalorder %s289, %s303
      %p305 = scmp.eq.s32.totalorder %s36, 0
      %p306 = por %p304, %p305
      %s308 = sadd.s32 %s307, 1
      %p311 = scmp.eq.s32.totalorder %s30, 3
      %p312 = scmp.ne.s32.totalorder %s307, %s309
      %p313 = scmp.eq.s32.totalorder %s30, 0
      %p314 = por %p312, %p313
      %p315 = scmp.ne.s32.totalorder %s307, %s309
      %p316 = scmp.eq.s32.totalorder %s35, 3
      %p317 = por %p315, %p316
      %p318 = scmp.ne.s32.totalorder %s309, %s310
      %p319 = scmp.eq.s32.totalorder %s35, 0
      %p320 = por %p318, %p319
      %p321 = scmp.ne.s32.totalorder %s309, %s310
      %p322 = scmp.eq.s32.totalorder %s36, 3
      %p323 = por %p321, %p322
      %p325 = scmp.ne.s32.totalorder %s310, %s324
      %p326 = scmp.eq.s32.totalorder %s36, 0
      %p327 = por %p325, %p326
      %s329 = sadd.s32 %s328, 1
      %p332 = scmp.eq.s32.totalorder %s30, 3
      %p333 = scmp.ne.s32.totalorder %s328, %s330
      %p334 = scmp.eq.s32.totalorder %s30, 0
      %p335 = por %p333, %p334
      %p336 = scmp.ne.s32.totalorder %s328, %s330
      %p337 = scmp.eq.s32.totalorder %s35, 3
      %p338 = por %p336, %p337
      %p339 = scmp.ne.s32.totalorder %s330, %s331
      %p340 = scmp.eq.s32.totalorder %s35, 0
      %p341 = por %p339, %p340
      %p342 = scmp.ne.s32.totalorder %s330, %s331
      %p343 = scmp.eq.s32.totalorder %s36, 3
      %p344 = por %p342, %p343
      %p346 = scmp.ne.s32.totalorder %s331, %s345
      %p347 = scmp.eq.s32.totalorder %s36, 0
      %p348 = por %p346, %p347
      %s350 = sadd.s32 %s349, 1
      %p353 = scmp.eq.s32.totalorder %s30, 3
      %p354 = scmp.ne.s32.totalorder %s349, %s351
      %p355 = scmp.eq.s32.totalorder %s30, 0
      %p356 = por %p354, %p355
      %p357 = scmp.ne.s32.totalorder %s349, %s351
      %p358 = scmp.eq.s32.totalorder %s35, 3
      %p359 = por %p357, %p358
      %p360 = scmp.ne.s32.totalorder %s351, %s352
      %p361 = scmp.eq.s32.totalorder %s35, 0
      %p362 = por %p360, %p361
      %p363 = scmp.ne.s32.totalorder %s351, %s352
      %p364 = scmp.eq.s32.totalorder %s36, 3
      %p365 = por %p363, %p364
      %p367 = scmp.ne.s32.totalorder %s352, %s366
      %p368 = scmp.eq.s32.totalorder %s36, 0
      %p369 = por %p367, %p368
      %s370 = ssub.s32 %s37, %s49
      %s371 = ssub.s32 %s38, %s45
      %s372 = sor.u32 %s370, %s371
      %p373 = scmp.eq.s32.totalorder %s372, 0
      %s375 = sadd.s32 %s374, 1
      %s376 = scalar_select %p373, %s374, %s375
      %p379 = pneg %p373
      %p380 = scmp.eq.s32.totalorder %s30, 3
      %p381 = por %p379, %p380
      %p382 = scmp.ne.s32.totalorder %s374, %s377
      %p383 = scmp.eq.s32.totalorder %s30, 0
      %p384 = por %p382, %p383
      %p385 = scmp.ne.s32.totalorder %s374, %s377
      %p386 = scmp.eq.s32.totalorder %s35, 3
      %p387 = por %p385, %p386
      %p388 = scmp.ne.s32.totalorder %s377, %s378
      %p389 = scmp.eq.s32.totalorder %s35, 0
      %p390 = por %p388, %p389
      %p391 = scmp.ne.s32.totalorder %s377, %s378
      %p392 = scmp.eq.s32.totalorder %s36, 3
      %p393 = por %p391, %p392
      %p395 = scmp.ne.s32.totalorder %s378, %s394
      %p396 = scmp.eq.s32.totalorder %s36, 0
      %p397 = por %p395, %p396
      %p398 = scmp.le.s32.totalorder 1, %s30
      %p399 = scmp.lt.s32.totalorder %s30, 5
      %p400 = pnand %p398, %p399
      %p401 = pneg %p400
      // Predicated region
      $region9: #{tpu_custom_call.1} parent=5 // pred_check
        _
      $region10: #{tpu_custom_call.1} parent=5 // pred_check_branch
        %403 = sbr.rel (%p400) target = $region12
      $region11: #{tpu_custom_call.1} parent=5 // pred_region
        %s404 = ssub.s32 %s30, 1
        // Predicated region
        $region13: #{tpu_custom_call.1} parent=11 // pred_check
          %p405 = pneg %p89
        $region14: #{tpu_custom_call.1} parent=11 // pred_check_branch
          %407 = sbr.rel (%p405) target = $region16
        $region15: #{tpu_custom_call.1} parent=11 // pred_region
          _
        $region16: #{tpu_custom_call.1} parent=11 // pred_fallthru
          _
        // Predicated region
        $region17: #{tpu_custom_call.1} parent=11 // pred_check
          %p408 = pneg %p110
        $region18: #{tpu_custom_call.1} parent=11 // pred_check_branch
          %410 = sbr.rel (%p408) target = $region20
        $region19: #{tpu_custom_call.1} parent=11 // pred_region
          %s412 = ssub.s32 16, 16
          %413 = vsyncadd [#allocation9], %s412
          %s415 = sshll.u32 [#allocation8], 4
          %s416 = int_to_ptr.vmem [resolvable:$true] %s415
          %418 = dma.hbm_to_vmem [thread:$0]  %s2, 16, %s416, [#allocation9]
        $region20: #{tpu_custom_call.1} parent=11 // pred_fallthru
          _
        // Predicated region
        $region21: #{tpu_custom_call.1} parent=11 // pred_check
          %p419 = pneg %p131
        $region22: #{tpu_custom_call.1} parent=11 // pred_check_branch
          %421 = sbr.rel (%p419) target = $region24
        $region23: #{tpu_custom_call.1} parent=11 // pred_region
          %s423 = ssub.s32 1024, 1024
          %424 = vsyncadd [#allocation9], %s423
          %s425 = sshll.u32 [#allocation10], 4
          %s426 = int_to_ptr.vmem [resolvable:$true] %s425
          %431 = dma.hbm_to_vmem [thread:$0]  %s3, 1024, %s426, [#allocation9], 64, 64, 4
        $region24: #{tpu_custom_call.1} parent=11 // pred_fallthru
          _
        // Predicated region
        $region25: #{tpu_custom_call.1} parent=11 // pred_check
          %p432 = pneg %p152
        $region26: #{tpu_custom_call.1} parent=11 // pred_check_branch
          %434 = sbr.rel (%p432) target = $region28
        $region27: #{tpu_custom_call.1} parent=11 // pred_region
          _
        $region28: #{tpu_custom_call.1} parent=11 // pred_fallthru
          _
        // Predicated region
        $region29: #{tpu_custom_call.1} parent=11 // pred_check
          %p435 = pneg %p173
        $region30: #{tpu_custom_call.1} parent=11 // pred_check_branch
          %437 = sbr.rel (%p435) target = $region32
        $region31: #{tpu_custom_call.1} parent=11 // pred_region
          %s439 = ssub.s32 2048, 2048
          %440 = vsyncadd [#allocation12], %s439
          %s441 = sshll.u32 [#allocation11], 4
          %s442 = int_to_ptr.vmem [resolvable:$true] %s441
          %447 = dma.hbm_to_vmem [thread:$0]  %s5, 2048, %s442, [#allocation12], 128, 128, 8
        $region32: #{tpu_custom_call.1} parent=11 // pred_fallthru
          _
        // Predicated region
        $region33: #{tpu_custom_call.1} parent=11 // pred_check
          %p448 = pneg %p194
        $region34: #{tpu_custom_call.1} parent=11 // pred_check_branch
          %450 = sbr.rel (%p448) target = $region36
        $region35: #{tpu_custom_call.1} parent=11 // pred_region
          _
        $region36: #{tpu_custom_call.1} parent=11 // pred_fallthru
          _
        // Predicated region
        $region37: #{tpu_custom_call.1} parent=11 // pred_check
          %p451 = pneg %p215
        $region38: #{tpu_custom_call.1} parent=11 // pred_check_branch
          %453 = sbr.rel (%p451) target = $region40
        $region39: #{tpu_custom_call.1} parent=11 // pred_region
          %s455 = ssub.s32 1024, 1024
          %456 = vsyncadd [#allocation12], %s455
          %s457 = sshll.u32 [#allocation13], 4
          %s458 = int_to_ptr.vmem [resolvable:$true] %s457
          %463 = dma.hbm_to_vmem [thread:$0]  %s7, 1024, %s458, [#allocation12], 64, 64, 4
        $region40: #{tpu_custom_call.1} parent=11 // pred_fallthru
          _
        // Predicated region
        $region41: #{tpu_custom_call.1} parent=11 // pred_check
          %p464 = pneg %p236
        $region42: #{tpu_custom_call.1} parent=11 // pred_check_branch
          %466 = sbr.rel (%p464) target = $region44
        $region43: #{tpu_custom_call.1} parent=11 // pred_region
          _
        $region44: #{tpu_custom_call.1} parent=11 // pred_fallthru
          _
        // Predicated region
        $region45: #{tpu_custom_call.1} parent=11 // pred_check
          %p467 = pneg %p257
        $region46: #{tpu_custom_call.1} parent=11 // pred_check_branch
          %469 = sbr.rel (%p467) target = $region48
        $region47: #{tpu_custom_call.1} parent=11 // pred_region
          _
        $region48: #{tpu_custom_call.1} parent=11 // pred_fallthru
          _
        // Predicated region
        $region49: #{tpu_custom_call.1} parent=11 // pred_check
          %p470 = pneg %p278
        $region50: #{tpu_custom_call.1} parent=11 // pred_check_branch
          %472 = sbr.rel (%p470) target = $region52
        $region51: #{tpu_custom_call.1} parent=11 // pred_region
          _
        $region52: #{tpu_custom_call.1} parent=11 // pred_fallthru
          _
        // Predicated region
        $region53: #{tpu_custom_call.1} parent=11 // pred_check
          %p473 = pneg %p299
        $region54: #{tpu_custom_call.1} parent=11 // pred_check_branch
          %475 = sbr.rel (%p473) target = $region56
        $region55: #{tpu_custom_call.1} parent=11 // pred_region
          %s477 = ssub.s32 4096, 4096
          %478 = vsyncadd [#allocation15], %s477
          %s479 = sshll.u32 [#allocation14], 4
          %s480 = int_to_ptr.vmem [resolvable:$true] %s479
          %485 = dma.hbm_to_vmem [thread:$0]  %s11, 4096, %s480, [#allocation15], 256, 256, 16
        $region56: #{tpu_custom_call.1} parent=11 // pred_fallthru
          _
        // Predicated region
        $region57: #{tpu_custom_call.1} parent=11 // pred_check
          %p486 = pneg %p320
        $region58: #{tpu_custom_call.1} parent=11 // pred_check_branch
          %488 = sbr.rel (%p486) target = $region60
        $region59: #{tpu_custom_call.1} parent=11 // pred_region
          _
        $region60: #{tpu_custom_call.1} parent=11 // pred_fallthru
          _
        // Predicated region
        $region61: #{tpu_custom_call.1} parent=11 // pred_check
          %p489 = pneg %p341
        $region62: #{tpu_custom_call.1} parent=11 // pred_check_branch
          %491 = sbr.rel (%p489) target = $region64
        $region63: #{tpu_custom_call.1} parent=11 // pred_region
          %s493 = ssub.s32 4096, 4096
          %494 = vsyncadd [#allocation15], %s493
          %s495 = sshll.u32 [#allocation16], 4
          %s496 = int_to_ptr.vmem [resolvable:$true] %s495
          %501 = dma.hbm_to_vmem [thread:$0]  %s13, 4096, %s496, [#allocation15], 64, 64, 4
        $region64: #{tpu_custom_call.1} parent=11 // pred_fallthru
          _
        // Predicated region
        $region65: #{tpu_custom_call.1} parent=11 // pred_check
          %p502 = pneg %p362
        $region66: #{tpu_custom_call.1} parent=11 // pred_check_branch
          %504 = sbr.rel (%p502) target = $region68
        $region67: #{tpu_custom_call.1} parent=11 // pred_region
          _
        $region68: #{tpu_custom_call.1} parent=11 // pred_fallthru
          _
      $region12: #{tpu_custom_call.1} parent=5 // pred_fallthru
        _
      %p505 = scmp.lt.s32.totalorder %s30, 4
      // Predicated region
      $region69: #{tpu_custom_call.1} parent=5 // pred_check
        %p506 = pneg %p505
      $region70: #{tpu_custom_call.1} parent=5 // pred_check_branch
        %508 = sbr.rel (%p506) target = $region72
      $region71: #{tpu_custom_call.1} parent=5 // pred_region
        // Predicated region
        $region73: #{tpu_custom_call.1} parent=71 // pred_check
          %p509 = pneg %p62
        $region74: #{tpu_custom_call.1} parent=71 // pred_check_branch
          %511 = sbr.rel (%p509) target = $region76
        $region75: #{tpu_custom_call.1} parent=71 // pred_region
          %s512 = sand.u32 %s52, 1
          %s513 = scalar_lea.sflag [#allocation6], %s512
          %s514 = sand.u32 %s52, 1
          %s515 = smul.addr %s514, 128
          %s516 = scalar_lea.vmem [#allocation5], %s515
          %s518 = ssub.s32 2048, 2048
          %519 = vsyncadd %s513, %s518
          %s520 = smul.addr %s37, 16
          %s521 = smul.addr %s520, 128
          %s522 = scalar_lea.hbm %s0, %s521
          %s523 = sshll.u32 %s516, 4
          %s524 = int_to_ptr.vmem [resolvable:$true] %s523
          %529 = dma.hbm_to_vmem [thread:$0]  %s522, 2048, %s524, %s513, 128, 128, 8
        $region76: #{tpu_custom_call.1} parent=71 // pred_fallthru
          _
      $region72: #{tpu_custom_call.1} parent=5 // pred_fallthru
        _
      %p530 = scmp.le.s32.totalorder 1, %s30
      %p531 = scmp.lt.s32.totalorder %s30, 5
      %p532 = pnand %p530, %p531
      %p533 = pneg %p532
      // Predicated region
      $region77: #{tpu_custom_call.1} parent=5 // pred_check
        _
      $region78: #{tpu_custom_call.1} parent=5 // pred_check_branch
        %535 = sbr.rel (%p532) target = $region80
      $region79: #{tpu_custom_call.1} parent=5 // pred_region
        %s536 = ssub.s32 %s30, 1
        %s537 = sand.u32 %s55, 1
        %s538 = scalar_lea.sflag [#allocation6], %s537
        %s539 = sand.u32 %s55, 1
        %s540 = smul.addr %s539, 128
        %s541 = scalar_lea.vmem [#allocation5], %s540
        // Predicated region
        $region81: #{tpu_custom_call.1} parent=79 // pred_check
          %p542 = pneg %p68
        $region82: #{tpu_custom_call.1} parent=79 // pred_check_branch
          %544 = sbr.rel (%p542) target = $region84
        $region83: #{tpu_custom_call.1} parent=79 // pred_region
          %545 = dma.done %s538, 2048
        $region84: #{tpu_custom_call.1} parent=79 // pred_fallthru
          _
        // Predicated region
        $region85: #{tpu_custom_call.1} parent=79 // pred_check
          %p546 = pneg %p110
        $region86: #{tpu_custom_call.1} parent=79 // pred_check_branch
          %548 = sbr.rel (%p546) target = $region88
        $region87: #{tpu_custom_call.1} parent=79 // pred_region
          %549 = dma.done [#allocation9], 16
        $region88: #{tpu_custom_call.1} parent=79 // pred_fallthru
          _
        // Predicated region
        $region89: #{tpu_custom_call.1} parent=79 // pred_check
          %p550 = pneg %p131
        $region90: #{tpu_custom_call.1} parent=79 // pred_check_branch
          %552 = sbr.rel (%p550) target = $region92
        $region91: #{tpu_custom_call.1} parent=79 // pred_region
          %553 = dma.done [#allocation9], 1024
        $region92: #{tpu_custom_call.1} parent=79 // pred_fallthru
          _
        // Predicated region
        $region93: #{tpu_custom_call.1} parent=79 // pred_check
          %p554 = pneg %p173
        $region94: #{tpu_custom_call.1} parent=79 // pred_check_branch
          %556 = sbr.rel (%p554) target = $region96
        $region95: #{tpu_custom_call.1} parent=79 // pred_region
          %557 = dma.done [#allocation12], 2048
        $region96: #{tpu_custom_call.1} parent=79 // pred_fallthru
          _
        // Predicated region
        $region97: #{tpu_custom_call.1} parent=79 // pred_check
          %p558 = pneg %p215
        $region98: #{tpu_custom_call.1} parent=79 // pred_check_branch
          %560 = sbr.rel (%p558) target = $region100
        $region99: #{tpu_custom_call.1} parent=79 // pred_region
          %561 = dma.done [#allocation12], 1024
        $region100: #{tpu_custom_call.1} parent=79 // pred_fallthru
          _
        // Predicated region
        $region101: #{tpu_custom_call.1} parent=79 // pred_check
          %p562 = pneg %p299
        $region102: #{tpu_custom_call.1} parent=79 // pred_check_branch
          %564 = sbr.rel (%p562) target = $region104
        $region103: #{tpu_custom_call.1} parent=79 // pred_region
          %565 = dma.done [#allocation15], 4096
        $region104: #{tpu_custom_call.1} parent=79 // pred_fallthru
          _
        // Predicated region
        $region105: #{tpu_custom_call.1} parent=79 // pred_check
          %p566 = pneg %p341
        $region106: #{tpu_custom_call.1} parent=79 // pred_check_branch
          %568 = sbr.rel (%p566) target = $region108
        $region107: #{tpu_custom_call.1} parent=79 // pred_region
          %569 = dma.done [#allocation15], 4096
        $region108: #{tpu_custom_call.1} parent=79 // pred_fallthru
          _
        %s570 = sand.u32 %s55, 1
        %s571 = scalar_lea.sflag [#allocation6], %s570
        %s572 = sand.u32 %s55, 1
        %s573 = smul.addr %s572, 128
        %s574 = scalar_lea.vmem [#allocation5], %s573
        %p575 = pneg %p68
        %p576 = pneg %p65
        %p577 = pneg %p89
        %p578 = pneg %p86
        %p579 = pneg %p110
        %p580 = pneg %p107
        %p581 = pneg %p131
        %p582 = pneg %p128
        %p583 = pneg %p152
        %p584 = pneg %p149
        %p585 = pneg %p173
        %p586 = pneg %p170
        %p587 = pneg %p194
        %p588 = pneg %p191
        %p589 = pneg %p215
        %p590 = pneg %p212
        %p591 = pneg %p236
        %p592 = pneg %p233
        %p593 = pneg %p257
        %p594 = pneg %p254
        %p595 = pneg %p278
        %p596 = pneg %p275
        %p597 = pneg %p299
        %p598 = pneg %p296
        %p599 = pneg %p320
        %p600 = pneg %p317
        %p601 = pneg %p341
        %p602 = pneg %p338
        %p603 = pneg %p362
        %p604 = pneg %p359
        %p605 = pneg %p390
        %p606 = pneg %p387
        %s607 = sand.u32 %s377, 1
        %s608 = scalar_lea.sflag [#allocation7], %s607
        %s609 = sand.u32 %s377, 1
        %s610 = smul.addr %s609, 64
        %s611 = scalar_lea.vmem [#allocation17], %s610
        %s612 = smul.u32 8, %s40
        %p614 = scmp.eq.s32.totalorder %s40, 0
        // Predicated region
        $region109: #{tpu_custom_call.1} parent=79 // pred_check
          %p615 = pneg %p614
        $region110: #{tpu_custom_call.1} parent=79 // pred_check_branch
          %617 = sbr.rel (%p615) target = $region112
        $region111: #{tpu_custom_call.1} parent=79 // pred_region
          %v618 = vld [vmem:[%s541] sm:$0xff]
          %v619 = vld [vmem:[%s541 + $0x8] sm:$0xff]
          %v620 = vld [vmem:[%s541 + $0x10] sm:$0xff]
          %v621 = vld [vmem:[%s541 + $0x18] sm:$0xff]
          %v622 = vld [vmem:[%s541 + $0x20] sm:$0xff]
          %v623 = vld [vmem:[%s541 + $0x28] sm:$0xff]
          %v624 = vld [vmem:[%s541 + $0x30] sm:$0xff]
          %v625 = vld [vmem:[%s541 + $0x38] sm:$0xff]
          %v626 = vld [vmem:[%s541 + $0x40] sm:$0xff]
          %v627 = vld [vmem:[%s541 + $0x48] sm:$0xff]
          %v628 = vld [vmem:[%s541 + $0x50] sm:$0xff]
          %v629 = vld [vmem:[%s541 + $0x58] sm:$0xff]
          %v630 = vld [vmem:[%s541 + $0x60] sm:$0xff]
          %v631 = vld [vmem:[%s541 + $0x68] sm:$0xff]
          %v632 = vld [vmem:[%s541 + $0x70] sm:$0xff]
          %v633 = vld [vmem:[%s541 + $0x78] sm:$0xff]
          %v634 = vld [vmem:[%s1] sm:$0x1]
          %v635 = vld [vmem:[#allocation8] sm:$0x1]
          %636 = vadd.xlane.f32.xlu0 %v618
          %v637 = vpop.xlane.xlu0 %636
          %638 = vadd.xlane.f32.xlu0 %v619
          %v639 = vpop.xlane.xlu0 %638
          %640 = vadd.xlane.f32.xlu0 %v620
          %v641 = vpop.xlane.xlu0 %640
          %642 = vadd.xlane.f32.xlu0 %v621
          %v643 = vpop.xlane.xlu0 %642
          %644 = vadd.xlane.f32.xlu0 %v622
          %v645 = vpop.xlane.xlu0 %644
          %646 = vadd.xlane.f32.xlu0 %v623
          %v647 = vpop.xlane.xlu0 %646
          %648 = vadd.xlane.f32.xlu0 %v624
          %v649 = vpop.xlane.xlu0 %648
          %650 = vadd.xlane.f32.xlu0 %v625
          %v651 = vpop.xlane.xlu0 %650
          %652 = vadd.xlane.f32.xlu0 %v626
          %v653 = vpop.xlane.xlu0 %652
          %654 = vadd.xlane.f32.xlu0 %v627
          %v655 = vpop.xlane.xlu0 %654
          %656 = vadd.xlane.f32.xlu0 %v628
          %v657 = vpop.xlane.xlu0 %656
          %658 = vadd.xlane.f32.xlu0 %v629
          %v659 = vpop.xlane.xlu0 %658
          %660 = vadd.xlane.f32.xlu0 %v630
          %v661 = vpop.xlane.xlu0 %660
          %662 = vadd.xlane.f32.xlu0 %v631
          %v663 = vpop.xlane.xlu0 %662
          %664 = vadd.xlane.f32.xlu0 %v632
          %v665 = vpop.xlane.xlu0 %664
          %666 = vadd.xlane.f32.xlu0 %v633
          %v667 = vpop.xlane.xlu0 %666
          %v668 = vrcp.pop 128.0
          %v669 = vmul.f32 %v637, %v668
          %v670 = vmul.f32 %v639, %v668
          %v671 = vmul.f32 %v641, %v668
          %v672 = vmul.f32 %v643, %v668
          %v673 = vmul.f32 %v645, %v668
          %v674 = vmul.f32 %v647, %v668
          %v675 = vmul.f32 %v649, %v668
          %v676 = vmul.f32 %v651, %v668
          %v677 = vmul.f32 %v653, %v668
          %v678 = vmul.f32 %v655, %v668
          %v679 = vmul.f32 %v657, %v668
          %v680 = vmul.f32 %v659, %v668
          %v681 = vmul.f32 %v661, %v668
          %v682 = vmul.f32 %v663, %v668
          %v683 = vmul.f32 %v665, %v668
          %v684 = vmul.f32 %v667, %v668
          %v685 = vsub.f32 %v618, %v669
          %v686 = vsub.f32 %v619, %v670
          %v687 = vsub.f32 %v620, %v671
          %v688 = vsub.f32 %v621, %v672
          %v689 = vsub.f32 %v622, %v673
          %v690 = vsub.f32 %v623, %v674
          %v691 = vsub.f32 %v624, %v675
          %v692 = vsub.f32 %v625, %v676
          %v693 = vsub.f32 %v626, %v677
          %v694 = vsub.f32 %v627, %v678
          %v695 = vsub.f32 %v628, %v679
          %v696 = vsub.f32 %v629, %v680
          %v697 = vsub.f32 %v630, %v681
          %v698 = vsub.f32 %v631, %v682
          %v699 = vsub.f32 %v632, %v683
          %v700 = vsub.f32 %v633, %v684
          %v701 = vmul.f32 %v685, %v685
          %v702 = vmul.f32 %v686, %v686
          %v703 = vmul.f32 %v687, %v687
          %v704 = vmul.f32 %v688, %v688
          %v705 = vmul.f32 %v689, %v689
          %v706 = vmul.f32 %v690, %v690
          %v707 = vmul.f32 %v691, %v691
          %v708 = vmul.f32 %v692, %v692
          %v709 = vmul.f32 %v693, %v693
          %v710 = vmul.f32 %v694, %v694
          %v711 = vmul.f32 %v695, %v695
          %v712 = vmul.f32 %v696, %v696
          %v713 = vmul.f32 %v697, %v697
          %v714 = vmul.f32 %v698, %v698
          %v715 = vmul.f32 %v699, %v699
          %v716 = vmul.f32 %v700, %v700
          %717 = vadd.xlane.f32.xlu0 %v701
          %v718 = vpop.xlane.xlu0 %717
          %719 = vadd.xlane.f32.xlu0 %v702
          %v720 = vpop.xlane.xlu0 %719
          %721 = vadd.xlane.f32.xlu0 %v703
          %v722 = vpop.xlane.xlu0 %721
          %723 = vadd.xlane.f32.xlu0 %v704
          %v724 = vpop.xlane.xlu0 %723
          %725 = vadd.xlane.f32.xlu0 %v705
          %v726 = vpop.xlane.xlu0 %725
          %727 = vadd.xlane.f32.xlu0 %v706
          %v728 = vpop.xlane.xlu0 %727
          %729 = vadd.xlane.f32.xlu0 %v707
          %v730 = vpop.xlane.xlu0 %729
          %731 = vadd.xlane.f32.xlu0 %v708
          %v732 = vpop.xlane.xlu0 %731
          %733 = vadd.xlane.f32.xlu0 %v709
          %v734 = vpop.xlane.xlu0 %733
          %735 = vadd.xlane.f32.xlu0 %v710
          %v736 = vpop.xlane.xlu0 %735
          %737 = vadd.xlane.f32.xlu0 %v711
          %v738 = vpop.xlane.xlu0 %737
          %739 = vadd.xlane.f32.xlu0 %v712
          %v740 = vpop.xlane.xlu0 %739
          %741 = vadd.xlane.f32.xlu0 %v713
          %v742 = vpop.xlane.xlu0 %741
          %743 = vadd.xlane.f32.xlu0 %v714
          %v744 = vpop.xlane.xlu0 %743
          %745 = vadd.xlane.f32.xlu0 %v715
          %v746 = vpop.xlane.xlu0 %745
          %747 = vadd.xlane.f32.xlu0 %v716
          %v748 = vpop.xlane.xlu0 %747
          %v749 = vmul.f32 %v718, %v668
          %v750 = vmul.f32 %v720, %v668
          %v751 = vmul.f32 %v722, %v668
          %v752 = vmul.f32 %v724, %v668
          %v753 = vmul.f32 %v726, %v668
          %v754 = vmul.f32 %v728, %v668
          %v755 = vmul.f32 %v730, %v668
          %v756 = vmul.f32 %v732, %v668
          %v757 = vmul.f32 %v734, %v668
          %v758 = vmul.f32 %v736, %v668
          %v759 = vmul.f32 %v738, %v668
          %v760 = vmul.f32 %v740, %v668
          %v761 = vmul.f32 %v742, %v668
          %v762 = vmul.f32 %v744, %v668
          %v763 = vmul.f32 %v746, %v668
          %v764 = vmul.f32 %v748, %v668
          %v765 = vadd.f32 %v749, 1e-05
          %v766 = vadd.f32 %v750, 1e-05
          %v767 = vadd.f32 %v751, 1e-05
          %v768 = vadd.f32 %v752, 1e-05
          %v769 = vadd.f32 %v753, 1e-05
          %v770 = vadd.f32 %v754, 1e-05
          %v771 = vadd.f32 %v755, 1e-05
          %v772 = vadd.f32 %v756, 1e-05
          %v773 = vadd.f32 %v757, 1e-05
          %v774 = vadd.f32 %v758, 1e-05
          %v775 = vadd.f32 %v759, 1e-05
          %v776 = vadd.f32 %v760, 1e-05
          %v777 = vadd.f32 %v761, 1e-05
          %v778 = vadd.f32 %v762, 1e-05
          %v779 = vadd.f32 %v763, 1e-05
          %v780 = vadd.f32 %v764, 1e-05
          %v781 = vrsqrt.pop %v765
          %v782 = vrsqrt.pop %v766
          %v783 = vrsqrt.pop %v767
          %v784 = vrsqrt.pop %v768
          %v785 = vrsqrt.pop %v769
          %v786 = vrsqrt.pop %v770
          %v787 = vrsqrt.pop %v771
          %v788 = vrsqrt.pop %v772
          %v789 = vrsqrt.pop %v773
          %v790 = vrsqrt.pop %v774
          %v791 = vrsqrt.pop %v775
          %v792 = vrsqrt.pop %v776
          %v793 = vrsqrt.pop %v777
          %v794 = vrsqrt.pop %v778
          %v795 = vrsqrt.pop %v779
          %v796 = vrsqrt.pop %v780
          %v797 = vmul.f32 %v685, %v781
          %v798 = vmul.f32 %v686, %v782
          %v799 = vmul.f32 %v687, %v783
          %v800 = vmul.f32 %v688, %v784
          %v801 = vmul.f32 %v689, %v785
          %v802 = vmul.f32 %v690, %v786
          %v803 = vmul.f32 %v691, %v787
          %v804 = vmul.f32 %v692, %v788
          %v805 = vmul.f32 %v693, %v789
          %v806 = vmul.f32 %v694, %v790
          %v807 = vmul.f32 %v695, %v791
          %v808 = vmul.f32 %v696, %v792
          %v809 = vmul.f32 %v697, %v793
          %v810 = vmul.f32 %v698, %v794
          %v811 = vmul.f32 %v699, %v795
          %v812 = vmul.f32 %v700, %v796
          %v814 = vlaneseq
          %v815 = vshrl.u32 %v814, 7
          %v816 = vsub.s32 0, %v815
          %v817 = vrot.slane %v634, %v816
          %v819 = vmul.f32 %v797, %v817
          %v820 = vmul.f32 %v798, %v817
          %v821 = vmul.f32 %v799, %v817
          %v822 = vmul.f32 %v800, %v817
          %v823 = vmul.f32 %v801, %v817
          %v824 = vmul.f32 %v802, %v817
          %v825 = vmul.f32 %v803, %v817
          %v826 = vmul.f32 %v804, %v817
          %v827 = vmul.f32 %v805, %v817
          %v828 = vmul.f32 %v806, %v817
          %v829 = vmul.f32 %v807, %v817
          %v830 = vmul.f32 %v808, %v817
          %v831 = vmul.f32 %v809, %v817
          %v832 = vmul.f32 %v810, %v817
          %v833 = vmul.f32 %v811, %v817
          %v834 = vmul.f32 %v812, %v817
          %v836 = vlaneseq
          %v837 = vshrl.u32 %v836, 7
          %v838 = vsub.s32 0, %v837
          %v839 = vrot.slane %v635, %v838
          %v841 = vadd.f32 %v819, %v839
          %v842 = vadd.f32 %v820, %v839
          %v843 = vadd.f32 %v821, %v839
          %v844 = vadd.f32 %v822, %v839
          %v845 = vadd.f32 %v823, %v839
          %v846 = vadd.f32 %v824, %v839
          %v847 = vadd.f32 %v825, %v839
          %v848 = vadd.f32 %v826, %v839
          %v849 = vadd.f32 %v827, %v839
          %v850 = vadd.f32 %v828, %v839
          %v851 = vadd.f32 %v829, %v839
          %v852 = vadd.f32 %v830, %v839
          %v853 = vadd.f32 %v831, %v839
          %v854 = vadd.f32 %v832, %v839
          %v855 = vadd.f32 %v833, %v839
          %v856 = vadd.f32 %v834, %v839
          %v857 = vpack.c.bf16 %v842, %v841
          %v858 = vpack.c.bf16 %v844, %v843
          %v859 = vpack.c.bf16 %v846, %v845
          %v860 = vpack.c.bf16 %v848, %v847
          %v861 = vpack.c.bf16 %v850, %v849
          %v862 = vpack.c.bf16 %v852, %v851
          %v863 = vpack.c.bf16 %v854, %v853
          %v864 = vpack.c.bf16 %v856, %v855
          %v865 = vld [vmem:[#allocation11] sm:$0xff]
          %v866 = vld [vmem:[#allocation11 + $0x8] sm:$0xff]
          %v867 = vld [vmem:[#allocation11 + $0x10] sm:$0xff]
          %v868 = vld [vmem:[#allocation11 + $0x18] sm:$0xff]
          %v869 = vld [vmem:[#allocation11 + $0x20] sm:$0xff]
          %v870 = vld [vmem:[#allocation11 + $0x28] sm:$0xff]
          %v871 = vld [vmem:[#allocation11 + $0x30] sm:$0xff]
          %v872 = vld [vmem:[#allocation11 + $0x38] sm:$0xff]
          %v873 = vld [vmem:[#allocation11 + $0x40] sm:$0xff]
          %v874 = vld [vmem:[#allocation11 + $0x48] sm:$0xff]
          %v875 = vld [vmem:[#allocation11 + $0x50] sm:$0xff]
          %v876 = vld [vmem:[#allocation11 + $0x58] sm:$0xff]
          %v877 = vld [vmem:[#allocation11 + $0x60] sm:$0xff]
          %v878 = vld [vmem:[#allocation11 + $0x68] sm:$0xff]
          %v879 = vld [vmem:[#allocation11 + $0x70] sm:$0xff]
          %v880 = vld [vmem:[#allocation11 + $0x78] sm:$0xff]
          %v881 = vld [vmem:[%s6] sm:$0x3]
          %v883 = vlaneseq
          %v884 = vshrl.u32 %v883, 7
          %v885 = vsub.s32 0, %v884
          %v886 = vrot.slane %v881, %v885
          %v887 = vlaneseq
          %v888 = vshrl.u32 %v887, 7
          %v889 = vsub.s32 1, %v888
          %v890 = vrot.slane %v881, %v889
          %v909 = vunpack.c.l.b16 %v865
          %v910 = vunpack.c.h.b16 %v865
          %v911 = vunpack.c.l.b16 %v866
          %v912 = vunpack.c.h.b16 %v866
          %v913 = vunpack.c.l.b16 %v867
          %v914 = vunpack.c.h.b16 %v867
          %v915 = vunpack.c.l.b16 %v868
          %v916 = vunpack.c.h.b16 %v868
          %v917 = vunpack.c.l.b16 %v869
          %v918 = vunpack.c.h.b16 %v869
          %v919 = vunpack.c.l.b16 %v870
          %v920 = vunpack.c.h.b16 %v870
          %v921 = vunpack.c.l.b16 %v871
          %v922 = vunpack.c.h.b16 %v871
          %v923 = vunpack.c.l.b16 %v872
          %v924 = vunpack.c.h.b16 %v872
          %v925 = vunpack.c.l.b16 %v873
          %v926 = vunpack.c.h.b16 %v873
          %v927 = vunpack.c.l.b16 %v874
          %v928 = vunpack.c.h.b16 %v874
          %v929 = vunpack.c.l.b16 %v875
          %v930 = vunpack.c.h.b16 %v875
          %v931 = vunpack.c.l.b16 %v876
          %v932 = vunpack.c.h.b16 %v876
          %v933 = vunpack.c.l.b16 %v877
          %v934 = vunpack.c.h.b16 %v877
          %v935 = vunpack.c.l.b16 %v878
          %v936 = vunpack.c.h.b16 %v878
          %v937 = vunpack.c.l.b16 %v879
          %v938 = vunpack.c.h.b16 %v879
          %v939 = vunpack.c.l.b16 %v880
          %v940 = vunpack.c.h.b16 %v880
          %v941 = vpack.c.b16 %v911, %v909
          %v942 = vpack.c.b16 %v912, %v910
          %v943 = vpack.c.b16 %v915, %v913
          %v944 = vpack.c.b16 %v916, %v914
          %v945 = vpack.c.b16 %v919, %v917
          %v946 = vpack.c.b16 %v920, %v918
          %v947 = vpack.c.b16 %v923, %v921
          %v948 = vpack.c.b16 %v924, %v922
          %v949 = vpack.c.b16 %v927, %v925
          %v950 = vpack.c.b16 %v928, %v926
          %v951 = vpack.c.b16 %v931, %v929
          %v952 = vpack.c.b16 %v932, %v930
          %v953 = vpack.c.b16 %v935, %v933
          %v954 = vpack.c.b16 %v936, %v934
          %v955 = vpack.c.b16 %v939, %v937
          %v956 = vpack.c.b16 %v940, %v938
          %973 = vmatprep.subr.bf16.mxu0 %v942
          %974 = vmatpush1.bf16.msra.mxu0 %v941
          %975 = vmatprep.subr.bf16.mxu0 %v944
          %976 = vmatpush1.bf16.msra.mxu0 %v943
          %977 = vmatprep.subr.bf16.mxu0 %v946
          %978 = vmatpush1.bf16.msra.mxu0 %v945
          %979 = vmatprep.subr.bf16.mxu0 %v948
          %980 = vmatpush1.bf16.msra.mxu0 %v947
          %981 = vmatprep.subr.bf16.mxu0 %v950
          %982 = vmatpush1.bf16.msra.mxu0 %v949
          %983 = vmatprep.subr.bf16.mxu0 %v952
          %984 = vmatpush1.bf16.msra.mxu0 %v951
          %985 = vmatprep.subr.bf16.mxu0 %v954
          %986 = vmatpush1.bf16.msra.mxu0 %v953
          %987 = vmatprep.subr.bf16.mxu0 %v956
          %988 = vmatpush1.bf16.msra.mxu0 %v955
          %989 = vmatprep.subr.bf16.mxu0 0
          %990 = vmatpush1.bf16.msra.mxu0 0
          %991 = vmatprep.subr.bf16.mxu0 0
          %992 = vmatpush1.bf16.msra.mxu0 0
          %993 = vmatprep.subr.bf16.mxu0 0
          %994 = vmatpush1.bf16.msra.mxu0 0
          %995 = vmatprep.subr.bf16.mxu0 0
          %996 = vmatpush1.bf16.msra.mxu0 0
          %997 = vmatprep.subr.bf16.mxu0 0
          %998 = vmatpush1.bf16.msra.mxu0 0
          %999 = vmatprep.subr.bf16.mxu0 0
          %1000 = vmatpush1.bf16.msra.mxu0 0
          %1001 = vmatprep.subr.bf16.mxu0 0
          %1002 = vmatpush1.bf16.msra.mxu0 0
          %1003 = vmatprep.subr.bf16.mxu0 0
          %1004 = vmatpush1.bf16.msra.mxu0 0
          %1005 = vmatprep.mubr.bf16.mxu0 0
          %1006 = vmatmul.mubr.bf16.gmra.mrb[0].mxu0 %v857
          %v1007 = vpop.f32.mrb[0].mxu0
          %v1008 = vadd.f32 %v886, %v1007
          %v1009 = vpop.f32.mrb[0].mxu0
          %v1010 = vadd.f32 %v890, %v1009
          %v1011 = vpop.f32.mrb[0].mxu0
          %v1012 = vadd.f32 %v886, %v1011
          %v1013 = vpop.f32.mrb[0].mxu0
          %v1014 = vadd.f32 %v890, %v1013
          %1015 = vmatprep.mubr.bf16.mxu0 0
          %1016 = vmatmul.mubr.bf16.gmra.mrb[0].mxu0 %v858
          %v1017 = vpop.f32.mrb[0].mxu0
          %v1018 = vadd.f32 %v886, %v1017
          %v1019 = vpop.f32.mrb[0].mxu0
          %v1020 = vadd.f32 %v890, %v1019
          %v1021 = vpop.f32.mrb[0].mxu0
          %v1022 = vadd.f32 %v886, %v1021
          %v1023 = vpop.f32.mrb[0].mxu0
          %v1024 = vadd.f32 %v890, %v1023
          %1025 = vmatprep.mubr.bf16.mxu0 0
          %1026 = vmatmul.mubr.bf16.gmra.mrb[0].mxu0 %v859
          %v1027 = vpop.f32.mrb[0].mxu0
          %v1028 = vadd.f32 %v886, %v1027
          %v1029 = vpop.f32.mrb[0].mxu0
          %v1030 = vadd.f32 %v890, %v1029
          %v1031 = vpop.f32.mrb[0].mxu0
          %v1032 = vadd.f32 %v886, %v1031
          %v1033 = vpop.f32.mrb[0].mxu0
          %v1034 = vadd.f32 %v890, %v1033
          %1035 = vmatprep.mubr.bf16.mxu0 0
          %1036 = vmatmul.mubr.bf16.gmra.mrb[0].mxu0 %v860
          %v1037 = vpop.f32.mrb[0].mxu0
          %v1038 = vadd.f32 %v886, %v1037
          %v1039 = vpop.f32.mrb[0].mxu0
          %v1040 = vadd.f32 %v890, %v1039
          %v1041 = vpop.f32.mrb[0].mxu0
          %v1042 = vadd.f32 %v886, %v1041
          %v1043 = vpop.f32.mrb[0].mxu0
          %v1044 = vadd.f32 %v890, %v1043
          %1045 = vmatprep.mubr.bf16.mxu0 0
          %1046 = vmatmul.mubr.bf16.gmra.mrb[0].mxu0 %v861
          %v1047 = vpop.f32.mrb[0].mxu0
          %v1048 = vadd.f32 %v886, %v1047
          %v1049 = vpop.f32.mrb[0].mxu0
          %v1050 = vadd.f32 %v890, %v1049
          %v1051 = vpop.f32.mrb[0].mxu0
          %v1052 = vadd.f32 %v886, %v1051
          %v1053 = vpop.f32.mrb[0].mxu0
          %v1054 = vadd.f32 %v890, %v1053
          %1055 = vmatprep.mubr.bf16.mxu0 0
          %1056 = vmatmul.mubr.bf16.gmra.mrb[0].mxu0 %v862
          %v1057 = vpop.f32.mrb[0].mxu0
          %v1058 = vadd.f32 %v886, %v1057
          %v1059 = vpop.f32.mrb[0].mxu0
          %v1060 = vadd.f32 %v890, %v1059
          %v1061 = vpop.f32.mrb[0].mxu0
          %v1062 = vadd.f32 %v886, %v1061
          %v1063 = vpop.f32.mrb[0].mxu0
          %v1064 = vadd.f32 %v890, %v1063
          %1065 = vmatprep.mubr.bf16.mxu0 0
          %1066 = vmatmul.mubr.bf16.gmra.mrb[0].mxu0 %v863
          %v1067 = vpop.f32.mrb[0].mxu0
          %v1068 = vadd.f32 %v886, %v1067
          %v1069 = vpop.f32.mrb[0].mxu0
          %v1070 = vadd.f32 %v890, %v1069
          %v1071 = vpop.f32.mrb[0].mxu0
          %v1072 = vadd.f32 %v886, %v1071
          %v1073 = vpop.f32.mrb[0].mxu0
          %v1074 = vadd.f32 %v890, %v1073
          %1075 = vmatprep.mubr.bf16.mxu0 0
          %1076 = vmatmul.mubr.bf16.gmra.mrb[0].mxu0 %v864
          %v1077 = vpop.f32.mrb[0].mxu0
          %v1078 = vadd.f32 %v886, %v1077
          %v1079 = vpop.f32.mrb[0].mxu0
          %v1080 = vadd.f32 %v890, %v1079
          %v1081 = vpop.f32.mrb[0].mxu0
          %v1082 = vadd.f32 %v886, %v1081
          %v1083 = vpop.f32.mrb[0].mxu0
          %v1084 = vadd.f32 %v890, %v1083
          %1085 = vdwg.mxu0
          %v1086 = vpack.c.bf16 %v1012, %v1008
          %v1087 = vpack.c.bf16 %v1022, %v1018
          %v1088 = vpack.c.bf16 %v1032, %v1028
          %v1089 = vpack.c.bf16 %v1042, %v1038
          %v1090 = vpack.c.bf16 %v1052, %v1048
          %v1091 = vpack.c.bf16 %v1062, %v1058
          %v1092 = vpack.c.bf16 %v1072, %v1068
          %v1093 = vpack.c.bf16 %v1082, %v1078
          %vm1094 = vcmask 261120
          %1095 = vst.msk [vmem:[#allocation2] sm:$0xff] %vm1094, %v1086
          %1096 = vst.msk [vmem:[#allocation2 + $0x8] sm:$0xff] %vm1094, %v1087
          %1097 = vst.msk [vmem:[#allocation2 + $0x10] sm:$0xff] %vm1094, %v1088
          %1098 = vst.msk [vmem:[#allocation2 + $0x18] sm:$0xff] %vm1094, %v1089
          %1099 = vst.msk [vmem:[#allocation2 + $0x20] sm:$0xff] %vm1094, %v1090
          %1100 = vst.msk [vmem:[#allocation2 + $0x28] sm:$0xff] %vm1094, %v1091
          %1101 = vst.msk [vmem:[#allocation2 + $0x30] sm:$0xff] %vm1094, %v1092
          %1102 = vst.msk [vmem:[#allocation2 + $0x38] sm:$0xff] %vm1094, %v1093
          %v1103 = vpack.c.bf16 %v1014, %v1010
          %v1104 = vpack.c.bf16 %v1024, %v1020
          %v1105 = vpack.c.bf16 %v1034, %v1030
          %v1106 = vpack.c.bf16 %v1044, %v1040
          %v1107 = vpack.c.bf16 %v1054, %v1050
          %v1108 = vpack.c.bf16 %v1064, %v1060
          %v1109 = vpack.c.bf16 %v1074, %v1070
          %v1110 = vpack.c.bf16 %v1084, %v1080
          %1111 = vst.msk [vmem:[#allocation3] sm:$0xff] %vm1094, %v1103
          %1112 = vst.msk [vmem:[#allocation3 + $0x8] sm:$0xff] %vm1094, %v1104
          %1113 = vst.msk [vmem:[#allocation3 + $0x10] sm:$0xff] %vm1094, %v1105
          %1114 = vst.msk [vmem:[#allocation3 + $0x18] sm:$0xff] %vm1094, %v1106
          %1115 = vst.msk [vmem:[#allocation3 + $0x20] sm:$0xff] %vm1094, %v1107
          %1116 = vst.msk [vmem:[#allocation3 + $0x28] sm:$0xff] %vm1094, %v1108
          %1117 = vst.msk [vmem:[#allocation3 + $0x30] sm:$0xff] %vm1094, %v1109
          %1118 = vst.msk [vmem:[#allocation3 + $0x38] sm:$0xff] %vm1094, %v1110
          %1127 = vrot.lane.b32.xlu0 %v1086, 96
          %v1128 = vpop.permute.xlu0 %1127
          %1129 = vrot.lane.b32.xlu0 %v1087, 96
          %v1130 = vpop.permute.xlu0 %1129
          %1131 = vrot.lane.b32.xlu0 %v1088, 96
          %v1132 = vpop.permute.xlu0 %1131
          %1133 = vrot.lane.b32.xlu0 %v1089, 96
          %v1134 = vpop.permute.xlu0 %1133
          %1135 = vrot.lane.b32.xlu0 %v1090, 96
          %v1136 = vpop.permute.xlu0 %1135
          %1137 = vrot.lane.b32.xlu0 %v1091, 96
          %v1138 = vpop.permute.xlu0 %1137
          %1139 = vrot.lane.b32.xlu0 %v1092, 96
          %v1140 = vpop.permute.xlu0 %1139
          %1141 = vrot.lane.b32.xlu0 %v1093, 96
          %v1142 = vpop.permute.xlu0 %1141
          %s1151 = scalar_lea.vmem [#allocation2], 64
          %1152 = vst.msk [vmem:[%s1151] sm:$0xff] %vm1094, %v1128
          %1153 = vst.msk [vmem:[%s1151 + $0x8] sm:$0xff] %vm1094, %v1130
          %1154 = vst.msk [vmem:[%s1151 + $0x10] sm:$0xff] %vm1094, %v1132
          %1155 = vst.msk [vmem:[%s1151 + $0x18] sm:$0xff] %vm1094, %v1134
          %1156 = vst.msk [vmem:[%s1151 + $0x20] sm:$0xff] %vm1094, %v1136
          %1157 = vst.msk [vmem:[%s1151 + $0x28] sm:$0xff] %vm1094, %v1138
          %1158 = vst.msk [vmem:[%s1151 + $0x30] sm:$0xff] %vm1094, %v1140
          %1159 = vst.msk [vmem:[%s1151 + $0x38] sm:$0xff] %vm1094, %v1142
          %1168 = vrot.lane.b32.xlu0 %v1103, 96
          %v1169 = vpop.permute.xlu0 %1168
          %1170 = vrot.lane.b32.xlu0 %v1104, 96
          %v1171 = vpop.permute.xlu0 %1170
          %1172 = vrot.lane.b32.xlu0 %v1105, 96
          %v1173 = vpop.permute.xlu0 %1172
          %1174 = vrot.lane.b32.xlu0 %v1106, 96
          %v1175 = vpop.permute.xlu0 %1174
          %1176 = vrot.lane.b32.xlu0 %v1107, 96
          %v1177 = vpop.permute.xlu0 %1176
          %1178 = vrot.lane.b32.xlu0 %v1108, 96
          %v1179 = vpop.permute.xlu0 %1178
          %1180 = vrot.lane.b32.xlu0 %v1109, 96
          %v1181 = vpop.permute.xlu0 %1180
          %1182 = vrot.lane.b32.xlu0 %v1110, 96
          %v1183 = vpop.permute.xlu0 %1182
          %s1192 = scalar_lea.vmem [#allocation3], 64
          %1193 = vst.msk [vmem:[%s1192] sm:$0xff] %vm1094, %v1169
          %1194 = vst.msk [vmem:[%s1192 + $0x8] sm:$0xff] %vm1094, %v1171
          %1195 = vst.msk [vmem:[%s1192 + $0x10] sm:$0xff] %vm1094, %v1173
          %1196 = vst.msk [vmem:[%s1192 + $0x18] sm:$0xff] %vm1094, %v1175
          %1197 = vst.msk [vmem:[%s1192 + $0x20] sm:$0xff] %vm1094, %v1177
          %1198 = vst.msk [vmem:[%s1192 + $0x28] sm:$0xff] %vm1094, %v1179
          %1199 = vst.msk [vmem:[%s1192 + $0x30] sm:$0xff] %vm1094, %v1181
          %1200 = vst.msk [vmem:[%s1192 + $0x38] sm:$0xff] %vm1094, %v1183
          %1201 = vrot.lane.b32.xlu0 %v1086, 64
          %v1202 = vpop.permute.xlu0 %1201
          %1203 = vrot.lane.b32.xlu0 %v1087, 64
          %v1204 = vpop.permute.xlu0 %1203
          %1205 = vrot.lane.b32.xlu0 %v1088, 64
          %v1206 = vpop.permute.xlu0 %1205
          %1207 = vrot.lane.b32.xlu0 %v1089, 64
          %v1208 = vpop.permute.xlu0 %1207
          %1209 = vrot.lane.b32.xlu0 %v1090, 64
          %v1210 = vpop.permute.xlu0 %1209
          %1211 = vrot.lane.b32.xlu0 %v1091, 64
          %v1212 = vpop.permute.xlu0 %1211
          %1213 = vrot.lane.b32.xlu0 %v1092, 64
          %v1214 = vpop.permute.xlu0 %1213
          %1215 = vrot.lane.b32.xlu0 %v1093, 64
          %v1216 = vpop.permute.xlu0 %1215
          %s1225 = scalar_lea.vmem [#allocation2], 128
          %1226 = vst.msk [vmem:[%s1225] sm:$0xff] %vm1094, %v1202
          %1227 = vst.msk [vmem:[%s1225 + $0x8] sm:$0xff] %vm1094, %v1204
          %1228 = vst.msk [vmem:[%s1225 + $0x10] sm:$0xff] %vm1094, %v1206
          %1229 = vst.msk [vmem:[%s1225 + $0x18] sm:$0xff] %vm1094, %v1208
          %1230 = vst.msk [vmem:[%s1225 + $0x20] sm:$0xff] %vm1094, %v1210
          %1231 = vst.msk [vmem:[%s1225 + $0x28] sm:$0xff] %vm1094, %v1212
          %1232 = vst.msk [vmem:[%s1225 + $0x30] sm:$0xff] %vm1094, %v1214
          %1233 = vst.msk [vmem:[%s1225 + $0x38] sm:$0xff] %vm1094, %v1216
          %1234 = vrot.lane.b32.xlu0 %v1103, 64
          %v1235 = vpop.permute.xlu0 %1234
          %1236 = vrot.lane.b32.xlu0 %v1104, 64
          %v1237 = vpop.permute.xlu0 %1236
          %1238 = vrot.lane.b32.xlu0 %v1105, 64
          %v1239 = vpop.permute.xlu0 %1238
          %1240 = vrot.lane.b32.xlu0 %v1106, 64
          %v1241 = vpop.permute.xlu0 %1240
          %1242 = vrot.lane.b32.xlu0 %v1107, 64
          %v1243 = vpop.permute.xlu0 %1242
          %1244 = vrot.lane.b32.xlu0 %v1108, 64
          %v1245 = vpop.permute.xlu0 %1244
          %1246 = vrot.lane.b32.xlu0 %v1109, 64
          %v1247 = vpop.permute.xlu0 %1246
          %1248 = vrot.lane.b32.xlu0 %v1110, 64
          %v1249 = vpop.permute.xlu0 %1248
          %s1258 = scalar_lea.vmem [#allocation3], 128
          %1259 = vst.msk [vmem:[%s1258] sm:$0xff] %vm1094, %v1235
          %1260 = vst.msk [vmem:[%s1258 + $0x8] sm:$0xff] %vm1094, %v1237
          %1261 = vst.msk [vmem:[%s1258 + $0x10] sm:$0xff] %vm1094, %v1239
          %1262 = vst.msk [vmem:[%s1258 + $0x18] sm:$0xff] %vm1094, %v1241
          %1263 = vst.msk [vmem:[%s1258 + $0x20] sm:$0xff] %vm1094, %v1243
          %1264 = vst.msk [vmem:[%s1258 + $0x28] sm:$0xff] %vm1094, %v1245
          %1265 = vst.msk [vmem:[%s1258 + $0x30] sm:$0xff] %vm1094, %v1247
          %1266 = vst.msk [vmem:[%s1258 + $0x38] sm:$0xff] %vm1094, %v1249
          %1267 = vrot.lane.b32.xlu0 %v1086, 32
          %v1268 = vpop.permute.xlu0 %1267
          %1269 = vrot.lane.b32.xlu0 %v1087, 32
          %v1270 = vpop.permute.xlu0 %1269
          %1271 = vrot.lane.b32.xlu0 %v1088, 32
          %v1272 = vpop.permute.xlu0 %1271
          %1273 = vrot.lane.b32.xlu0 %v1089, 32
          %v1274 = vpop.permute.xlu0 %1273
          %1275 = vrot.lane.b32.xlu0 %v1090, 32
          %v1276 = vpop.permute.xlu0 %1275
          %1277 = vrot.lane.b32.xlu0 %v1091, 32
          %v1278 = vpop.permute.xlu0 %1277
          %1279 = vrot.lane.b32.xlu0 %v1092, 32
          %v1280 = vpop.permute.xlu0 %1279
          %1281 = vrot.lane.b32.xlu0 %v1093, 32
          %v1282 = vpop.permute.xlu0 %1281
          %s1291 = scalar_lea.vmem [#allocation2], 192
          %1292 = vst.msk [vmem:[%s1291] sm:$0xff] %vm1094, %v1268
          %1293 = vst.msk [vmem:[%s1291 + $0x8] sm:$0xff] %vm1094, %v1270
          %1294 = vst.msk [vmem:[%s1291 + $0x10] sm:$0xff] %vm1094, %v1272
          %1295 = vst.msk [vmem:[%s1291 + $0x18] sm:$0xff] %vm1094, %v1274
          %1296 = vst.msk [vmem:[%s1291 + $0x20] sm:$0xff] %vm1094, %v1276
          %1297 = vst.msk [vmem:[%s1291 + $0x28] sm:$0xff] %vm1094, %v1278
          %1298 = vst.msk [vmem:[%s1291 + $0x30] sm:$0xff] %vm1094, %v1280
          %1299 = vst.msk [vmem:[%s1291 + $0x38] sm:$0xff] %vm1094, %v1282
          %1300 = vrot.lane.b32.xlu0 %v1103, 32
          %v1301 = vpop.permute.xlu0 %1300
          %1302 = vrot.lane.b32.xlu0 %v1104, 32
          %v1303 = vpop.permute.xlu0 %1302
          %1304 = vrot.lane.b32.xlu0 %v1105, 32
          %v1305 = vpop.permute.xlu0 %1304
          %1306 = vrot.lane.b32.xlu0 %v1106, 32
          %v1307 = vpop.permute.xlu0 %1306
          %1308 = vrot.lane.b32.xlu0 %v1107, 32
          %v1309 = vpop.permute.xlu0 %1308
          %1310 = vrot.lane.b32.xlu0 %v1108, 32
          %v1311 = vpop.permute.xlu0 %1310
          %1312 = vrot.lane.b32.xlu0 %v1109, 32
          %v1313 = vpop.permute.xlu0 %1312
          %1314 = vrot.lane.b32.xlu0 %v1110, 32
          %v1315 = vpop.permute.xlu0 %1314
          %s1324 = scalar_lea.vmem [#allocation3], 192
          %1325 = vst.msk [vmem:[%s1324] sm:$0xff] %vm1094, %v1301
          %1326 = vst.msk [vmem:[%s1324 + $0x8] sm:$0xff] %vm1094, %v1303
          %1327 = vst.msk [vmem:[%s1324 + $0x10] sm:$0xff] %vm1094, %v1305
          %1328 = vst.msk [vmem:[%s1324 + $0x18] sm:$0xff] %vm1094, %v1307
          %1329 = vst.msk [vmem:[%s1324 + $0x20] sm:$0xff] %vm1094, %v1309
          %1330 = vst.msk [vmem:[%s1324 + $0x28] sm:$0xff] %vm1094, %v1311
          %1331 = vst.msk [vmem:[%s1324 + $0x30] sm:$0xff] %vm1094, %v1313
          %1332 = vst.msk [vmem:[%s1324 + $0x38] sm:$0xff] %vm1094, %v1315
        $region112: #{tpu_custom_call.1} parent=79 // pred_fallthru
          _
        %s1333 = smul.u32 %s40, 64
        %s1334 = scalar_lea.vmem %s541, %s1333 [#allocation5]
        %v1335 = vld [vmem:[%s1334] sm:$0xff]
        %v1336 = vld [vmem:[%s1334 + $0x8] sm:$0xff]
        %v1337 = vld [vmem:[%s1334 + $0x10] sm:$0xff]
        %v1338 = vld [vmem:[%s1334 + $0x18] sm:$0xff]
        %v1339 = vld [vmem:[%s1334 + $0x20] sm:$0xff]
        %v1340 = vld [vmem:[%s1334 + $0x28] sm:$0xff]
        %v1341 = vld [vmem:[%s1334 + $0x30] sm:$0xff]
        %v1342 = vld [vmem:[%s1334 + $0x38] sm:$0xff]
        %v1343 = vld [vmem:[%s1] sm:$0x1]
        %v1344 = vld [vmem:[#allocation8] sm:$0x1]
        %1345 = vadd.xlane.f32.xlu0 %v1335
        %v1346 = vpop.xlane.xlu0 %1345
        %1347 = vadd.xlane.f32.xlu0 %v1336
        %v1348 = vpop.xlane.xlu0 %1347
        %1349 = vadd.xlane.f32.xlu0 %v1337
        %v1350 = vpop.xlane.xlu0 %1349
        %1351 = vadd.xlane.f32.xlu0 %v1338
        %v1352 = vpop.xlane.xlu0 %1351
        %1353 = vadd.xlane.f32.xlu0 %v1339
        %v1354 = vpop.xlane.xlu0 %1353
        %1355 = vadd.xlane.f32.xlu0 %v1340
        %v1356 = vpop.xlane.xlu0 %1355
        %1357 = vadd.xlane.f32.xlu0 %v1341
        %v1358 = vpop.xlane.xlu0 %1357
        %1359 = vadd.xlane.f32.xlu0 %v1342
        %v1360 = vpop.xlane.xlu0 %1359
        %v1361 = vrcp.pop 128.0
        %v1362 = vmul.f32 %v1346, %v1361
        %v1363 = vmul.f32 %v1348, %v1361
        %v1364 = vmul.f32 %v1350, %v1361
        %v1365 = vmul.f32 %v1352, %v1361
        %v1366 = vmul.f32 %v1354, %v1361
        %v1367 = vmul.f32 %v1356, %v1361
        %v1368 = vmul.f32 %v1358, %v1361
        %v1369 = vmul.f32 %v1360, %v1361
        %v1370 = vsub.f32 %v1335, %v1362
        %v1371 = vsub.f32 %v1336, %v1363
        %v1372 = vsub.f32 %v1337, %v1364
        %v1373 = vsub.f32 %v1338, %v1365
        %v1374 = vsub.f32 %v1339, %v1366
        %v1375 = vsub.f32 %v1340, %v1367
        %v1376 = vsub.f32 %v1341, %v1368
        %v1377 = vsub.f32 %v1342, %v1369
        %v1378 = vmul.f32 %v1370, %v1370
        %v1379 = vmul.f32 %v1371, %v1371
        %v1380 = vmul.f32 %v1372, %v1372
        %v1381 = vmul.f32 %v1373, %v1373
        %v1382 = vmul.f32 %v1374, %v1374
        %v1383 = vmul.f32 %v1375, %v1375
        %v1384 = vmul.f32 %v1376, %v1376
        %v1385 = vmul.f32 %v1377, %v1377
        %1386 = vadd.xlane.f32.xlu0 %v1378
        %v1387 = vpop.xlane.xlu0 %1386
        %1388 = vadd.xlane.f32.xlu0 %v1379
        %v1389 = vpop.xlane.xlu0 %1388
        %1390 = vadd.xlane.f32.xlu0 %v1380
        %v1391 = vpop.xlane.xlu0 %1390
        %1392 = vadd.xlane.f32.xlu0 %v1381
        %v1393 = vpop.xlane.xlu0 %1392
        %1394 = vadd.xlane.f32.xlu0 %v1382
        %v1395 = vpop.xlane.xlu0 %1394
        %1396 = vadd.xlane.f32.xlu0 %v1383
        %v1397 = vpop.xlane.xlu0 %1396
        %1398 = vadd.xlane.f32.xlu0 %v1384
        %v1399 = vpop.xlane.xlu0 %1398
        %1400 = vadd.xlane.f32.xlu0 %v1385
        %v1401 = vpop.xlane.xlu0 %1400
        %v1402 = vmul.f32 %v1387, %v1361
        %v1403 = vmul.f32 %v1389, %v1361
        %v1404 = vmul.f32 %v1391, %v1361
        %v1405 = vmul.f32 %v1393, %v1361
        %v1406 = vmul.f32 %v1395, %v1361
        %v1407 = vmul.f32 %v1397, %v1361
        %v1408 = vmul.f32 %v1399, %v1361
        %v1409 = vmul.f32 %v1401, %v1361
        %v1410 = vadd.f32 %v1402, 1e-05
        %v1411 = vadd.f32 %v1403, 1e-05
        %v1412 = vadd.f32 %v1404, 1e-05
        %v1413 = vadd.f32 %v1405, 1e-05
        %v1414 = vadd.f32 %v1406, 1e-05
        %v1415 = vadd.f32 %v1407, 1e-05
        %v1416 = vadd.f32 %v1408, 1e-05
        %v1417 = vadd.f32 %v1409, 1e-05
        %v1418 = vrsqrt.pop %v1410
        %v1419 = vrsqrt.pop %v1411
        %v1420 = vrsqrt.pop %v1412
        %v1421 = vrsqrt.pop %v1413
        %v1422 = vrsqrt.pop %v1414
        %v1423 = vrsqrt.pop %v1415
        %v1424 = vrsqrt.pop %v1416
        %v1425 = vrsqrt.pop %v1417
        %v1426 = vmul.f32 %v1370, %v1418
        %v1427 = vmul.f32 %v1371, %v1419
        %v1428 = vmul.f32 %v1372, %v1420
        %v1429 = vmul.f32 %v1373, %v1421
        %v1430 = vmul.f32 %v1374, %v1422
        %v1431 = vmul.f32 %v1375, %v1423
        %v1432 = vmul.f32 %v1376, %v1424
        %v1433 = vmul.f32 %v1377, %v1425
        %v1435 = vlaneseq
        %v1436 = vshrl.u32 %v1435, 7
        %v1437 = vsub.s32 0, %v1436
        %v1438 = vrot.slane %v1343, %v1437
        %v1440 = vmul.f32 %v1426, %v1438
        %v1441 = vmul.f32 %v1427, %v1438
        %v1442 = vmul.f32 %v1428, %v1438
        %v1443 = vmul.f32 %v1429, %v1438
        %v1444 = vmul.f32 %v1430, %v1438
        %v1445 = vmul.f32 %v1431, %v1438
        %v1446 = vmul.f32 %v1432, %v1438
        %v1447 = vmul.f32 %v1433, %v1438
        %v1449 = vlaneseq
        %v1450 = vshrl.u32 %v1449, 7
        %v1451 = vsub.s32 0, %v1450
        %v1452 = vrot.slane %v1344, %v1451
        %v1454 = vadd.f32 %v1440, %v1452
        %v1455 = vadd.f32 %v1441, %v1452
        %v1456 = vadd.f32 %v1442, %v1452
        %v1457 = vadd.f32 %v1443, %v1452
        %v1458 = vadd.f32 %v1444, %v1452
        %v1459 = vadd.f32 %v1445, %v1452
        %v1460 = vadd.f32 %v1446, %v1452
        %v1461 = vadd.f32 %v1447, %v1452
        %v1462 = vpack.c.bf16 %v1455, %v1454
        %v1463 = vpack.c.bf16 %v1457, %v1456
        %v1464 = vpack.c.bf16 %v1459, %v1458
        %v1465 = vpack.c.bf16 %v1461, %v1460
        %v1466 = vld [vmem:[#allocation10] sm:$0xf]
        %v1467 = vld [vmem:[#allocation10 + $0x4] sm:$0xf]
        %v1468 = vld [vmem:[#allocation10 + $0x8] sm:$0xf]
        %v1469 = vld [vmem:[#allocation10 + $0xc] sm:$0xf]
        %v1470 = vld [vmem:[#allocation10 + $0x10] sm:$0xf]
        %v1471 = vld [vmem:[#allocation10 + $0x14] sm:$0xf]
        %v1472 = vld [vmem:[#allocation10 + $0x18] sm:$0xf]
        %v1473 = vld [vmem:[#allocation10 + $0x1c] sm:$0xf]
        %v1474 = vld [vmem:[#allocation10 + $0x20] sm:$0xf]
        %v1475 = vld [vmem:[#allocation10 + $0x24] sm:$0xf]
        %v1476 = vld [vmem:[#allocation10 + $0x28] sm:$0xf]
        %v1477 = vld [vmem:[#allocation10 + $0x2c] sm:$0xf]
        %v1478 = vld [vmem:[#allocation10 + $0x30] sm:$0xf]
        %v1479 = vld [vmem:[#allocation10 + $0x34] sm:$0xf]
        %v1480 = vld [vmem:[#allocation10 + $0x38] sm:$0xf]
        %v1481 = vld [vmem:[#allocation10 + $0x3c] sm:$0xf]
        %v1482 = vld [vmem:[%s4] sm:$0x1]
        %v1484 = vlaneseq
        %v1485 = vshrl.u32 %v1484, 7
        %v1486 = vsub.s32 0, %v1485
        %v1487 = vrot.slane %v1482, %v1486
        %v1505 = vunpack.c.l.b16 %v1466
        %v1506 = vunpack.c.l.b16 %v1467
        %v1507 = vunpack.c.l.b16 %v1468
        %v1508 = vunpack.c.l.b16 %v1469
        %v1509 = vunpack.c.l.b16 %v1470
        %v1510 = vunpack.c.l.b16 %v1471
        %v1511 = vunpack.c.l.b16 %v1472
        %v1512 = vunpack.c.l.b16 %v1473
        %v1513 = vunpack.c.l.b16 %v1474
        %v1514 = vunpack.c.l.b16 %v1475
        %v1515 = vunpack.c.l.b16 %v1476
        %v1516 = vunpack.c.l.b16 %v1477
        %v1517 = vunpack.c.l.b16 %v1478
        %v1518 = vunpack.c.l.b16 %v1479
        %v1519 = vunpack.c.l.b16 %v1480
        %v1520 = vunpack.c.l.b16 %v1481
        %v1521 = vpack.c.b16 %v1506, %v1505
        %v1522 = vpack.c.b16 %v1508, %v1507
        %v1523 = vpack.c.b16 %v1510, %v1509
        %v1524 = vpack.c.b16 %v1512, %v1511
        %v1525 = vpack.c.b16 %v1514, %v1513
        %v1526 = vpack.c.b16 %v1516, %v1515
        %v1527 = vpack.c.b16 %v1518, %v1517
        %v1528 = vpack.c.b16 %v1520, %v1519
        %1537 = vmatprep.subr.bf16.mxu0 0
        %1538 = vmatpush1.bf16.msra.mxu0 %v1521
        %1539 = vmatprep.subr.bf16.mxu0 0
        %1540 = vmatpush1.bf16.msra.mxu0 %v1522
        %1541 = vmatprep.subr.bf16.mxu0 0
        %1542 = vmatpush1.bf16.msra.mxu0 %v1523
        %1543 = vmatprep.subr.bf16.mxu0 0
        %1544 = vmatpush1.bf16.msra.mxu0 %v1524
        %1545 = vmatprep.subr.bf16.mxu0 0
        %1546 = vmatpush1.bf16.msra.mxu0 %v1525
        %1547 = vmatprep.subr.bf16.mxu0 0
        %1548 = vmatpush1.bf16.msra.mxu0 %v1526
        %1549 = vmatprep.subr.bf16.mxu0 0
        %1550 = vmatpush1.bf16.msra.mxu0 %v1527
        %1551 = vmatprep.subr.bf16.mxu0 0
        %1552 = vmatpush1.bf16.msra.mxu0 %v1528
        %1553 = vmatprep.subr.bf16.mxu0 0
        %1554 = vmatpush1.bf16.msra.mxu0 0
        %1555 = vmatprep.subr.bf16.mxu0 0
        %1556 = vmatpush1.bf16.msra.mxu0 0
        %1557 = vmatprep.subr.bf16.mxu0 0
        %1558 = vmatpush1.bf16.msra.mxu0 0
        %1559 = vmatprep.subr.bf16.mxu0 0
        %1560 = vmatpush1.bf16.msra.mxu0 0
        %1561 = vmatprep.subr.bf16.mxu0 0
        %1562 = vmatpush1.bf16.msra.mxu0 0
        %1563 = vmatprep.subr.bf16.mxu0 0
        %1564 = vmatpush1.bf16.msra.mxu0 0
        %1565 = vmatprep.subr.bf16.mxu0 0
        %1566 = vmatpush1.bf16.msra.mxu0 0
        %1567 = vmatprep.subr.bf16.mxu0 0
        %1568 = vmatpush1.bf16.msra.mxu0 0
        %1569 = vmatprep.mubr.bf16.mxu0 0
        %1570 = vmatmul.mubr.bf16.gmra.mrb[0].mxu0 %v1462
        %v1571 = vpop.f32.mrb[0].mxu0
        %v1572 = vadd.f32 %v1487, %v1571
        %v1573 = vpop.f32.mrb[0].mxu0
        %v1574 = vpop.f32.mrb[0].mxu0
        %v1575 = vadd.f32 %v1487, %v1574
        %v1576 = vpop.f32.mrb[0].mxu0
        %1577 = vmatprep.mubr.bf16.mxu0 0
        %1578 = vmatmul.mubr.bf16.gmra.mrb[0].mxu0 %v1463
        %v1579 = vpop.f32.mrb[0].mxu0
        %v1580 = vadd.f32 %v1487, %v1579
        %v1581 = vpop.f32.mrb[0].mxu0
        %v1582 = vpop.f32.mrb[0].mxu0
        %v1583 = vadd.f32 %v1487, %v1582
        %v1584 = vpop.f32.mrb[0].mxu0
        %1585 = vmatprep.mubr.bf16.mxu0 0
        %1586 = vmatmul.mubr.bf16.gmra.mrb[0].mxu0 %v1464
        %v1587 = vpop.f32.mrb[0].mxu0
        %v1588 = vadd.f32 %v1487, %v1587
        %v1589 = vpop.f32.mrb[0].mxu0
        %v1590 = vpop.f32.mrb[0].mxu0
        %v1591 = vadd.f32 %v1487, %v1590
        %v1592 = vpop.f32.mrb[0].mxu0
        %1593 = vmatprep.mubr.bf16.mxu0 0
        %1594 = vmatmul.mubr.bf16.gmra.mrb[0].mxu0 %v1465
        %v1595 = vpop.f32.mrb[0].mxu0
        %v1596 = vadd.f32 %v1487, %v1595
        %v1597 = vpop.f32.mrb[0].mxu0
        %v1598 = vpop.f32.mrb[0].mxu0
        %v1599 = vadd.f32 %v1487, %v1598
        %v1600 = vpop.f32.mrb[0].mxu0
        %1601 = vdwg.mxu0
        %v1602 = vpack.c.bf16 %v1575, %v1572
        %v1603 = vpack.c.bf16 %v1583, %v1580
        %v1604 = vpack.c.bf16 %v1591, %v1588
        %v1605 = vpack.c.bf16 %v1599, %v1596
        %vm1606 = vcmask 261120
        %1607 = vst.msk [vmem:[#allocation4] sm:$0xff] %vm1606, %v1602
        %1608 = vst.msk [vmem:[#allocation4 + $0x8] sm:$0xff] %vm1606, %v1603
        %1609 = vst.msk [vmem:[#allocation4 + $0x10] sm:$0xff] %vm1606, %v1604
        %1610 = vst.msk [vmem:[#allocation4 + $0x18] sm:$0xff] %vm1606, %v1605
        %1615 = vrot.lane.b32.xlu0 %v1602, 96
        %v1616 = vpop.permute.xlu0 %1615
        %1617 = vrot.lane.b32.xlu0 %v1603, 96
        %v1618 = vpop.permute.xlu0 %1617
        %1619 = vrot.lane.b32.xlu0 %v1604, 96
        %v1620 = vpop.permute.xlu0 %1619
        %1621 = vrot.lane.b32.xlu0 %v1605, 96
        %v1622 = vpop.permute.xlu0 %1621
        %s1627 = scalar_lea.vmem [#allocation4], 32
        %1628 = vst.msk [vmem:[%s1627] sm:$0xff] %vm1606, %v1616
        %1629 = vst.msk [vmem:[%s1627 + $0x8] sm:$0xff] %vm1606, %v1618
        %1630 = vst.msk [vmem:[%s1627 + $0x10] sm:$0xff] %vm1606, %v1620
        %1631 = vst.msk [vmem:[%s1627 + $0x18] sm:$0xff] %vm1606, %v1622
        %1632 = vrot.lane.b32.xlu0 %v1602, 64
        %v1633 = vpop.permute.xlu0 %1632
        %1634 = vrot.lane.b32.xlu0 %v1603, 64
        %v1635 = vpop.permute.xlu0 %1634
        %1636 = vrot.lane.b32.xlu0 %v1604, 64
        %v1637 = vpop.permute.xlu0 %1636
        %1638 = vrot.lane.b32.xlu0 %v1605, 64
        %v1639 = vpop.permute.xlu0 %1638
        %s1644 = scalar_lea.vmem [#allocation4], 64
        %1645 = vst.msk [vmem:[%s1644] sm:$0xff] %vm1606, %v1633
        %1646 = vst.msk [vmem:[%s1644 + $0x8] sm:$0xff] %vm1606, %v1635
        %1647 = vst.msk [vmem:[%s1644 + $0x10] sm:$0xff] %vm1606, %v1637
        %1648 = vst.msk [vmem:[%s1644 + $0x18] sm:$0xff] %vm1606, %v1639
        %1649 = vrot.lane.b32.xlu0 %v1602, 32
        %v1650 = vpop.permute.xlu0 %1649
        %1651 = vrot.lane.b32.xlu0 %v1603, 32
        %v1652 = vpop.permute.xlu0 %1651
        %1653 = vrot.lane.b32.xlu0 %v1604, 32
        %v1654 = vpop.permute.xlu0 %1653
        %1655 = vrot.lane.b32.xlu0 %v1605, 32
        %v1656 = vpop.permute.xlu0 %1655
        %s1661 = scalar_lea.vmem [#allocation4], 96
        %1662 = vst.msk [vmem:[%s1661] sm:$0xff] %vm1606, %v1650
        %1663 = vst.msk [vmem:[%s1661 + $0x8] sm:$0xff] %vm1606, %v1652
        %1664 = vst.msk [vmem:[%s1661 + $0x10] sm:$0xff] %vm1606, %v1654
        %1665 = vst.msk [vmem:[%s1661 + $0x18] sm:$0xff] %vm1606, %v1656
        %v1666 = vld [vmem:[#allocation4] sm:$0xff]
        %v1667 = vld [vmem:[#allocation4 + $0x8] sm:$0xff]
        %v1668 = vld [vmem:[#allocation4 + $0x10] sm:$0xff]
        %v1669 = vld [vmem:[#allocation4 + $0x18] sm:$0xff]
        %v1670 = vld [vmem:[#allocation4 + $0x20] sm:$0xff]
        %v1671 = vld [vmem:[#allocation4 + $0x28] sm:$0xff]
        %v1672 = vld [vmem:[#allocation4 + $0x30] sm:$0xff]
        %v1673 = vld [vmem:[#allocation4 + $0x38] sm:$0xff]
        %v1674 = vld [vmem:[#allocation4 + $0x40] sm:$0xff]
        %v1675 = vld [vmem:[#allocation4 + $0x48] sm:$0xff]
        %v1676 = vld [vmem:[#allocation4 + $0x50] sm:$0xff]
        %v1677 = vld [vmem:[#allocation4 + $0x58] sm:$0xff]
        %v1678 = vld [vmem:[#allocation4 + $0x60] sm:$0xff]
        %v1679 = vld [vmem:[#allocation4 + $0x68] sm:$0xff]
        %v1680 = vld [vmem:[#allocation4 + $0x70] sm:$0xff]
        %v1681 = vld [vmem:[#allocation4 + $0x78] sm:$0xff]
        %v1682 = vld [vmem:[#allocation2] sm:$0xff]
        %v1683 = vld [vmem:[#allocation2 + $0x8] sm:$0xff]
        %v1684 = vld [vmem:[#allocation2 + $0x10] sm:$0xff]
        %v1685 = vld [vmem:[#allocation2 + $0x18] sm:$0xff]
        %v1686 = vld [vmem:[#allocation2 + $0x20] sm:$0xff]
        %v1687 = vld [vmem:[#allocation2 + $0x28] sm:$0xff]
        %v1688 = vld [vmem:[#allocation2 + $0x30] sm:$0xff]
        %v1689 = vld [vmem:[#allocation2 + $0x38] sm:$0xff]
        %v1690 = vld [vmem:[#allocation2 + $0x40] sm:$0xff]
        %v1691 = vld [vmem:[#allocation2 + $0x48] sm:$0xff]
        %v1692 = vld [vmem:[#allocation2 + $0x50] sm:$0xff]
        %v1693 = vld [vmem:[#allocation2 + $0x58] sm:$0xff]
        %v1694 = vld [vmem:[#allocation2 + $0x60] sm:$0xff]
        %v1695 = vld [vmem:[#allocation2 + $0x68] sm:$0xff]
        %v1696 = vld [vmem:[#allocation2 + $0x70] sm:$0xff]
        %v1697 = vld [vmem:[#allocation2 + $0x78] sm:$0xff]
        %v1698 = vld [vmem:[#allocation2 + $0x80] sm:$0xff]
        %v1699 = vld [vmem:[#allocation2 + $0x88] sm:$0xff]
        %v1700 = vld [vmem:[#allocation2 + $0x90] sm:$0xff]
        %v1701 = vld [vmem:[#allocation2 + $0x98] sm:$0xff]
        %v1702 = vld [vmem:[#allocation2 + $0xa0] sm:$0xff]
        %v1703 = vld [vmem:[#allocation2 + $0xa8] sm:$0xff]
        %v1704 = vld [vmem:[#allocation2 + $0xb0] sm:$0xff]
        %v1705 = vld [vmem:[#allocation2 + $0xb8] sm:$0xff]
        %v1706 = vld [vmem:[#allocation2 + $0xc0] sm:$0xff]
        %v1707 = vld [vmem:[#allocation2 + $0xc8] sm:$0xff]
        %v1708 = vld [vmem:[#allocation2 + $0xd0] sm:$0xff]
        %v1709 = vld [vmem:[#allocation2 + $0xd8] sm:$0xff]
        %v1710 = vld [vmem:[#allocation2 + $0xe0] sm:$0xff]
        %v1711 = vld [vmem:[#allocation2 + $0xe8] sm:$0xff]
        %v1712 = vld [vmem:[#allocation2 + $0xf0] sm:$0xff]
        %v1713 = vld [vmem:[#allocation2 + $0xf8] sm:$0xff]
        %v1714 = vld [vmem:[#allocation3] sm:$0xff]
        %v1715 = vld [vmem:[#allocation3 + $0x8] sm:$0xff]
        %v1716 = vld [vmem:[#allocation3 + $0x10] sm:$0xff]
        %v1717 = vld [vmem:[#allocation3 + $0x18] sm:$0xff]
        %v1718 = vld [vmem:[#allocation3 + $0x20] sm:$0xff]
        %v1719 = vld [vmem:[#allocation3 + $0x28] sm:$0xff]
        %v1720 = vld [vmem:[#allocation3 + $0x30] sm:$0xff]
        %v1721 = vld [vmem:[#allocation3 + $0x38] sm:$0xff]
        %v1722 = vld [vmem:[#allocation3 + $0x40] sm:$0xff]
        %v1723 = vld [vmem:[#allocation3 + $0x48] sm:$0xff]
        %v1724 = vld [vmem:[#allocation3 + $0x50] sm:$0xff]
        %v1725 = vld [vmem:[#allocation3 + $0x58] sm:$0xff]
        %v1726 = vld [vmem:[#allocation3 + $0x60] sm:$0xff]
        %v1727 = vld [vmem:[#allocation3 + $0x68] sm:$0xff]
        %v1728 = vld [vmem:[#allocation3 + $0x70] sm:$0xff]
        %v1729 = vld [vmem:[#allocation3 + $0x78] sm:$0xff]
        %v1730 = vld [vmem:[#allocation3 + $0x80] sm:$0xff]
        %v1731 = vld [vmem:[#allocation3 + $0x88] sm:$0xff]
        %v1732 = vld [vmem:[#allocation3 + $0x90] sm:$0xff]
        %v1733 = vld [vmem:[#allocation3 + $0x98] sm:$0xff]
        %v1734 = vld [vmem:[#allocation3 + $0xa0] sm:$0xff]
        %v1735 = vld [vmem:[#allocation3 + $0xa8] sm:$0xff]
        %v1736 = vld [vmem:[#allocation3 + $0xb0] sm:$0xff]
        %v1737 = vld [vmem:[#allocation3 + $0xb8] sm:$0xff]
        %v1738 = vld [vmem:[#allocation3 + $0xc0] sm:$0xff]
        %v1739 = vld [vmem:[#allocation3 + $0xc8] sm:$0xff]
        %v1740 = vld [vmem:[#allocation3 + $0xd0] sm:$0xff]
        %v1741 = vld [vmem:[#allocation3 + $0xd8] sm:$0xff]
        %v1742 = vld [vmem:[#allocation3 + $0xe0] sm:$0xff]
        %v1743 = vld [vmem:[#allocation3 + $0xe8] sm:$0xff]
        %v1744 = vld [vmem:[#allocation3 + $0xf0] sm:$0xff]
        %v1745 = vld [vmem:[#allocation3 + $0xf8] sm:$0xff]
        %v1747 = vsel %vm1606, %v1666, 0
        %v1750 = vsel %vm1606, %v1667, 0
        %v1753 = vsel %vm1606, %v1668, 0
        %v1756 = vsel %vm1606, %v1669, 0
        %v1759 = vsel %vm1606, %v1682, 0
        %v1762 = vsel %vm1606, %v1683, 0
        %v1765 = vsel %vm1606, %v1684, 0
        %v1768 = vsel %vm1606, %v1685, 0
        %v1771 = vsel %vm1606, %v1686, 0
        %v1774 = vsel %vm1606, %v1687, 0
        %v1777 = vsel %vm1606, %v1688, 0
        %v1780 = vsel %vm1606, %v1689, 0
        %1782 = vmatprep.subr.bf16.mxu0 0
        %1783 = vmatpush1.bf16.xpose.msra.mxu0 %v1759
        %1784 = vmatprep.subr.bf16.mxu0 0
        %1785 = vmatpush1.bf16.xpose.msra.mxu0 %v1762
        %1786 = vmatprep.subr.bf16.mxu0 0
        %1787 = vmatpush1.bf16.xpose.msra.mxu0 %v1765
        %1788 = vmatprep.subr.bf16.mxu0 0
        %1789 = vmatpush1.bf16.xpose.msra.mxu0 %v1768
        %1790 = vmatprep.subr.bf16.mxu0 0
        %1791 = vmatpush1.bf16.xpose.msra.mxu0 %v1771
        %1792 = vmatprep.subr.bf16.mxu0 0
        %1793 = vmatpush1.bf16.xpose.msra.mxu0 %v1774
        %1794 = vmatprep.subr.bf16.mxu0 0
        %1795 = vmatpush1.bf16.xpose.msra.mxu0 %v1777
        %1796 = vmatprep.subr.bf16.mxu0 0
        %1797 = vmatpush1.bf16.xpose.msra.mxu0 %v1780
        %1798 = vmatprep.subr.bf16.mxu0 0
        %1799 = vmatpush1.bf16.xpose.msra.mxu0 0
        %1800 = vmatprep.subr.bf16.mxu0 0
        %1801 = vmatpush1.bf16.xpose.msra.mxu0 0
        %1802 = vmatprep.subr.bf16.mxu0 0
        %1803 = vmatpush1.bf16.xpose.msra.mxu0 0
        %1804 = vmatprep.subr.bf16.mxu0 0
        %1805 = vmatpush1.bf16.xpose.msra.mxu0 0
        %1806 = vmatprep.subr.bf16.mxu0 0
        %1807 = vmatpush1.bf16.xpose.msra.mxu0 0
        %1808 = vmatprep.subr.bf16.mxu0 0
        %1809 = vmatpush1.bf16.xpose.msra.mxu0 0
        %1810 = vmatprep.subr.bf16.mxu0 0
        %1811 = vmatpush1.bf16.xpose.msra.mxu0 0
        %1812 = vmatprep.subr.bf16.mxu0 0
        %1813 = vmatpush1.bf16.xpose.msra.mxu0 0
        %1814 = vmatprep.mubr.bf16.mxu0 0
        %1815 = vmatmul.mubr.bf16.gmra.mrb[0].mxu0 %v1747
        %v1816 = vpop.f32.mrb[0].mxu0
        %v1817 = vadd.f32 0.0, %v1816
        %v1818 = vpop.f32.mrb[0].mxu0
        %v1819 = vpop.f32.mrb[0].mxu0
        %v1820 = vadd.f32 0.0, %v1819
        %v1821 = vpop.f32.mrb[0].mxu0
        %1822 = vmatprep.mubr.bf16.mxu0 0
        %1823 = vmatmul.mubr.bf16.gmra.mrb[0].mxu0 %v1750
        %v1824 = vpop.f32.mrb[0].mxu0
        %v1825 = vadd.f32 0.0, %v1824
        %v1826 = vpop.f32.mrb[0].mxu0
        %v1827 = vpop.f32.mrb[0].mxu0
        %v1828 = vadd.f32 0.0, %v1827
        %v1829 = vpop.f32.mrb[0].mxu0
        %1830 = vmatprep.mubr.bf16.mxu0 0
        %1831 = vmatmul.mubr.bf16.gmra.mrb[0].mxu0 %v1753
        %v1832 = vpop.f32.mrb[0].mxu0
        %v1833 = vadd.f32 0.0, %v1832
        %v1834 = vpop.f32.mrb[0].mxu0
        %v1835 = vpop.f32.mrb[0].mxu0
        %v1836 = vadd.f32 0.0, %v1835
        %v1837 = vpop.f32.mrb[0].mxu0
        %1838 = vmatprep.mubr.bf16.mxu0 0
        %1839 = vmatmul.mubr.bf16.gmra.mrb[0].mxu0 %v1756
        %v1840 = vpop.f32.mrb[0].mxu0
        %v1841 = vadd.f32 0.0, %v1840
        %v1842 = vpop.f32.mrb[0].mxu0
        %v1843 = vpop.f32.mrb[0].mxu0
        %v1844 = vadd.f32 0.0, %v1843
        %v1845 = vpop.f32.mrb[0].mxu0
        %1846 = vdwg.mxu0
        %v1848 = vsel %vm1606, %v1670, 0
        %v1851 = vsel %vm1606, %v1671, 0
        %v1854 = vsel %vm1606, %v1672, 0
        %v1857 = vsel %vm1606, %v1673, 0
        %v1860 = vsel %vm1606, %v1690, 0
        %v1863 = vsel %vm1606, %v1691, 0
        %v1866 = vsel %vm1606, %v1692, 0
        %v1869 = vsel %vm1606, %v1693, 0
        %v1872 = vsel %vm1606, %v1694, 0
        %v1875 = vsel %vm1606, %v1695, 0
        %v1878 = vsel %vm1606, %v1696, 0
        %v1881 = vsel %vm1606, %v1697, 0
        %1883 = vmatprep.subr.bf16.mxu0 0
        %1884 = vmatpush1.bf16.xpose.msra.mxu0 %v1860
        %1885 = vmatprep.subr.bf16.mxu0 0
        %1886 = vmatpush1.bf16.xpose.msra.mxu0 %v1863
        %1887 = vmatprep.subr.bf16.mxu0 0
        %1888 = vmatpush1.bf16.xpose.msra.mxu0 %v1866
        %1889 = vmatprep.subr.bf16.mxu0 0
        %1890 = vmatpush1.bf16.xpose.msra.mxu0 %v1869
        %1891 = vmatprep.subr.bf16.mxu0 0
        %1892 = vmatpush1.bf16.xpose.msra.mxu0 %v1872
        %1893 = vmatprep.subr.bf16.mxu0 0
        %1894 = vmatpush1.bf16.xpose.msra.mxu0 %v1875
        %1895 = vmatprep.subr.bf16.mxu0 0
        %1896 = vmatpush1.bf16.xpose.msra.mxu0 %v1878
        %1897 = vmatprep.subr.bf16.mxu0 0
        %1898 = vmatpush1.bf16.xpose.msra.mxu0 %v1881
        %1899 = vmatprep.subr.bf16.mxu0 0
        %1900 = vmatpush1.bf16.xpose.msra.mxu0 0
        %1901 = vmatprep.subr.bf16.mxu0 0
        %1902 = vmatpush1.bf16.xpose.msra.mxu0 0
        %1903 = vmatprep.subr.bf16.mxu0 0
        %1904 = vmatpush1.bf16.xpose.msra.mxu0 0
        %1905 = vmatprep.subr.bf16.mxu0 0
        %1906 = vmatpush1.bf16.xpose.msra.mxu0 0
        %1907 = vmatprep.subr.bf16.mxu0 0
        %1908 = vmatpush1.bf16.xpose.msra.mxu0 0
        %1909 = vmatprep.subr.bf16.mxu0 0
        %1910 = vmatpush1.bf16.xpose.msra.mxu0 0
        %1911 = vmatprep.subr.bf16.mxu0 0
        %1912 = vmatpush1.bf16.xpose.msra.mxu0 0
        %1913 = vmatprep.subr.bf16.mxu0 0
        %1914 = vmatpush1.bf16.xpose.msra.mxu0 0
        %1915 = vmatprep.mubr.bf16.mxu0 0
        %1916 = vmatmul.mubr.bf16.gmra.mrb[0].mxu0 %v1848
        %v1917 = vpop.f32.mrb[0].mxu0
        %v1918 = vadd.f32 0.0, %v1917
        %v1919 = vpop.f32.mrb[0].mxu0
        %v1920 = vpop.f32.mrb[0].mxu0
        %v1921 = vadd.f32 0.0, %v1920
        %v1922 = vpop.f32.mrb[0].mxu0
        %1923 = vmatprep.mubr.bf16.mxu0 0
        %1924 = vmatmul.mubr.bf16.gmra.mrb[0].mxu0 %v1851
        %v1925 = vpop.f32.mrb[0].mxu0
        %v1926 = vadd.f32 0.0, %v1925
        %v1927 = vpop.f32.mrb[0].mxu0
        %v1928 = vpop.f32.mrb[0].mxu0
        %v1929 = vadd.f32 0.0, %v1928
        %v1930 = vpop.f32.mrb[0].mxu0
        %1931 = vmatprep.mubr.bf16.mxu0 0
        %1932 = vmatmul.mubr.bf16.gmra.mrb[0].mxu0 %v1854
        %v1933 = vpop.f32.mrb[0].mxu0
        %v1934 = vadd.f32 0.0, %v1933
        %v1935 = vpop.f32.mrb[0].mxu0
        %v1936 = vpop.f32.mrb[0].mxu0
        %v1937 = vadd.f32 0.0, %v1936
        %v1938 = vpop.f32.mrb[0].mxu0
        %1939 = vmatprep.mubr.bf16.mxu0 0
        %1940 = vmatmul.mubr.bf16.gmra.mrb[0].mxu0 %v1857
        %v1941 = vpop.f32.mrb[0].mxu0
        %v1942 = vadd.f32 0.0, %v1941
        %v1943 = vpop.f32.mrb[0].mxu0
        %v1944 = vpop.f32.mrb[0].mxu0
        %v1945 = vadd.f32 0.0, %v1944
        %v1946 = vpop.f32.mrb[0].mxu0
        %1947 = vdwg.mxu0
        %v1949 = vsel %vm1606, %v1674, 0
        %v1952 = vsel %vm1606, %v1675, 0
        %v1955 = vsel %vm1606, %v1676, 0
        %v1958 = vsel %vm1606, %v1677, 0
        %v1961 = vsel %vm1606, %v1698, 0
        %v1964 = vsel %vm1606, %v1699, 0
        %v1967 = vsel %vm1606, %v1700, 0
        %v1970 = vsel %vm1606, %v1701, 0
        %v1973 = vsel %vm1606, %v1702, 0
        %v1976 = vsel %vm1606, %v1703, 0
        %v1979 = vsel %vm1606, %v1704, 0
        %v1982 = vsel %vm1606, %v1705, 0
        %1984 = vmatprep.subr.bf16.mxu0 0
        %1985 = vmatpush1.bf16.xpose.msra.mxu0 %v1961
        %1986 = vmatprep.subr.bf16.mxu0 0
        %1987 = vmatpush1.bf16.xpose.msra.mxu0 %v1964
        %1988 = vmatprep.subr.bf16.mxu0 0
        %1989 = vmatpush1.bf16.xpose.msra.mxu0 %v1967
        %1990 = vmatprep.subr.bf16.mxu0 0
        %1991 = vmatpush1.bf16.xpose.msra.mxu0 %v1970
        %1992 = vmatprep.subr.bf16.mxu0 0
        %1993 = vmatpush1.bf16.xpose.msra.mxu0 %v1973
        %1994 = vmatprep.subr.bf16.mxu0 0
        %1995 = vmatpush1.bf16.xpose.msra.mxu0 %v1976
        %1996 = vmatprep.subr.bf16.mxu0 0
        %1997 = vmatpush1.bf16.xpose.msra.mxu0 %v1979
        %1998 = vmatprep.subr.bf16.mxu0 0
        %1999 = vmatpush1.bf16.xpose.msra.mxu0 %v1982
        %2000 = vmatprep.subr.bf16.mxu0 0
        %2001 = vmatpush1.bf16.xpose.msra.mxu0 0
        %2002 = vmatprep.subr.bf16.mxu0 0
        %2003 = vmatpush1.bf16.xpose.msra.mxu0 0
        %2004 = vmatprep.subr.bf16.mxu0 0
        %2005 = vmatpush1.bf16.xpose.msra.mxu0 0
        %2006 = vmatprep.subr.bf16.mxu0 0
        %2007 = vmatpush1.bf16.xpose.msra.mxu0 0
        %2008 = vmatprep.subr.bf16.mxu0 0
        %2009 = vmatpush1.bf16.xpose.msra.mxu0 0
        %2010 = vmatprep.subr.bf16.mxu0 0
        %2011 = vmatpush1.bf16.xpose.msra.mxu0 0
        %2012 = vmatprep.subr.bf16.mxu0 0
        %2013 = vmatpush1.bf16.xpose.msra.mxu0 0
        %2014 = vmatprep.subr.bf16.mxu0 0
        %2015 = vmatpush1.bf16.xpose.msra.mxu0 0
        %2016 = vmatprep.mubr.bf16.mxu0 0
        %2017 = vmatmul.mubr.bf16.gmra.mrb[0].mxu0 %v1949
        %v2018 = vpop.f32.mrb[0].mxu0
        %v2019 = vadd.f32 0.0, %v2018
        %v2020 = vpop.f32.mrb[0].mxu0
        %v2021 = vpop.f32.mrb[0].mxu0
        %v2022 = vadd.f32 0.0, %v2021
        %v2023 = vpop.f32.mrb[0].mxu0
        %2024 = vmatprep.mubr.bf16.mxu0 0
        %2025 = vmatmul.mubr.bf16.gmra.mrb[0].mxu0 %v1952
        %v2026 = vpop.f32.mrb[0].mxu0
        %v2027 = vadd.f32 0.0, %v2026
        %v2028 = vpop.f32.mrb[0].mxu0
        %v2029 = vpop.f32.mrb[0].mxu0
        %v2030 = vadd.f32 0.0, %v2029
        %v2031 = vpop.f32.mrb[0].mxu0
        %2032 = vmatprep.mubr.bf16.mxu0 0
        %2033 = vmatmul.mubr.bf16.gmra.mrb[0].mxu0 %v1955
        %v2034 = vpop.f32.mrb[0].mxu0
        %v2035 = vadd.f32 0.0, %v2034
        %v2036 = vpop.f32.mrb[0].mxu0
        %v2037 = vpop.f32.mrb[0].mxu0
        %v2038 = vadd.f32 0.0, %v2037
        %v2039 = vpop.f32.mrb[0].mxu0
        %2040 = vmatprep.mubr.bf16.mxu0 0
        %2041 = vmatmul.mubr.bf16.gmra.mrb[0].mxu0 %v1958
        %v2042 = vpop.f32.mrb[0].mxu0
        %v2043 = vadd.f32 0.0, %v2042
        %v2044 = vpop.f32.mrb[0].mxu0
        %v2045 = vpop.f32.mrb[0].mxu0
        %v2046 = vadd.f32 0.0, %v2045
        %v2047 = vpop.f32.mrb[0].mxu0
        %2048 = vdwg.mxu0
        %v2050 = vsel %vm1606, %v1678, 0
        %v2053 = vsel %vm1606, %v1679, 0
        %v2056 = vsel %vm1606, %v1680, 0
        %v2059 = vsel %vm1606, %v1681, 0
        %v2062 = vsel %vm1606, %v1706, 0
        %v2065 = vsel %vm1606, %v1707, 0
        %v2068 = vsel %vm1606, %v1708, 0
        %v2071 = vsel %vm1606, %v1709, 0
        %v2074 = vsel %vm1606, %v1710, 0
        %v2077 = vsel %vm1606, %v1711, 0
        %v2080 = vsel %vm1606, %v1712, 0
        %v2083 = vsel %vm1606, %v1713, 0
        %2085 = vmatprep.subr.bf16.mxu0 0
        %2086 = vmatpush1.bf16.xpose.msra.mxu0 %v2062
        %2087 = vmatprep.subr.bf16.mxu0 0
        %2088 = vmatpush1.bf16.xpose.msra.mxu0 %v2065
        %2089 = vmatprep.subr.bf16.mxu0 0
        %2090 = vmatpush1.bf16.xpose.msra.mxu0 %v2068
        %2091 = vmatprep.subr.bf16.mxu0 0
        %2092 = vmatpush1.bf16.xpose.msra.mxu0 %v2071
        %2093 = vmatprep.subr.bf16.mxu0 0
        %2094 = vmatpush1.bf16.xpose.msra.mxu0 %v2074
        %2095 = vmatprep.subr.bf16.mxu0 0
        %2096 = vmatpush1.bf16.xpose.msra.mxu0 %v2077
        %2097 = vmatprep.subr.bf16.mxu0 0
        %2098 = vmatpush1.bf16.xpose.msra.mxu0 %v2080
        %2099 = vmatprep.subr.bf16.mxu0 0
        %2100 = vmatpush1.bf16.xpose.msra.mxu0 %v2083
        %2101 = vmatprep.subr.bf16.mxu0 0
        %2102 = vmatpush1.bf16.xpose.msra.mxu0 0
        %2103 = vmatprep.subr.bf16.mxu0 0
        %2104 = vmatpush1.bf16.xpose.msra.mxu0 0
        %2105 = vmatprep.subr.bf16.mxu0 0
        %2106 = vmatpush1.bf16.xpose.msra.mxu0 0
        %2107 = vmatprep.subr.bf16.mxu0 0
        %2108 = vmatpush1.bf16.xpose.msra.mxu0 0
        %2109 = vmatprep.subr.bf16.mxu0 0
        %2110 = vmatpush1.bf16.xpose.msra.mxu0 0
        %2111 = vmatprep.subr.bf16.mxu0 0
        %2112 = vmatpush1.bf16.xpose.msra.mxu0 0
        %2113 = vmatprep.subr.bf16.mxu0 0
        %2114 = vmatpush1.bf16.xpose.msra.mxu0 0
        %2115 = vmatprep.subr.bf16.mxu0 0
        %2116 = vmatpush1.bf16.xpose.msra.mxu0 0
        %2117 = vmatprep.mubr.bf16.mxu0 0
        %2118 = vmatmul.mubr.bf16.gmra.mrb[0].mxu0 %v2050
        %v2119 = vpop.f32.mrb[0].mxu0
        %v2120 = vadd.f32 0.0, %v2119
        %v2121 = vpop.f32.mrb[0].mxu0
        %v2122 = vpop.f32.mrb[0].mxu0
        %v2123 = vadd.f32 0.0, %v2122
        %v2124 = vpop.f32.mrb[0].mxu0
        %2125 = vmatprep.mubr.bf16.mxu0 0
        %2126 = vmatmul.mubr.bf16.gmra.mrb[0].mxu0 %v2053
        %v2127 = vpop.f32.mrb[0].mxu0
        %v2128 = vadd.f32 0.0, %v2127
        %v2129 = vpop.f32.mrb[0].mxu0
        %v2130 = vpop.f32.mrb[0].mxu0
        %v2131 = vadd.f32 0.0, %v2130
        %v2132 = vpop.f32.mrb[0].mxu0
        %2133 = vmatprep.mubr.bf16.mxu0 0
        %2134 = vmatmul.mubr.bf16.gmra.mrb[0].mxu0 %v2056
        %v2135 = vpop.f32.mrb[0].mxu0
        %v2136 = vadd.f32 0.0, %v2135
        %v2137 = vpop.f32.mrb[0].mxu0
        %v2138 = vpop.f32.mrb[0].mxu0
        %v2139 = vadd.f32 0.0, %v2138
        %v2140 = vpop.f32.mrb[0].mxu0
        %2141 = vmatprep.mubr.bf16.mxu0 0
        %2142 = vmatmul.mubr.bf16.gmra.mrb[0].mxu0 %v2059
        %v2143 = vpop.f32.mrb[0].mxu0
        %v2144 = vadd.f32 0.0, %v2143
        %v2145 = vpop.f32.mrb[0].mxu0
        %v2146 = vpop.f32.mrb[0].mxu0
        %v2147 = vadd.f32 0.0, %v2146
        %v2148 = vpop.f32.mrb[0].mxu0
        %2149 = vdwg.mxu0
        %2150 = vmax.xlane.f32.xlu0 %v1817
        %v2151 = vpop.xlane.xlu0 %2150
        %2152 = vmax.xlane.f32.xlu0 %v1820
        %v2153 = vpop.xlane.xlu0 %2152
        %2154 = vmax.xlane.f32.xlu0 %v1825
        %v2155 = vpop.xlane.xlu0 %2154
        %2156 = vmax.xlane.f32.xlu0 %v1828
        %v2157 = vpop.xlane.xlu0 %2156
        %2158 = vmax.xlane.f32.xlu0 %v1833
        %v2159 = vpop.xlane.xlu0 %2158
        %2160 = vmax.xlane.f32.xlu0 %v1836
        %v2161 = vpop.xlane.xlu0 %2160
        %2162 = vmax.xlane.f32.xlu0 %v1841
        %v2163 = vpop.xlane.xlu0 %2162
        %2164 = vmax.xlane.f32.xlu0 %v1844
        %v2165 = vpop.xlane.xlu0 %2164
        %2166 = vmax.xlane.f32.xlu0 %v1918
        %v2167 = vpop.xlane.xlu0 %2166
        %2168 = vmax.xlane.f32.xlu0 %v1921
        %v2169 = vpop.xlane.xlu0 %2168
        %2170 = vmax.xlane.f32.xlu0 %v1926
        %v2171 = vpop.xlane.xlu0 %2170
        %2172 = vmax.xlane.f32.xlu0 %v1929
        %v2173 = vpop.xlane.xlu0 %2172
        %2174 = vmax.xlane.f32.xlu0 %v1934
        %v2175 = vpop.xlane.xlu0 %2174
        %2176 = vmax.xlane.f32.xlu0 %v1937
        %v2177 = vpop.xlane.xlu0 %2176
        %2178 = vmax.xlane.f32.xlu0 %v1942
        %v2179 = vpop.xlane.xlu0 %2178
        %2180 = vmax.xlane.f32.xlu0 %v1945
        %v2181 = vpop.xlane.xlu0 %2180
        %2182 = vmax.xlane.f32.xlu0 %v2019
        %v2183 = vpop.xlane.xlu0 %2182
        %2184 = vmax.xlane.f32.xlu0 %v2022
        %v2185 = vpop.xlane.xlu0 %2184
        %2186 = vmax.xlane.f32.xlu0 %v2027
        %v2187 = vpop.xlane.xlu0 %2186
        %2188 = vmax.xlane.f32.xlu0 %v2030
        %v2189 = vpop.xlane.xlu0 %2188
        %2190 = vmax.xlane.f32.xlu0 %v2035
        %v2191 = vpop.xlane.xlu0 %2190
        %2192 = vmax.xlane.f32.xlu0 %v2038
        %v2193 = vpop.xlane.xlu0 %2192
        %2194 = vmax.xlane.f32.xlu0 %v2043
        %v2195 = vpop.xlane.xlu0 %2194
        %2196 = vmax.xlane.f32.xlu0 %v2046
        %v2197 = vpop.xlane.xlu0 %2196
        %2198 = vmax.xlane.f32.xlu0 %v2120
        %v2199 = vpop.xlane.xlu0 %2198
        %2200 = vmax.xlane.f32.xlu0 %v2123
        %v2201 = vpop.xlane.xlu0 %2200
        %2202 = vmax.xlane.f32.xlu0 %v2128
        %v2203 = vpop.xlane.xlu0 %2202
        %2204 = vmax.xlane.f32.xlu0 %v2131
        %v2205 = vpop.xlane.xlu0 %2204
        %2206 = vmax.xlane.f32.xlu0 %v2136
        %v2207 = vpop.xlane.xlu0 %2206
        %2208 = vmax.xlane.f32.xlu0 %v2139
        %v2209 = vpop.xlane.xlu0 %2208
        %2210 = vmax.xlane.f32.xlu0 %v2144
        %v2211 = vpop.xlane.xlu0 %2210
        %2212 = vmax.xlane.f32.xlu0 %v2147
        %v2213 = vpop.xlane.xlu0 %2212
        %v2214 = vsub.f32 %v1817, %v2151
        %v2215 = vsub.f32 %v1820, %v2153
        %v2216 = vsub.f32 %v1825, %v2155
        %v2217 = vsub.f32 %v1828, %v2157
        %v2218 = vsub.f32 %v1833, %v2159
        %v2219 = vsub.f32 %v1836, %v2161
        %v2220 = vsub.f32 %v1841, %v2163
        %v2221 = vsub.f32 %v1844, %v2165
        %v2222 = vsub.f32 %v1918, %v2167
        %v2223 = vsub.f32 %v1921, %v2169
        %v2224 = vsub.f32 %v1926, %v2171
        %v2225 = vsub.f32 %v1929, %v2173
        %v2226 = vsub.f32 %v1934, %v2175
        %v2227 = vsub.f32 %v1937, %v2177
        %v2228 = vsub.f32 %v1942, %v2179
        %v2229 = vsub.f32 %v1945, %v2181
        %v2230 = vsub.f32 %v2019, %v2183
        %v2231 = vsub.f32 %v2022, %v2185
        %v2232 = vsub.f32 %v2027, %v2187
        %v2233 = vsub.f32 %v2030, %v2189
        %v2234 = vsub.f32 %v2035, %v2191
        %v2235 = vsub.f32 %v2038, %v2193
        %v2236 = vsub.f32 %v2043, %v2195
        %v2237 = vsub.f32 %v2046, %v2197
        %v2238 = vsub.f32 %v2120, %v2199
        %v2239 = vsub.f32 %v2123, %v2201
        %v2240 = vsub.f32 %v2128, %v2203
        %v2241 = vsub.f32 %v2131, %v2205
        %v2242 = vsub.f32 %v2136, %v2207
        %v2243 = vsub.f32 %v2139, %v2209
        %v2244 = vsub.f32 %v2144, %v2211
        %v2245 = vsub.f32 %v2147, %v2213
        %v2246 = vmul.f32 %v2214, 1.442695
        %v2247 = vpow.pop %v2246
        %v2248 = vmul.f32 %v2215, 1.442695
        %v2249 = vpow.pop %v2248
        %v2250 = vmul.f32 %v2216, 1.442695
        %v2251 = vpow.pop %v2250
        %v2252 = vmul.f32 %v2217, 1.442695
        %v2253 = vpow.pop %v2252
        %v2254 = vmul.f32 %v2218, 1.442695
        %v2255 = vpow.pop %v2254
        %v2256 = vmul.f32 %v2219, 1.442695
        %v2257 = vpow.pop %v2256
        %v2258 = vmul.f32 %v2220, 1.442695
        %v2259 = vpow.pop %v2258
        %v2260 = vmul.f32 %v2221, 1.442695
        %v2261 = vpow.pop %v2260
        %v2262 = vmul.f32 %v2222, 1.442695
        %v2263 = vpow.pop %v2262
        %v2264 = vmul.f32 %v2223, 1.442695
        %v2265 = vpow.pop %v2264
        %v2266 = vmul.f32 %v2224, 1.442695
        %v2267 = vpow.pop %v2266
        %v2268 = vmul.f32 %v2225, 1.442695
        %v2269 = vpow.pop %v2268
        %v2270 = vmul.f32 %v2226, 1.442695
        %v2271 = vpow.pop %v2270
        %v2272 = vmul.f32 %v2227, 1.442695
        %v2273 = vpow.pop %v2272
        %v2274 = vmul.f32 %v2228, 1.442695
        %v2275 = vpow.pop %v2274
        %v2276 = vmul.f32 %v2229, 1.442695
        %v2277 = vpow.pop %v2276
        %v2278 = vmul.f32 %v2230, 1.442695
        %v2279 = vpow.pop %v2278
        %v2280 = vmul.f32 %v2231, 1.442695
        %v2281 = vpow.pop %v2280
        %v2282 = vmul.f32 %v2232, 1.442695
        %v2283 = vpow.pop %v2282
        %v2284 = vmul.f32 %v2233, 1.442695
        %v2285 = vpow.pop %v2284
        %v2286 = vmul.f32 %v2234, 1.442695
        %v2287 = vpow.pop %v2286
        %v2288 = vmul.f32 %v2235, 1.442695
        %v2289 = vpow.pop %v2288
        %v2290 = vmul.f32 %v2236, 1.442695
        %v2291 = vpow.pop %v2290
        %v2292 = vmul.f32 %v2237, 1.442695
        %v2293 = vpow.pop %v2292
        %v2294 = vmul.f32 %v2238, 1.442695
        %v2295 = vpow.pop %v2294
        %v2296 = vmul.f32 %v2239, 1.442695
        %v2297 = vpow.pop %v2296
        %v2298 = vmul.f32 %v2240, 1.442695
        %v2299 = vpow.pop %v2298
        %v2300 = vmul.f32 %v2241, 1.442695
        %v2301 = vpow.pop %v2300
        %v2302 = vmul.f32 %v2242, 1.442695
        %v2303 = vpow.pop %v2302
        %v2304 = vmul.f32 %v2243, 1.442695
        %v2305 = vpow.pop %v2304
        %v2306 = vmul.f32 %v2244, 1.442695
        %v2307 = vpow.pop %v2306
        %v2308 = vmul.f32 %v2245, 1.442695
        %v2309 = vpow.pop %v2308
        %2310 = vadd.xlane.f32.xlu0 %v2247
        %v2311 = vpop.xlane.xlu0 %2310
        %2312 = vadd.xlane.f32.xlu0 %v2249
        %v2313 = vpop.xlane.xlu0 %2312
        %2314 = vadd.xlane.f32.xlu0 %v2251
        %v2315 = vpop.xlane.xlu0 %2314
        %2316 = vadd.xlane.f32.xlu0 %v2253
        %v2317 = vpop.xlane.xlu0 %2316
        %2318 = vadd.xlane.f32.xlu0 %v2255
        %v2319 = vpop.xlane.xlu0 %2318
        %2320 = vadd.xlane.f32.xlu0 %v2257
        %v2321 = vpop.xlane.xlu0 %2320
        %2322 = vadd.xlane.f32.xlu0 %v2259
        %v2323 = vpop.xlane.xlu0 %2322
        %2324 = vadd.xlane.f32.xlu0 %v2261
        %v2325 = vpop.xlane.xlu0 %2324
        %2326 = vadd.xlane.f32.xlu0 %v2263
        %v2327 = vpop.xlane.xlu0 %2326
        %2328 = vadd.xlane.f32.xlu0 %v2265
        %v2329 = vpop.xlane.xlu0 %2328
        %2330 = vadd.xlane.f32.xlu0 %v2267
        %v2331 = vpop.xlane.xlu0 %2330
        %2332 = vadd.xlane.f32.xlu0 %v2269
        %v2333 = vpop.xlane.xlu0 %2332
        %2334 = vadd.xlane.f32.xlu0 %v2271
        %v2335 = vpop.xlane.xlu0 %2334
        %2336 = vadd.xlane.f32.xlu0 %v2273
        %v2337 = vpop.xlane.xlu0 %2336
        %2338 = vadd.xlane.f32.xlu0 %v2275
        %v2339 = vpop.xlane.xlu0 %2338
        %2340 = vadd.xlane.f32.xlu0 %v2277
        %v2341 = vpop.xlane.xlu0 %2340
        %2342 = vadd.xlane.f32.xlu0 %v2279
        %v2343 = vpop.xlane.xlu0 %2342
        %2344 = vadd.xlane.f32.xlu0 %v2281
        %v2345 = vpop.xlane.xlu0 %2344
        %2346 = vadd.xlane.f32.xlu0 %v2283
        %v2347 = vpop.xlane.xlu0 %2346
        %2348 = vadd.xlane.f32.xlu0 %v2285
        %v2349 = vpop.xlane.xlu0 %2348
        %2350 = vadd.xlane.f32.xlu0 %v2287
        %v2351 = vpop.xlane.xlu0 %2350
        %2352 = vadd.xlane.f32.xlu0 %v2289
        %v2353 = vpop.xlane.xlu0 %2352
        %2354 = vadd.xlane.f32.xlu0 %v2291
        %v2355 = vpop.xlane.xlu0 %2354
        %2356 = vadd.xlane.f32.xlu0 %v2293
        %v2357 = vpop.xlane.xlu0 %2356
        %2358 = vadd.xlane.f32.xlu0 %v2295
        %v2359 = vpop.xlane.xlu0 %2358
        %2360 = vadd.xlane.f32.xlu0 %v2297
        %v2361 = vpop.xlane.xlu0 %2360
        %2362 = vadd.xlane.f32.xlu0 %v2299
        %v2363 = vpop.xlane.xlu0 %2362
        %2364 = vadd.xlane.f32.xlu0 %v2301
        %v2365 = vpop.xlane.xlu0 %2364
        %2366 = vadd.xlane.f32.xlu0 %v2303
        %v2367 = vpop.xlane.xlu0 %2366
        %2368 = vadd.xlane.f32.xlu0 %v2305
        %v2369 = vpop.xlane.xlu0 %2368
        %2370 = vadd.xlane.f32.xlu0 %v2307
        %v2371 = vpop.xlane.xlu0 %2370
        %2372 = vadd.xlane.f32.xlu0 %v2309
        %v2373 = vpop.xlane.xlu0 %2372
        %v2374 = vrcp.pop %v2311
        %v2375 = vrcp.pop %v2313
        %v2376 = vrcp.pop %v2315
        %v2377 = vrcp.pop %v2317
        %v2378 = vrcp.pop %v2319
        %v2379 = vrcp.pop %v2321
        %v2380 = vrcp.pop %v2323
        %v2381 = vrcp.pop %v2325
        %v2382 = vrcp.pop %v2327
        %v2383 = vrcp.pop %v2329
        %v2384 = vrcp.pop %v2331
        %v2385 = vrcp.pop %v2333
        %v2386 = vrcp.pop %v2335
        %v2387 = vrcp.pop %v2337
        %v2388 = vrcp.pop %v2339
        %v2389 = vrcp.pop %v2341
        %v2390 = vrcp.pop %v2343
        %v2391 = vrcp.pop %v2345
        %v2392 = vrcp.pop %v2347
        %v2393 = vrcp.pop %v2349
        %v2394 = vrcp.pop %v2351
        %v2395 = vrcp.pop %v2353
        %v2396 = vrcp.pop %v2355
        %v2397 = vrcp.pop %v2357
        %v2398 = vrcp.pop %v2359
        %v2399 = vrcp.pop %v2361
        %v2400 = vrcp.pop %v2363
        %v2401 = vrcp.pop %v2365
        %v2402 = vrcp.pop %v2367
        %v2403 = vrcp.pop %v2369
        %v2404 = vrcp.pop %v2371
        %v2405 = vrcp.pop %v2373
        %v2406 = vmul.f32 %v2247, %v2374
        %v2407 = vmul.f32 %v2249, %v2375
        %v2408 = vmul.f32 %v2251, %v2376
        %v2409 = vmul.f32 %v2253, %v2377
        %v2410 = vmul.f32 %v2255, %v2378
        %v2411 = vmul.f32 %v2257, %v2379
        %v2412 = vmul.f32 %v2259, %v2380
        %v2413 = vmul.f32 %v2261, %v2381
        %v2414 = vmul.f32 %v2263, %v2382
        %v2415 = vmul.f32 %v2265, %v2383
        %v2416 = vmul.f32 %v2267, %v2384
        %v2417 = vmul.f32 %v2269, %v2385
        %v2418 = vmul.f32 %v2271, %v2386
        %v2419 = vmul.f32 %v2273, %v2387
        %v2420 = vmul.f32 %v2275, %v2388
        %v2421 = vmul.f32 %v2277, %v2389
        %v2422 = vmul.f32 %v2279, %v2390
        %v2423 = vmul.f32 %v2281, %v2391
        %v2424 = vmul.f32 %v2283, %v2392
        %v2425 = vmul.f32 %v2285, %v2393
        %v2426 = vmul.f32 %v2287, %v2394
        %v2427 = vmul.f32 %v2289, %v2395
        %v2428 = vmul.f32 %v2291, %v2396
        %v2429 = vmul.f32 %v2293, %v2397
        %v2430 = vmul.f32 %v2295, %v2398
        %v2431 = vmul.f32 %v2297, %v2399
        %v2432 = vmul.f32 %v2299, %v2400
        %v2433 = vmul.f32 %v2301, %v2401
        %v2434 = vmul.f32 %v2303, %v2402
        %v2435 = vmul.f32 %v2305, %v2403
        %v2436 = vmul.f32 %v2307, %v2404
        %v2437 = vmul.f32 %v2309, %v2405
        %v2438 = vpack.c.bf16 %v2407, %v2406
        %v2439 = vpack.c.bf16 %v2409, %v2408
        %v2440 = vpack.c.bf16 %v2411, %v2410
        %v2441 = vpack.c.bf16 %v2413, %v2412
        %v2442 = vpack.c.bf16 %v2415, %v2414
        %v2443 = vpack.c.bf16 %v2417, %v2416
        %v2444 = vpack.c.bf16 %v2419, %v2418
        %v2445 = vpack.c.bf16 %v2421, %v2420
        %v2446 = vpack.c.bf16 %v2423, %v2422
        %v2447 = vpack.c.bf16 %v2425, %v2424
        %v2448 = vpack.c.bf16 %v2427, %v2426
        %v2449 = vpack.c.bf16 %v2429, %v2428
        %v2450 = vpack.c.bf16 %v2431, %v2430
        %v2451 = vpack.c.bf16 %v2433, %v2432
        %v2452 = vpack.c.bf16 %v2435, %v2434
        %v2453 = vpack.c.bf16 %v2437, %v2436
        %2454 = vmatprep.subr.bf16.mxu0 0
        %2455 = vmatpush1.bf16.msra.mxu0 %v1714
        %2456 = vmatprep.subr.bf16.mxu0 0
        %2457 = vmatpush1.bf16.msra.mxu0 %v1715
        %2458 = vmatprep.subr.bf16.mxu0 0
        %2459 = vmatpush1.bf16.msra.mxu0 %v1716
        %2460 = vmatprep.subr.bf16.mxu0 0
        %2461 = vmatpush1.bf16.msra.mxu0 %v1717
        %2462 = vmatprep.subr.bf16.mxu0 0
        %2463 = vmatpush1.bf16.msra.mxu0 %v1718
        %2464 = vmatprep.subr.bf16.mxu0 0
        %2465 = vmatpush1.bf16.msra.mxu0 %v1719
        %2466 = vmatprep.subr.bf16.mxu0 0
        %2467 = vmatpush1.bf16.msra.mxu0 %v1720
        %2468 = vmatprep.subr.bf16.mxu0 0
        %2469 = vmatpush1.bf16.msra.mxu0 %v1721
        %2470 = vmatprep.subr.bf16.mxu0 0
        %2471 = vmatpush1.bf16.msra.mxu0 0
        %2472 = vmatprep.subr.bf16.mxu0 0
        %2473 = vmatpush1.bf16.msra.mxu0 0
        %2474 = vmatprep.subr.bf16.mxu0 0
        %2475 = vmatpush1.bf16.msra.mxu0 0
        %2476 = vmatprep.subr.bf16.mxu0 0
        %2477 = vmatpush1.bf16.msra.mxu0 0
        %2478 = vmatprep.subr.bf16.mxu0 0
        %2479 = vmatpush1.bf16.msra.mxu0 0
        %2480 = vmatprep.subr.bf16.mxu0 0
        %2481 = vmatpush1.bf16.msra.mxu0 0
        %2482 = vmatprep.subr.bf16.mxu0 0
        %2483 = vmatpush1.bf16.msra.mxu0 0
        %2484 = vmatprep.subr.bf16.mxu0 0
        %2485 = vmatpush1.bf16.msra.mxu0 0
        %2486 = vmatprep.mubr.bf16.mxu0 0
        %2487 = vmatmul.mubr.bf16.gmra.mrb[0].mxu0 %v2438
        %v2488 = vpop.f32.mrb[0].mxu0
        %v2489 = vadd.f32 0.0, %v2488
        %v2490 = vpop.f32.mrb[0].mxu0
        %v2491 = vpop.f32.mrb[0].mxu0
        %v2492 = vadd.f32 0.0, %v2491
        %v2493 = vpop.f32.mrb[0].mxu0
        %2494 = vmatprep.mubr.bf16.mxu0 0
        %2495 = vmatmul.mubr.bf16.gmra.mrb[0].mxu0 %v2439
        %v2496 = vpop.f32.mrb[0].mxu0
        %v2497 = vadd.f32 0.0, %v2496
        %v2498 = vpop.f32.mrb[0].mxu0
        %v2499 = vpop.f32.mrb[0].mxu0
        %v2500 = vadd.f32 0.0, %v2499
        %v2501 = vpop.f32.mrb[0].mxu0
        %2502 = vmatprep.mubr.bf16.mxu0 0
        %2503 = vmatmul.mubr.bf16.gmra.mrb[0].mxu0 %v2440
        %v2504 = vpop.f32.mrb[0].mxu0
        %v2505 = vadd.f32 0.0, %v2504
        %v2506 = vpop.f32.mrb[0].mxu0
        %v2507 = vpop.f32.mrb[0].mxu0
        %v2508 = vadd.f32 0.0, %v2507
        %v2509 = vpop.f32.mrb[0].mxu0
        %2510 = vmatprep.mubr.bf16.mxu0 0
        %2511 = vmatmul.mubr.bf16.gmra.mrb[0].mxu0 %v2441
        %v2512 = vpop.f32.mrb[0].mxu0
        %v2513 = vadd.f32 0.0, %v2512
        %v2514 = vpop.f32.mrb[0].mxu0
        %v2515 = vpop.f32.mrb[0].mxu0
        %v2516 = vadd.f32 0.0, %v2515
        %v2517 = vpop.f32.mrb[0].mxu0
        %2518 = vdwg.mxu0
        %2519 = vmatprep.subr.bf16.mxu0 0
        %2520 = vmatpush1.bf16.msra.mxu0 %v1722
        %2521 = vmatprep.subr.bf16.mxu0 0
        %2522 = vmatpush1.bf16.msra.mxu0 %v1723
        %2523 = vmatprep.subr.bf16.mxu0 0
        %2524 = vmatpush1.bf16.msra.mxu0 %v1724
        %2525 = vmatprep.subr.bf16.mxu0 0
        %2526 = vmatpush1.bf16.msra.mxu0 %v1725
        %2527 = vmatprep.subr.bf16.mxu0 0
        %2528 = vmatpush1.bf16.msra.mxu0 %v1726
        %2529 = vmatprep.subr.bf16.mxu0 0
        %2530 = vmatpush1.bf16.msra.mxu0 %v1727
        %2531 = vmatprep.subr.bf16.mxu0 0
        %2532 = vmatpush1.bf16.msra.mxu0 %v1728
        %2533 = vmatprep.subr.bf16.mxu0 0
        %2534 = vmatpush1.bf16.msra.mxu0 %v1729
        %2535 = vmatprep.subr.bf16.mxu0 0
        %2536 = vmatpush1.bf16.msra.mxu0 0
        %2537 = vmatprep.subr.bf16.mxu0 0
        %2538 = vmatpush1.bf16.msra.mxu0 0
        %2539 = vmatprep.subr.bf16.mxu0 0
        %2540 = vmatpush1.bf16.msra.mxu0 0
        %2541 = vmatprep.subr.bf16.mxu0 0
        %2542 = vmatpush1.bf16.msra.mxu0 0
        %2543 = vmatprep.subr.bf16.mxu0 0
        %2544 = vmatpush1.bf16.msra.mxu0 0
        %2545 = vmatprep.subr.bf16.mxu0 0
        %2546 = vmatpush1.bf16.msra.mxu0 0
        %2547 = vmatprep.subr.bf16.mxu0 0
        %2548 = vmatpush1.bf16.msra.mxu0 0
        %2549 = vmatprep.subr.bf16.mxu0 0
        %2550 = vmatpush1.bf16.msra.mxu0 0
        %2551 = vmatprep.mubr.bf16.mxu0 0
        %2552 = vmatmul.mubr.bf16.gmra.mrb[0].mxu0 %v2442
        %v2553 = vpop.f32.mrb[0].mxu0
        %v2554 = vadd.f32 0.0, %v2553
        %v2555 = vpop.f32.mrb[0].mxu0
        %v2556 = vpop.f32.mrb[0].mxu0
        %v2557 = vadd.f32 0.0, %v2556
        %v2558 = vpop.f32.mrb[0].mxu0
        %2559 = vmatprep.mubr.bf16.mxu0 0
        %2560 = vmatmul.mubr.bf16.gmra.mrb[0].mxu0 %v2443
        %v2561 = vpop.f32.mrb[0].mxu0
        %v2562 = vadd.f32 0.0, %v2561
        %v2563 = vpop.f32.mrb[0].mxu0
        %v2564 = vpop.f32.mrb[0].mxu0
        %v2565 = vadd.f32 0.0, %v2564
        %v2566 = vpop.f32.mrb[0].mxu0
        %2567 = vmatprep.mubr.bf16.mxu0 0
        %2568 = vmatmul.mubr.bf16.gmra.mrb[0].mxu0 %v2444
        %v2569 = vpop.f32.mrb[0].mxu0
        %v2570 = vadd.f32 0.0, %v2569
        %v2571 = vpop.f32.mrb[0].mxu0
        %v2572 = vpop.f32.mrb[0].mxu0
        %v2573 = vadd.f32 0.0, %v2572
        %v2574 = vpop.f32.mrb[0].mxu0
        %2575 = vmatprep.mubr.bf16.mxu0 0
        %2576 = vmatmul.mubr.bf16.gmra.mrb[0].mxu0 %v2445
        %v2577 = vpop.f32.mrb[0].mxu0
        %v2578 = vadd.f32 0.0, %v2577
        %v2579 = vpop.f32.mrb[0].mxu0
        %v2580 = vpop.f32.mrb[0].mxu0
        %v2581 = vadd.f32 0.0, %v2580
        %v2582 = vpop.f32.mrb[0].mxu0
        %2583 = vdwg.mxu0
        %2584 = vmatprep.subr.bf16.mxu0 0
        %2585 = vmatpush1.bf16.msra.mxu0 %v1730
        %2586 = vmatprep.subr.bf16.mxu0 0
        %2587 = vmatpush1.bf16.msra.mxu0 %v1731
        %2588 = vmatprep.subr.bf16.mxu0 0
        %2589 = vmatpush1.bf16.msra.mxu0 %v1732
        %2590 = vmatprep.subr.bf16.mxu0 0
        %2591 = vmatpush1.bf16.msra.mxu0 %v1733
        %2592 = vmatprep.subr.bf16.mxu0 0
        %2593 = vmatpush1.bf16.msra.mxu0 %v1734
        %2594 = vmatprep.subr.bf16.mxu0 0
        %2595 = vmatpush1.bf16.msra.mxu0 %v1735
        %2596 = vmatprep.subr.bf16.mxu0 0
        %2597 = vmatpush1.bf16.msra.mxu0 %v1736
        %2598 = vmatprep.subr.bf16.mxu0 0
        %2599 = vmatpush1.bf16.msra.mxu0 %v1737
        %2600 = vmatprep.subr.bf16.mxu0 0
        %2601 = vmatpush1.bf16.msra.mxu0 0
        %2602 = vmatprep.subr.bf16.mxu0 0
        %2603 = vmatpush1.bf16.msra.mxu0 0
        %2604 = vmatprep.subr.bf16.mxu0 0
        %2605 = vmatpush1.bf16.msra.mxu0 0
        %2606 = vmatprep.subr.bf16.mxu0 0
        %2607 = vmatpush1.bf16.msra.mxu0 0
        %2608 = vmatprep.subr.bf16.mxu0 0
        %2609 = vmatpush1.bf16.msra.mxu0 0
        %2610 = vmatprep.subr.bf16.mxu0 0
        %2611 = vmatpush1.bf16.msra.mxu0 0
        %2612 = vmatprep.subr.bf16.mxu0 0
        %2613 = vmatpush1.bf16.msra.mxu0 0
        %2614 = vmatprep.subr.bf16.mxu0 0
        %2615 = vmatpush1.bf16.msra.mxu0 0
        %2616 = vmatprep.mubr.bf16.mxu0 0
        %2617 = vmatmul.mubr.bf16.gmra.mrb[0].mxu0 %v2446
        %v2618 = vpop.f32.mrb[0].mxu0
        %v2619 = vadd.f32 0.0, %v2618
        %v2620 = vpop.f32.mrb[0].mxu0
        %v2621 = vpop.f32.mrb[0].mxu0
        %v2622 = vadd.f32 0.0, %v2621
        %v2623 = vpop.f32.mrb[0].mxu0
        %2624 = vmatprep.mubr.bf16.mxu0 0
        %2625 = vmatmul.mubr.bf16.gmra.mrb[0].mxu0 %v2447
        %v2626 = vpop.f32.mrb[0].mxu0
        %v2627 = vadd.f32 0.0, %v2626
        %v2628 = vpop.f32.mrb[0].mxu0
        %v2629 = vpop.f32.mrb[0].mxu0
        %v2630 = vadd.f32 0.0, %v2629
        %v2631 = vpop.f32.mrb[0].mxu0
        %2632 = vmatprep.mubr.bf16.mxu0 0
        %2633 = vmatmul.mubr.bf16.gmra.mrb[0].mxu0 %v2448
        %v2634 = vpop.f32.mrb[0].mxu0
        %v2635 = vadd.f32 0.0, %v2634
        %v2636 = vpop.f32.mrb[0].mxu0
        %v2637 = vpop.f32.mrb[0].mxu0
        %v2638 = vadd.f32 0.0, %v2637
        %v2639 = vpop.f32.mrb[0].mxu0
        %2640 = vmatprep.mubr.bf16.mxu0 0
        %2641 = vmatmul.mubr.bf16.gmra.mrb[0].mxu0 %v2449
        %v2642 = vpop.f32.mrb[0].mxu0
        %v2643 = vadd.f32 0.0, %v2642
        %v2644 = vpop.f32.mrb[0].mxu0
        %v2645 = vpop.f32.mrb[0].mxu0
        %v2646 = vadd.f32 0.0, %v2645
        %v2647 = vpop.f32.mrb[0].mxu0
        %2648 = vdwg.mxu0
        %2649 = vmatprep.subr.bf16.mxu0 0
        %2650 = vmatpush1.bf16.msra.mxu0 %v1738
        %2651 = vmatprep.subr.bf16.mxu0 0
        %2652 = vmatpush1.bf16.msra.mxu0 %v1739
        %2653 = vmatprep.subr.bf16.mxu0 0
        %2654 = vmatpush1.bf16.msra.mxu0 %v1740
        %2655 = vmatprep.subr.bf16.mxu0 0
        %2656 = vmatpush1.bf16.msra.mxu0 %v1741
        %2657 = vmatprep.subr.bf16.mxu0 0
        %2658 = vmatpush1.bf16.msra.mxu0 %v1742
        %2659 = vmatprep.subr.bf16.mxu0 0
        %2660 = vmatpush1.bf16.msra.mxu0 %v1743
        %2661 = vmatprep.subr.bf16.mxu0 0
        %2662 = vmatpush1.bf16.msra.mxu0 %v1744
        %2663 = vmatprep.subr.bf16.mxu0 0
        %2664 = vmatpush1.bf16.msra.mxu0 %v1745
        %2665 = vmatprep.subr.bf16.mxu0 0
        %2666 = vmatpush1.bf16.msra.mxu0 0
        %2667 = vmatprep.subr.bf16.mxu0 0
        %2668 = vmatpush1.bf16.msra.mxu0 0
        %2669 = vmatprep.subr.bf16.mxu0 0
        %2670 = vmatpush1.bf16.msra.mxu0 0
        %2671 = vmatprep.subr.bf16.mxu0 0
        %2672 = vmatpush1.bf16.msra.mxu0 0
        %2673 = vmatprep.subr.bf16.mxu0 0
        %2674 = vmatpush1.bf16.msra.mxu0 0
        %2675 = vmatprep.subr.bf16.mxu0 0
        %2676 = vmatpush1.bf16.msra.mxu0 0
        %2677 = vmatprep.subr.bf16.mxu0 0
        %2678 = vmatpush1.bf16.msra.mxu0 0
        %2679 = vmatprep.subr.bf16.mxu0 0
        %2680 = vmatpush1.bf16.msra.mxu0 0
        %2681 = vmatprep.mubr.bf16.mxu0 0
        %2682 = vmatmul.mubr.bf16.gmra.mrb[0].mxu0 %v2450
        %v2683 = vpop.f32.mrb[0].mxu0
        %v2684 = vadd.f32 0.0, %v2683
        %v2685 = vpop.f32.mrb[0].mxu0
        %v2686 = vpop.f32.mrb[0].mxu0
        %v2687 = vadd.f32 0.0, %v2686
        %v2688 = vpop.f32.mrb[0].mxu0
        %2689 = vmatprep.mubr.bf16.mxu0 0
        %2690 = vmatmul.mubr.bf16.gmra.mrb[0].mxu0 %v2451
        %v2691 = vpop.f32.mrb[0].mxu0
        %v2692 = vadd.f32 0.0, %v2691
        %v2693 = vpop.f32.mrb[0].mxu0
        %v2694 = vpop.f32.mrb[0].mxu0
        %v2695 = vadd.f32 0.0, %v2694
        %v2696 = vpop.f32.mrb[0].mxu0
        %2697 = vmatprep.mubr.bf16.mxu0 0
        %2698 = vmatmul.mubr.bf16.gmra.mrb[0].mxu0 %v2452
        %v2699 = vpop.f32.mrb[0].mxu0
        %v2700 = vadd.f32 0.0, %v2699
        %v2701 = vpop.f32.mrb[0].mxu0
        %v2702 = vpop.f32.mrb[0].mxu0
        %v2703 = vadd.f32 0.0, %v2702
        %v2704 = vpop.f32.mrb[0].mxu0
        %2705 = vmatprep.mubr.bf16.mxu0 0
        %2706 = vmatmul.mubr.bf16.gmra.mrb[0].mxu0 %v2453
        %v2707 = vpop.f32.mrb[0].mxu0
        %v2708 = vadd.f32 0.0, %v2707
        %v2709 = vpop.f32.mrb[0].mxu0
        %v2710 = vpop.f32.mrb[0].mxu0
        %v2711 = vadd.f32 0.0, %v2710
        %v2712 = vpop.f32.mrb[0].mxu0
        %2713 = vdwg.mxu0
        %2722 = vrot.lane.b32.xlu0 %v2554, 32
        %v2723 = vpop.permute.xlu0 %2722
        %2724 = vrot.lane.b32.xlu0 %v2557, 32
        %v2725 = vpop.permute.xlu0 %2724
        %2726 = vrot.lane.b32.xlu0 %v2562, 32
        %v2727 = vpop.permute.xlu0 %2726
        %2728 = vrot.lane.b32.xlu0 %v2565, 32
        %v2729 = vpop.permute.xlu0 %2728
        %2730 = vrot.lane.b32.xlu0 %v2570, 32
        %v2731 = vpop.permute.xlu0 %2730
        %2732 = vrot.lane.b32.xlu0 %v2573, 32
        %v2733 = vpop.permute.xlu0 %2732
        %2734 = vrot.lane.b32.xlu0 %v2578, 32
        %v2735 = vpop.permute.xlu0 %2734
        %2736 = vrot.lane.b32.xlu0 %v2581, 32
        %v2737 = vpop.permute.xlu0 %2736
        %2754 = vrot.lane.b32.xlu0 %v2619, 64
        %v2755 = vpop.permute.xlu0 %2754
        %2756 = vrot.lane.b32.xlu0 %v2622, 64
        %v2757 = vpop.permute.xlu0 %2756
        %2758 = vrot.lane.b32.xlu0 %v2627, 64
        %v2759 = vpop.permute.xlu0 %2758
        %2760 = vrot.lane.b32.xlu0 %v2630, 64
        %v2761 = vpop.permute.xlu0 %2760
        %2762 = vrot.lane.b32.xlu0 %v2635, 64
        %v2763 = vpop.permute.xlu0 %2762
        %2764 = vrot.lane.b32.xlu0 %v2638, 64
        %v2765 = vpop.permute.xlu0 %2764
        %2766 = vrot.lane.b32.xlu0 %v2643, 64
        %v2767 = vpop.permute.xlu0 %2766
        %2768 = vrot.lane.b32.xlu0 %v2646, 64
        %v2769 = vpop.permute.xlu0 %2768
        %2786 = vrot.lane.b32.xlu0 %v2684, 96
        %v2787 = vpop.permute.xlu0 %2786
        %2788 = vrot.lane.b32.xlu0 %v2687, 96
        %v2789 = vpop.permute.xlu0 %2788
        %2790 = vrot.lane.b32.xlu0 %v2692, 96
        %v2791 = vpop.permute.xlu0 %2790
        %2792 = vrot.lane.b32.xlu0 %v2695, 96
        %v2793 = vpop.permute.xlu0 %2792
        %2794 = vrot.lane.b32.xlu0 %v2700, 96
        %v2795 = vpop.permute.xlu0 %2794
        %2796 = vrot.lane.b32.xlu0 %v2703, 96
        %v2797 = vpop.permute.xlu0 %2796
        %2798 = vrot.lane.b32.xlu0 %v2708, 96
        %v2799 = vpop.permute.xlu0 %2798
        %2800 = vrot.lane.b32.xlu0 %v2711, 96
        %v2801 = vpop.permute.xlu0 %2800
        %v2810 = vsel %vm1606, %v2489, %v2723
        %v2811 = vsel %vm1606, %v2492, %v2725
        %v2812 = vsel %vm1606, %v2497, %v2727
        %v2813 = vsel %vm1606, %v2500, %v2729
        %v2814 = vsel %vm1606, %v2505, %v2731
        %v2815 = vsel %vm1606, %v2508, %v2733
        %v2816 = vsel %vm1606, %v2513, %v2735
        %v2817 = vsel %vm1606, %v2516, %v2737
        %vm2818 = vcmask 523264
        %v2819 = vsel %vm2818, %v2810, %v2755
        %v2820 = vsel %vm2818, %v2811, %v2757
        %v2821 = vsel %vm2818, %v2812, %v2759
        %v2822 = vsel %vm2818, %v2813, %v2761
        %v2823 = vsel %vm2818, %v2814, %v2763
        %v2824 = vsel %vm2818, %v2815, %v2765
        %v2825 = vsel %vm2818, %v2816, %v2767
        %v2826 = vsel %vm2818, %v2817, %v2769
        %vm2827 = vcmask 785408
        %v2828 = vsel %vm2827, %v2819, %v2787
        %v2829 = vsel %vm2827, %v2820, %v2789
        %v2830 = vsel %vm2827, %v2821, %v2791
        %v2831 = vsel %vm2827, %v2822, %v2793
        %v2832 = vsel %vm2827, %v2823, %v2795
        %v2833 = vsel %vm2827, %v2824, %v2797
        %v2834 = vsel %vm2827, %v2825, %v2799
        %v2835 = vsel %vm2827, %v2826, %v2801
        %v2836 = vpack.c.bf16 %v2829, %v2828
        %v2837 = vpack.c.bf16 %v2831, %v2830
        %v2838 = vpack.c.bf16 %v2833, %v2832
        %v2839 = vpack.c.bf16 %v2835, %v2834
        %v2840 = vld [vmem:[#allocation13] sm:$0xf]
        %v2841 = vld [vmem:[#allocation13 + $0x4] sm:$0xf]
        %v2842 = vld [vmem:[#allocation13 + $0x8] sm:$0xf]
        %v2843 = vld [vmem:[#allocation13 + $0xc] sm:$0xf]
        %v2844 = vld [vmem:[#allocation13 + $0x10] sm:$0xf]
        %v2845 = vld [vmem:[#allocation13 + $0x14] sm:$0xf]
        %v2846 = vld [vmem:[#allocation13 + $0x18] sm:$0xf]
        %v2847 = vld [vmem:[#allocation13 + $0x1c] sm:$0xf]
        %v2848 = vld [vmem:[#allocation13 + $0x20] sm:$0xf]
        %v2849 = vld [vmem:[#allocation13 + $0x24] sm:$0xf]
        %v2850 = vld [vmem:[#allocation13 + $0x28] sm:$0xf]
        %v2851 = vld [vmem:[#allocation13 + $0x2c] sm:$0xf]
        %v2852 = vld [vmem:[#allocation13 + $0x30] sm:$0xf]
        %v2853 = vld [vmem:[#allocation13 + $0x34] sm:$0xf]
        %v2854 = vld [vmem:[#allocation13 + $0x38] sm:$0xf]
        %v2855 = vld [vmem:[#allocation13 + $0x3c] sm:$0xf]
        %v2856 = vld [vmem:[%s8] sm:$0x1]
        %v2858 = vlaneseq
        %v2859 = vshrl.u32 %v2858, 7
        %v2860 = vsub.s32 0, %v2859
        %v2861 = vrot.slane %v2856, %v2860
        %v2879 = vunpack.c.l.b16 %v2840
        %v2880 = vunpack.c.l.b16 %v2841
        %v2881 = vunpack.c.l.b16 %v2842
        %v2882 = vunpack.c.l.b16 %v2843
        %v2883 = vunpack.c.l.b16 %v2844
        %v2884 = vunpack.c.l.b16 %v2845
        %v2885 = vunpack.c.l.b16 %v2846
        %v2886 = vunpack.c.l.b16 %v2847
        %v2887 = vunpack.c.l.b16 %v2848
        %v2888 = vunpack.c.l.b16 %v2849
        %v2889 = vunpack.c.l.b16 %v2850
        %v2890 = vunpack.c.l.b16 %v2851
        %v2891 = vunpack.c.l.b16 %v2852
        %v2892 = vunpack.c.l.b16 %v2853
        %v2893 = vunpack.c.l.b16 %v2854
        %v2894 = vunpack.c.l.b16 %v2855
        %v2895 = vpack.c.b16 %v2880, %v2879
        %v2896 = vpack.c.b16 %v2882, %v2881
        %v2897 = vpack.c.b16 %v2884, %v2883
        %v2898 = vpack.c.b16 %v2886, %v2885
        %v2899 = vpack.c.b16 %v2888, %v2887
        %v2900 = vpack.c.b16 %v2890, %v2889
        %v2901 = vpack.c.b16 %v2892, %v2891
        %v2902 = vpack.c.b16 %v2894, %v2893
        %2911 = vmatprep.subr.bf16.mxu0 0
        %2912 = vmatpush1.bf16.msra.mxu0 %v2895
        %2913 = vmatprep.subr.bf16.mxu0 0
        %2914 = vmatpush1.bf16.msra.mxu0 %v2896
        %2915 = vmatprep.subr.bf16.mxu0 0
        %2916 = vmatpush1.bf16.msra.mxu0 %v2897
        %2917 = vmatprep.subr.bf16.mxu0 0
        %2918 = vmatpush1.bf16.msra.mxu0 %v2898
        %2919 = vmatprep.subr.bf16.mxu0 0
        %2920 = vmatpush1.bf16.msra.mxu0 %v2899
        %2921 = vmatprep.subr.bf16.mxu0 0
        %2922 = vmatpush1.bf16.msra.mxu0 %v2900
        %2923 = vmatprep.subr.bf16.mxu0 0
        %2924 = vmatpush1.bf16.msra.mxu0 %v2901
        %2925 = vmatprep.subr.bf16.mxu0 0
        %2926 = vmatpush1.bf16.msra.mxu0 %v2902
        %2927 = vmatprep.subr.bf16.mxu0 0
        %2928 = vmatpush1.bf16.msra.mxu0 0
        %2929 = vmatprep.subr.bf16.mxu0 0
        %2930 = vmatpush1.bf16.msra.mxu0 0
        %2931 = vmatprep.subr.bf16.mxu0 0
        %2932 = vmatpush1.bf16.msra.mxu0 0
        %2933 = vmatprep.subr.bf16.mxu0 0
        %2934 = vmatpush1.bf16.msra.mxu0 0
        %2935 = vmatprep.subr.bf16.mxu0 0
        %2936 = vmatpush1.bf16.msra.mxu0 0
        %2937 = vmatprep.subr.bf16.mxu0 0
        %2938 = vmatpush1.bf16.msra.mxu0 0
        %2939 = vmatprep.subr.bf16.mxu0 0
        %2940 = vmatpush1.bf16.msra.mxu0 0
        %2941 = vmatprep.subr.bf16.mxu0 0
        %2942 = vmatpush1.bf16.msra.mxu0 0
        %2943 = vmatprep.mubr.bf16.mxu0 0
        %2944 = vmatmul.mubr.bf16.gmra.mrb[0].mxu0 %v2836
        %v2945 = vpop.f32.mrb[0].mxu0
        %v2946 = vadd.f32 %v2861, %v2945
        %v2947 = vpop.f32.mrb[0].mxu0
        %v2948 = vpop.f32.mrb[0].mxu0
        %v2949 = vadd.f32 %v2861, %v2948
        %v2950 = vpop.f32.mrb[0].mxu0
        %2951 = vmatprep.mubr.bf16.mxu0 0
        %2952 = vmatmul.mubr.bf16.gmra.mrb[0].mxu0 %v2837
        %v2953 = vpop.f32.mrb[0].mxu0
        %v2954 = vadd.f32 %v2861, %v2953
        %v2955 = vpop.f32.mrb[0].mxu0
        %v2956 = vpop.f32.mrb[0].mxu0
        %v2957 = vadd.f32 %v2861, %v2956
        %v2958 = vpop.f32.mrb[0].mxu0
        %2959 = vmatprep.mubr.bf16.mxu0 0
        %2960 = vmatmul.mubr.bf16.gmra.mrb[0].mxu0 %v2838
        %v2961 = vpop.f32.mrb[0].mxu0
        %v2962 = vadd.f32 %v2861, %v2961
        %v2963 = vpop.f32.mrb[0].mxu0
        %v2964 = vpop.f32.mrb[0].mxu0
        %v2965 = vadd.f32 %v2861, %v2964
        %v2966 = vpop.f32.mrb[0].mxu0
        %2967 = vmatprep.mubr.bf16.mxu0 0
        %2968 = vmatmul.mubr.bf16.gmra.mrb[0].mxu0 %v2839
        %v2969 = vpop.f32.mrb[0].mxu0
        %v2970 = vadd.f32 %v2861, %v2969
        %v2971 = vpop.f32.mrb[0].mxu0
        %v2972 = vpop.f32.mrb[0].mxu0
        %v2973 = vadd.f32 %v2861, %v2972
        %v2974 = vpop.f32.mrb[0].mxu0
        %2975 = vdwg.mxu0
        %v2976 = vadd.f32 %v1335, %v2946
        %v2977 = vadd.f32 %v1336, %v2949
        %v2978 = vadd.f32 %v1337, %v2954
        %v2979 = vadd.f32 %v1338, %v2957
        %v2980 = vadd.f32 %v1339, %v2962
        %v2981 = vadd.f32 %v1340, %v2965
        %v2982 = vadd.f32 %v1341, %v2970
        %v2983 = vadd.f32 %v1342, %v2973
        %v2984 = vld [vmem:[%s9] sm:$0x1]
        %v2985 = vld [vmem:[%s10] sm:$0x1]
        %2986 = vadd.xlane.f32.xlu0 %v2976
        %v2987 = vpop.xlane.xlu0 %2986
        %2988 = vadd.xlane.f32.xlu0 %v2977
        %v2989 = vpop.xlane.xlu0 %2988
        %2990 = vadd.xlane.f32.xlu0 %v2978
        %v2991 = vpop.xlane.xlu0 %2990
        %2992 = vadd.xlane.f32.xlu0 %v2979
        %v2993 = vpop.xlane.xlu0 %2992
        %2994 = vadd.xlane.f32.xlu0 %v2980
        %v2995 = vpop.xlane.xlu0 %2994
        %2996 = vadd.xlane.f32.xlu0 %v2981
        %v2997 = vpop.xlane.xlu0 %2996
        %2998 = vadd.xlane.f32.xlu0 %v2982
        %v2999 = vpop.xlane.xlu0 %2998
        %3000 = vadd.xlane.f32.xlu0 %v2983
        %v3001 = vpop.xlane.xlu0 %3000
        %v3002 = vmul.f32 %v2987, %v1361
        %v3003 = vmul.f32 %v2989, %v1361
        %v3004 = vmul.f32 %v2991, %v1361
        %v3005 = vmul.f32 %v2993, %v1361
        %v3006 = vmul.f32 %v2995, %v1361
        %v3007 = vmul.f32 %v2997, %v1361
        %v3008 = vmul.f32 %v2999, %v1361
        %v3009 = vmul.f32 %v3001, %v1361
        %v3010 = vsub.f32 %v2976, %v3002
        %v3011 = vsub.f32 %v2977, %v3003
        %v3012 = vsub.f32 %v2978, %v3004
        %v3013 = vsub.f32 %v2979, %v3005
        %v3014 = vsub.f32 %v2980, %v3006
        %v3015 = vsub.f32 %v2981, %v3007
        %v3016 = vsub.f32 %v2982, %v3008
        %v3017 = vsub.f32 %v2983, %v3009
        %v3018 = vmul.f32 %v3010, %v3010
        %v3019 = vmul.f32 %v3011, %v3011
        %v3020 = vmul.f32 %v3012, %v3012
        %v3021 = vmul.f32 %v3013, %v3013
        %v3022 = vmul.f32 %v3014, %v3014
        %v3023 = vmul.f32 %v3015, %v3015
        %v3024 = vmul.f32 %v3016, %v3016
        %v3025 = vmul.f32 %v3017, %v3017
        %3026 = vadd.xlane.f32.xlu0 %v3018
        %v3027 = vpop.xlane.xlu0 %3026
        %3028 = vadd.xlane.f32.xlu0 %v3019
        %v3029 = vpop.xlane.xlu0 %3028
        %3030 = vadd.xlane.f32.xlu0 %v3020
        %v3031 = vpop.xlane.xlu0 %3030
        %3032 = vadd.xlane.f32.xlu0 %v3021
        %v3033 = vpop.xlane.xlu0 %3032
        %3034 = vadd.xlane.f32.xlu0 %v3022
        %v3035 = vpop.xlane.xlu0 %3034
        %3036 = vadd.xlane.f32.xlu0 %v3023
        %v3037 = vpop.xlane.xlu0 %3036
        %3038 = vadd.xlane.f32.xlu0 %v3024
        %v3039 = vpop.xlane.xlu0 %3038
        %3040 = vadd.xlane.f32.xlu0 %v3025
        %v3041 = vpop.xlane.xlu0 %3040
        %v3042 = vmul.f32 %v3027, %v1361
        %v3043 = vmul.f32 %v3029, %v1361
        %v3044 = vmul.f32 %v3031, %v1361
        %v3045 = vmul.f32 %v3033, %v1361
        %v3046 = vmul.f32 %v3035, %v1361
        %v3047 = vmul.f32 %v3037, %v1361
        %v3048 = vmul.f32 %v3039, %v1361
        %v3049 = vmul.f32 %v3041, %v1361
        %v3050 = vadd.f32 %v3042, 1e-05
        %v3051 = vadd.f32 %v3043, 1e-05
        %v3052 = vadd.f32 %v3044, 1e-05
        %v3053 = vadd.f32 %v3045, 1e-05
        %v3054 = vadd.f32 %v3046, 1e-05
        %v3055 = vadd.f32 %v3047, 1e-05
        %v3056 = vadd.f32 %v3048, 1e-05
        %v3057 = vadd.f32 %v3049, 1e-05
        %v3058 = vrsqrt.pop %v3050
        %v3059 = vrsqrt.pop %v3051
        %v3060 = vrsqrt.pop %v3052
        %v3061 = vrsqrt.pop %v3053
        %v3062 = vrsqrt.pop %v3054
        %v3063 = vrsqrt.pop %v3055
        %v3064 = vrsqrt.pop %v3056
        %v3065 = vrsqrt.pop %v3057
        %v3066 = vmul.f32 %v3010, %v3058
        %v3067 = vmul.f32 %v3011, %v3059
        %v3068 = vmul.f32 %v3012, %v3060
        %v3069 = vmul.f32 %v3013, %v3061
        %v3070 = vmul.f32 %v3014, %v3062
        %v3071 = vmul.f32 %v3015, %v3063
        %v3072 = vmul.f32 %v3016, %v3064
        %v3073 = vmul.f32 %v3017, %v3065
        %v3075 = vlaneseq
        %v3076 = vshrl.u32 %v3075, 7
        %v3077 = vsub.s32 0, %v3076
        %v3078 = vrot.slane %v2984, %v3077
        %v3080 = vmul.f32 %v3066, %v3078
        %v3081 = vmul.f32 %v3067, %v3078
        %v3082 = vmul.f32 %v3068, %v3078
        %v3083 = vmul.f32 %v3069, %v3078
        %v3084 = vmul.f32 %v3070, %v3078
        %v3085 = vmul.f32 %v3071, %v3078
        %v3086 = vmul.f32 %v3072, %v3078
        %v3087 = vmul.f32 %v3073, %v3078
        %v3089 = vlaneseq
        %v3090 = vshrl.u32 %v3089, 7
        %v3091 = vsub.s32 0, %v3090
        %v3092 = vrot.slane %v2985, %v3091
        %v3094 = vadd.f32 %v3080, %v3092
        %v3095 = vadd.f32 %v3081, %v3092
        %v3096 = vadd.f32 %v3082, %v3092
        %v3097 = vadd.f32 %v3083, %v3092
        %v3098 = vadd.f32 %v3084, %v3092
        %v3099 = vadd.f32 %v3085, %v3092
        %v3100 = vadd.f32 %v3086, %v3092
        %v3101 = vadd.f32 %v3087, %v3092
        %v3102 = vpack.c.bf16 %v3095, %v3094
        %v3103 = vpack.c.bf16 %v3097, %v3096
        %v3104 = vpack.c.bf16 %v3099, %v3098
        %v3105 = vpack.c.bf16 %v3101, %v3100
        %v3106 = vld [vmem:[#allocation14] sm:$0xff]
        %v3107 = vld [vmem:[#allocation14 + $0x8] sm:$0xff]
        %v3108 = vld [vmem:[#allocation14 + $0x10] sm:$0xff]
        %v3109 = vld [vmem:[#allocation14 + $0x18] sm:$0xff]
        %v3110 = vld [vmem:[#allocation14 + $0x20] sm:$0xff]
        %v3111 = vld [vmem:[#allocation14 + $0x28] sm:$0xff]
        %v3112 = vld [vmem:[#allocation14 + $0x30] sm:$0xff]
        %v3113 = vld [vmem:[#allocation14 + $0x38] sm:$0xff]
        %v3114 = vld [vmem:[#allocation14 + $0x40] sm:$0xff]
        %v3115 = vld [vmem:[#allocation14 + $0x48] sm:$0xff]
        %v3116 = vld [vmem:[#allocation14 + $0x50] sm:$0xff]
        %v3117 = vld [vmem:[#allocation14 + $0x58] sm:$0xff]
        %v3118 = vld [vmem:[#allocation14 + $0x60] sm:$0xff]
        %v3119 = vld [vmem:[#allocation14 + $0x68] sm:$0xff]
        %v3120 = vld [vmem:[#allocation14 + $0x70] sm:$0xff]
        %v3121 = vld [vmem:[#allocation14 + $0x78] sm:$0xff]
        %v3122 = vld [vmem:[#allocation14 + $0x80] sm:$0xff]
        %v3123 = vld [vmem:[#allocation14 + $0x88] sm:$0xff]
        %v3124 = vld [vmem:[#allocation14 + $0x90] sm:$0xff]
        %v3125 = vld [vmem:[#allocation14 + $0x98] sm:$0xff]
        %v3126 = vld [vmem:[#allocation14 + $0xa0] sm:$0xff]
        %v3127 = vld [vmem:[#allocation14 + $0xa8] sm:$0xff]
        %v3128 = vld [vmem:[#allocation14 + $0xb0] sm:$0xff]
        %v3129 = vld [vmem:[#allocation14 + $0xb8] sm:$0xff]
        %v3130 = vld [vmem:[#allocation14 + $0xc0] sm:$0xff]
        %v3131 = vld [vmem:[#allocation14 + $0xc8] sm:$0xff]
        %v3132 = vld [vmem:[#allocation14 + $0xd0] sm:$0xff]
        %v3133 = vld [vmem:[#allocation14 + $0xd8] sm:$0xff]
        %v3134 = vld [vmem:[#allocation14 + $0xe0] sm:$0xff]
        %v3135 = vld [vmem:[#allocation14 + $0xe8] sm:$0xff]
        %v3136 = vld [vmem:[#allocation14 + $0xf0] sm:$0xff]
        %v3137 = vld [vmem:[#allocation14 + $0xf8] sm:$0xff]
        %v3138 = vld [vmem:[%s12] sm:$0xf]
        %v3140 = vlaneseq
        %v3141 = vshrl.u32 %v3140, 7
        %v3142 = vsub.s32 0, %v3141
        %v3143 = vrot.slane %v3138, %v3142
        %v3144 = vlaneseq
        %v3145 = vshrl.u32 %v3144, 7
        %v3146 = vsub.s32 1, %v3145
        %v3147 = vrot.slane %v3138, %v3146
        %v3148 = vlaneseq
        %v3149 = vshrl.u32 %v3148, 7
        %v3150 = vsub.s32 2, %v3149
        %v3151 = vrot.slane %v3138, %v3150
        %v3152 = vlaneseq
        %v3153 = vshrl.u32 %v3152, 7
        %v3154 = vsub.s32 3, %v3153
        %v3155 = vrot.slane %v3138, %v3154
        %v3192 = vunpack.c.l.b16 %v3106
        %v3193 = vunpack.c.h.b16 %v3106
        %v3194 = vunpack.c.l.b16 %v3107
        %v3195 = vunpack.c.h.b16 %v3107
        %v3196 = vunpack.c.l.b16 %v3108
        %v3197 = vunpack.c.h.b16 %v3108
        %v3198 = vunpack.c.l.b16 %v3109
        %v3199 = vunpack.c.h.b16 %v3109
        %v3200 = vunpack.c.l.b16 %v3110
        %v3201 = vunpack.c.h.b16 %v3110
        %v3202 = vunpack.c.l.b16 %v3111
        %v3203 = vunpack.c.h.b16 %v3111
        %v3204 = vunpack.c.l.b16 %v3112
        %v3205 = vunpack.c.h.b16 %v3112
        %v3206 = vunpack.c.l.b16 %v3113
        %v3207 = vunpack.c.h.b16 %v3113
        %v3208 = vunpack.c.l.b16 %v3114
        %v3209 = vunpack.c.h.b16 %v3114
        %v3210 = vunpack.c.l.b16 %v3115
        %v3211 = vunpack.c.h.b16 %v3115
        %v3212 = vunpack.c.l.b16 %v3116
        %v3213 = vunpack.c.h.b16 %v3116
        %v3214 = vunpack.c.l.b16 %v3117
        %v3215 = vunpack.c.h.b16 %v3117
        %v3216 = vunpack.c.l.b16 %v3118
        %v3217 = vunpack.c.h.b16 %v3118
        %v3218 = vunpack.c.l.b16 %v3119
        %v3219 = vunpack.c.h.b16 %v3119
        %v3220 = vunpack.c.l.b16 %v3120
        %v3221 = vunpack.c.h.b16 %v3120
        %v3222 = vunpack.c.l.b16 %v3121
        %v3223 = vunpack.c.h.b16 %v3121
        %v3224 = vunpack.c.l.b16 %v3122
        %v3225 = vunpack.c.h.b16 %v3122
        %v3226 = vunpack.c.l.b16 %v3123
        %v3227 = vunpack.c.h.b16 %v3123
        %v3228 = vunpack.c.l.b16 %v3124
        %v3229 = vunpack.c.h.b16 %v3124
        %v3230 = vunpack.c.l.b16 %v3125
        %v3231 = vunpack.c.h.b16 %v3125
        %v3232 = vunpack.c.l.b16 %v3126
        %v3233 = vunpack.c.h.b16 %v3126
        %v3234 = vunpack.c.l.b16 %v3127
        %v3235 = vunpack.c.h.b16 %v3127
        %v3236 = vunpack.c.l.b16 %v3128
        %v3237 = vunpack.c.h.b16 %v3128
        %v3238 = vunpack.c.l.b16 %v3129
        %v3239 = vunpack.c.h.b16 %v3129
        %v3240 = vunpack.c.l.b16 %v3130
        %v3241 = vunpack.c.h.b16 %v3130
        %v3242 = vunpack.c.l.b16 %v3131
        %v3243 = vunpack.c.h.b16 %v3131
        %v3244 = vunpack.c.l.b16 %v3132
        %v3245 = vunpack.c.h.b16 %v3132
        %v3246 = vunpack.c.l.b16 %v3133
        %v3247 = vunpack.c.h.b16 %v3133
        %v3248 = vunpack.c.l.b16 %v3134
        %v3249 = vunpack.c.h.b16 %v3134
        %v3250 = vunpack.c.l.b16 %v3135
        %v3251 = vunpack.c.h.b16 %v3135
        %v3252 = vunpack.c.l.b16 %v3136
        %v3253 = vunpack.c.h.b16 %v3136
        %v3254 = vunpack.c.l.b16 %v3137
        %v3255 = vunpack.c.h.b16 %v3137
        %v3256 = vpack.c.b16 %v3196, %v3192
        %v3257 = vpack.c.b16 %v3197, %v3193
        %v3258 = vpack.c.b16 %v3198, %v3194
        %v3259 = vpack.c.b16 %v3199, %v3195
        %v3260 = vpack.c.b16 %v3204, %v3200
        %v3261 = vpack.c.b16 %v3205, %v3201
        %v3262 = vpack.c.b16 %v3206, %v3202
        %v3263 = vpack.c.b16 %v3207, %v3203
        %v3264 = vpack.c.b16 %v3212, %v3208
        %v3265 = vpack.c.b16 %v3213, %v3209
        %v3266 = vpack.c.b16 %v3214, %v3210
        %v3267 = vpack.c.b16 %v3215, %v3211
        %v3268 = vpack.c.b16 %v3220, %v3216
        %v3269 = vpack.c.b16 %v3221, %v3217
        %v3270 = vpack.c.b16 %v3222, %v3218
        %v3271 = vpack.c.b16 %v3223, %v3219
        %v3272 = vpack.c.b16 %v3228, %v3224
        %v3273 = vpack.c.b16 %v3229, %v3225
        %v3274 = vpack.c.b16 %v3230, %v3226
        %v3275 = vpack.c.b16 %v3231, %v3227
        %v3276 = vpack.c.b16 %v3236, %v3232
        %v3277 = vpack.c.b16 %v3237, %v3233
        %v3278 = vpack.c.b16 %v3238, %v3234
        %v3279 = vpack.c.b16 %v3239, %v3235
        %v3280 = vpack.c.b16 %v3244, %v3240
        %v3281 = vpack.c.b16 %v3245, %v3241
        %v3282 = vpack.c.b16 %v3246, %v3242
        %v3283 = vpack.c.b16 %v3247, %v3243
        %v3284 = vpack.c.b16 %v3252, %v3248
        %v3285 = vpack.c.b16 %v3253, %v3249
        %v3286 = vpack.c.b16 %v3254, %v3250
        %v3287 = vpack.c.b16 %v3255, %v3251
        %3320 = vmatprep.subr.bf16.mxu0 %v3257
        %3321 = vmatpush1.bf16.msra.mxu0 %v3256
        %3322 = vmatprep.subr.bf16.mxu0 %v3261
        %3323 = vmatpush1.bf16.msra.mxu0 %v3260
        %3324 = vmatprep.subr.bf16.mxu0 %v3265
        %3325 = vmatpush1.bf16.msra.mxu0 %v3264
        %3326 = vmatprep.subr.bf16.mxu0 %v3269
        %3327 = vmatpush1.bf16.msra.mxu0 %v3268
        %3328 = vmatprep.subr.bf16.mxu0 %v3273
        %3329 = vmatpush1.bf16.msra.mxu0 %v3272
        %3330 = vmatprep.subr.bf16.mxu0 %v3277
        %3331 = vmatpush1.bf16.msra.mxu0 %v3276
        %3332 = vmatprep.subr.bf16.mxu0 %v3281
        %3333 = vmatpush1.bf16.msra.mxu0 %v3280
        %3334 = vmatprep.subr.bf16.mxu0 %v3285
        %3335 = vmatpush1.bf16.msra.mxu0 %v3284
        %3336 = vmatprep.subr.bf16.mxu0 0
        %3337 = vmatpush1.bf16.msra.mxu0 0
        %3338 = vmatprep.subr.bf16.mxu0 0
        %3339 = vmatpush1.bf16.msra.mxu0 0
        %3340 = vmatprep.subr.bf16.mxu0 0
        %3341 = vmatpush1.bf16.msra.mxu0 0
        %3342 = vmatprep.subr.bf16.mxu0 0
        %3343 = vmatpush1.bf16.msra.mxu0 0
        %3344 = vmatprep.subr.bf16.mxu0 0
        %3345 = vmatpush1.bf16.msra.mxu0 0
        %3346 = vmatprep.subr.bf16.mxu0 0
        %3347 = vmatpush1.bf16.msra.mxu0 0
        %3348 = vmatprep.subr.bf16.mxu0 0
        %3349 = vmatpush1.bf16.msra.mxu0 0
        %3350 = vmatprep.subr.bf16.mxu0 0
        %3351 = vmatpush1.bf16.msra.mxu0 0
        %3352 = vmatprep.mubr.bf16.mxu0 0
        %3353 = vmatmul.mubr.bf16.gmra.mrb[0].mxu0 %v3102
        %v3354 = vpop.f32.mrb[0].mxu0
        %v3355 = vadd.f32 %v3143, %v3354
        %v3356 = vpop.f32.mrb[0].mxu0
        %v3357 = vadd.f32 %v3147, %v3356
        %v3358 = vpop.f32.mrb[0].mxu0
        %v3359 = vadd.f32 %v3143, %v3358
        %v3360 = vpop.f32.mrb[0].mxu0
        %v3361 = vadd.f32 %v3147, %v3360
        %3362 = vmatprep.mubr.bf16.mxu0 0
        %3363 = vmatmul.mubr.bf16.gmra.mrb[0].mxu0 %v3103
        %v3364 = vpop.f32.mrb[0].mxu0
        %v3365 = vadd.f32 %v3143, %v3364
        %v3366 = vpop.f32.mrb[0].mxu0
        %v3367 = vadd.f32 %v3147, %v3366
        %v3368 = vpop.f32.mrb[0].mxu0
        %v3369 = vadd.f32 %v3143, %v3368
        %v3370 = vpop.f32.mrb[0].mxu0
        %v3371 = vadd.f32 %v3147, %v3370
        %3372 = vmatprep.mubr.bf16.mxu0 0
        %3373 = vmatmul.mubr.bf16.gmra.mrb[0].mxu0 %v3104
        %v3374 = vpop.f32.mrb[0].mxu0
        %v3375 = vadd.f32 %v3143, %v3374
        %v3376 = vpop.f32.mrb[0].mxu0
        %v3377 = vadd.f32 %v3147, %v3376
        %v3378 = vpop.f32.mrb[0].mxu0
        %v3379 = vadd.f32 %v3143, %v3378
        %v3380 = vpop.f32.mrb[0].mxu0
        %v3381 = vadd.f32 %v3147, %v3380
        %3382 = vmatprep.mubr.bf16.mxu0 0
        %3383 = vmatmul.mubr.bf16.gmra.mrb[0].mxu0 %v3105
        %v3384 = vpop.f32.mrb[0].mxu0
        %v3385 = vadd.f32 %v3143, %v3384
        %v3386 = vpop.f32.mrb[0].mxu0
        %v3387 = vadd.f32 %v3147, %v3386
        %v3388 = vpop.f32.mrb[0].mxu0
        %v3389 = vadd.f32 %v3143, %v3388
        %v3390 = vpop.f32.mrb[0].mxu0
        %v3391 = vadd.f32 %v3147, %v3390
        %3392 = vdwg.mxu0
        %3393 = vmatprep.subr.bf16.mxu0 %v3259
        %3394 = vmatpush1.bf16.msra.mxu0 %v3258
        %3395 = vmatprep.subr.bf16.mxu0 %v3263
        %3396 = vmatpush1.bf16.msra.mxu0 %v3262
        %3397 = vmatprep.subr.bf16.mxu0 %v3267
        %3398 = vmatpush1.bf16.msra.mxu0 %v3266
        %3399 = vmatprep.subr.bf16.mxu0 %v3271
        %3400 = vmatpush1.bf16.msra.mxu0 %v3270
        %3401 = vmatprep.subr.bf16.mxu0 %v3275
        %3402 = vmatpush1.bf16.msra.mxu0 %v3274
        %3403 = vmatprep.subr.bf16.mxu0 %v3279
        %3404 = vmatpush1.bf16.msra.mxu0 %v3278
        %3405 = vmatprep.subr.bf16.mxu0 %v3283
        %3406 = vmatpush1.bf16.msra.mxu0 %v3282
        %3407 = vmatprep.subr.bf16.mxu0 %v3287
        %3408 = vmatpush1.bf16.msra.mxu0 %v3286
        %3409 = vmatprep.subr.bf16.mxu0 0
        %3410 = vmatpush1.bf16.msra.mxu0 0
        %3411 = vmatprep.subr.bf16.mxu0 0
        %3412 = vmatpush1.bf16.msra.mxu0 0
        %3413 = vmatprep.subr.bf16.mxu0 0
        %3414 = vmatpush1.bf16.msra.mxu0 0
        %3415 = vmatprep.subr.bf16.mxu0 0
        %3416 = vmatpush1.bf16.msra.mxu0 0
        %3417 = vmatprep.subr.bf16.mxu0 0
        %3418 = vmatpush1.bf16.msra.mxu0 0
        %3419 = vmatprep.subr.bf16.mxu0 0
        %3420 = vmatpush1.bf16.msra.mxu0 0
        %3421 = vmatprep.subr.bf16.mxu0 0
        %3422 = vmatpush1.bf16.msra.mxu0 0
        %3423 = vmatprep.subr.bf16.mxu0 0
        %3424 = vmatpush1.bf16.msra.mxu0 0
        %3425 = vmatprep.mubr.bf16.mxu0 0
        %3426 = vmatmul.mubr.bf16.gmra.mrb[0].mxu0 %v3102
        %v3427 = vpop.f32.mrb[0].mxu0
        %v3428 = vadd.f32 %v3151, %v3427
        %v3429 = vpop.f32.mrb[0].mxu0
        %v3430 = vadd.f32 %v3155, %v3429
        %v3431 = vpop.f32.mrb[0].mxu0
        %v3432 = vadd.f32 %v3151, %v3431
        %v3433 = vpop.f32.mrb[0].mxu0
        %v3434 = vadd.f32 %v3155, %v3433
        %3435 = vmatprep.mubr.bf16.mxu0 0
        %3436 = vmatmul.mubr.bf16.gmra.mrb[0].mxu0 %v3103
        %v3437 = vpop.f32.mrb[0].mxu0
        %v3438 = vadd.f32 %v3151, %v3437
        %v3439 = vpop.f32.mrb[0].mxu0
        %v3440 = vadd.f32 %v3155, %v3439
        %v3441 = vpop.f32.mrb[0].mxu0
        %v3442 = vadd.f32 %v3151, %v3441
        %v3443 = vpop.f32.mrb[0].mxu0
        %v3444 = vadd.f32 %v3155, %v3443
        %3445 = vmatprep.mubr.bf16.mxu0 0
        %3446 = vmatmul.mubr.bf16.gmra.mrb[0].mxu0 %v3104
        %v3447 = vpop.f32.mrb[0].mxu0
        %v3448 = vadd.f32 %v3151, %v3447
        %v3449 = vpop.f32.mrb[0].mxu0
        %v3450 = vadd.f32 %v3155, %v3449
        %v3451 = vpop.f32.mrb[0].mxu0
        %v3452 = vadd.f32 %v3151, %v3451
        %v3453 = vpop.f32.mrb[0].mxu0
        %v3454 = vadd.f32 %v3155, %v3453
        %3455 = vmatprep.mubr.bf16.mxu0 0
        %3456 = vmatmul.mubr.bf16.gmra.mrb[0].mxu0 %v3105
        %v3457 = vpop.f32.mrb[0].mxu0
        %v3458 = vadd.f32 %v3151, %v3457
        %v3459 = vpop.f32.mrb[0].mxu0
        %v3460 = vadd.f32 %v3155, %v3459
        %v3461 = vpop.f32.mrb[0].mxu0
        %v3462 = vadd.f32 %v3151, %v3461
        %v3463 = vpop.f32.mrb[0].mxu0
        %v3464 = vadd.f32 %v3155, %v3463
        %3465 = vdwg.mxu0
        %v3466 = vmul.f32 %v3355, 1.702
        %v3467 = vmul.f32 %v3357, 1.702
        %v3468 = vmul.f32 %v3428, 1.702
        %v3469 = vmul.f32 %v3430, 1.702
        %v3470 = vmul.f32 %v3359, 1.702
        %v3471 = vmul.f32 %v3361, 1.702
        %v3472 = vmul.f32 %v3432, 1.702
        %v3473 = vmul.f32 %v3434, 1.702
        %v3474 = vmul.f32 %v3365, 1.702
        %v3475 = vmul.f32 %v3367, 1.702
        %v3476 = vmul.f32 %v3438, 1.702
        %v3477 = vmul.f32 %v3440, 1.702
        %v3478 = vmul.f32 %v3369, 1.702
        %v3479 = vmul.f32 %v3371, 1.702
        %v3480 = vmul.f32 %v3442, 1.702
        %v3481 = vmul.f32 %v3444, 1.702
        %v3482 = vmul.f32 %v3375, 1.702
        %v3483 = vmul.f32 %v3377, 1.702
        %v3484 = vmul.f32 %v3448, 1.702
        %v3485 = vmul.f32 %v3450, 1.702
        %v3486 = vmul.f32 %v3379, 1.702
        %v3487 = vmul.f32 %v3381, 1.702
        %v3488 = vmul.f32 %v3452, 1.702
        %v3489 = vmul.f32 %v3454, 1.702
        %v3490 = vmul.f32 %v3385, 1.702
        %v3491 = vmul.f32 %v3387, 1.702
        %v3492 = vmul.f32 %v3458, 1.702
        %v3493 = vmul.f32 %v3460, 1.702
        %v3494 = vmul.f32 %v3389, 1.702
        %v3495 = vmul.f32 %v3391, 1.702
        %v3496 = vmul.f32 %v3462, 1.702
        %v3497 = vmul.f32 %v3464, 1.702
        %v3498 = vxor.u32 %v3466, 2147483648
        %v3499 = vxor.u32 %v3467, 2147483648
        %v3500 = vxor.u32 %v3468, 2147483648
        %v3501 = vxor.u32 %v3469, 2147483648
        %v3502 = vxor.u32 %v3470, 2147483648
        %v3503 = vxor.u32 %v3471, 2147483648
        %v3504 = vxor.u32 %v3472, 2147483648
        %v3505 = vxor.u32 %v3473, 2147483648
        %v3506 = vxor.u32 %v3474, 2147483648
        %v3507 = vxor.u32 %v3475, 2147483648
        %v3508 = vxor.u32 %v3476, 2147483648
        %v3509 = vxor.u32 %v3477, 2147483648
        %v3510 = vxor.u32 %v3478, 2147483648
        %v3511 = vxor.u32 %v3479, 2147483648
        %v3512 = vxor.u32 %v3480, 2147483648
        %v3513 = vxor.u32 %v3481, 2147483648
        %v3514 = vxor.u32 %v3482, 2147483648
        %v3515 = vxor.u32 %v3483, 2147483648
        %v3516 = vxor.u32 %v3484, 2147483648
        %v3517 = vxor.u32 %v3485, 2147483648
        %v3518 = vxor.u32 %v3486, 2147483648
        %v3519 = vxor.u32 %v3487, 2147483648
        %v3520 = vxor.u32 %v3488, 2147483648
        %v3521 = vxor.u32 %v3489, 2147483648
        %v3522 = vxor.u32 %v3490, 2147483648
        %v3523 = vxor.u32 %v3491, 2147483648
        %v3524 = vxor.u32 %v3492, 2147483648
        %v3525 = vxor.u32 %v3493, 2147483648
        %v3526 = vxor.u32 %v3494, 2147483648
        %v3527 = vxor.u32 %v3495, 2147483648
        %v3528 = vxor.u32 %v3496, 2147483648
        %v3529 = vxor.u32 %v3497, 2147483648
        %v3530 = vmul.f32 %v3498, 1.442695
        %v3531 = vpow.pop %v3530
        %v3532 = vmul.f32 %v3499, 1.442695
        %v3533 = vpow.pop %v3532
        %v3534 = vmul.f32 %v3500, 1.442695
        %v3535 = vpow.pop %v3534
        %v3536 = vmul.f32 %v3501, 1.442695
        %v3537 = vpow.pop %v3536
        %v3538 = vmul.f32 %v3502, 1.442695
        %v3539 = vpow.pop %v3538
        %v3540 = vmul.f32 %v3503, 1.442695
        %v3541 = vpow.pop %v3540
        %v3542 = vmul.f32 %v3504, 1.442695
        %v3543 = vpow.pop %v3542
        %v3544 = vmul.f32 %v3505, 1.442695
        %v3545 = vpow.pop %v3544
        %v3546 = vmul.f32 %v3506, 1.442695
        %v3547 = vpow.pop %v3546
        %v3548 = vmul.f32 %v3507, 1.442695
        %v3549 = vpow.pop %v3548
        %v3550 = vmul.f32 %v3508, 1.442695
        %v3551 = vpow.pop %v3550
        %v3552 = vmul.f32 %v3509, 1.442695
        %v3553 = vpow.pop %v3552
        %v3554 = vmul.f32 %v3510, 1.442695
        %v3555 = vpow.pop %v3554
        %v3556 = vmul.f32 %v3511, 1.442695
        %v3557 = vpow.pop %v3556
        %v3558 = vmul.f32 %v3512, 1.442695
        %v3559 = vpow.pop %v3558
        %v3560 = vmul.f32 %v3513, 1.442695
        %v3561 = vpow.pop %v3560
        %v3562 = vmul.f32 %v3514, 1.442695
        %v3563 = vpow.pop %v3562
        %v3564 = vmul.f32 %v3515, 1.442695
        %v3565 = vpow.pop %v3564
        %v3566 = vmul.f32 %v3516, 1.442695
        %v3567 = vpow.pop %v3566
        %v3568 = vmul.f32 %v3517, 1.442695
        %v3569 = vpow.pop %v3568
        %v3570 = vmul.f32 %v3518, 1.442695
        %v3571 = vpow.pop %v3570
        %v3572 = vmul.f32 %v3519, 1.442695
        %v3573 = vpow.pop %v3572
        %v3574 = vmul.f32 %v3520, 1.442695
        %v3575 = vpow.pop %v3574
        %v3576 = vmul.f32 %v3521, 1.442695
        %v3577 = vpow.pop %v3576
        %v3578 = vmul.f32 %v3522, 1.442695
        %v3579 = vpow.pop %v3578
        %v3580 = vmul.f32 %v3523, 1.442695
        %v3581 = vpow.pop %v3580
        %v3582 = vmul.f32 %v3524, 1.442695
        %v3583 = vpow.pop %v3582
        %v3584 = vmul.f32 %v3525, 1.442695
        %v3585 = vpow.pop %v3584
        %v3586 = vmul.f32 %v3526, 1.442695
        %v3587 = vpow.pop %v3586
        %v3588 = vmul.f32 %v3527, 1.442695
        %v3589 = vpow.pop %v3588
        %v3590 = vmul.f32 %v3528, 1.442695
        %v3591 = vpow.pop %v3590
        %v3592 = vmul.f32 %v3529, 1.442695
        %v3593 = vpow.pop %v3592
        %v3594 = vadd.f32 %v3531, 1.0
        %v3595 = vadd.f32 %v3533, 1.0
        %v3596 = vadd.f32 %v3535, 1.0
        %v3597 = vadd.f32 %v3537, 1.0
        %v3598 = vadd.f32 %v3539, 1.0
        %v3599 = vadd.f32 %v3541, 1.0
        %v3600 = vadd.f32 %v3543, 1.0
        %v3601 = vadd.f32 %v3545, 1.0
        %v3602 = vadd.f32 %v3547, 1.0
        %v3603 = vadd.f32 %v3549, 1.0
        %v3604 = vadd.f32 %v3551, 1.0
        %v3605 = vadd.f32 %v3553, 1.0
        %v3606 = vadd.f32 %v3555, 1.0
        %v3607 = vadd.f32 %v3557, 1.0
        %v3608 = vadd.f32 %v3559, 1.0
        %v3609 = vadd.f32 %v3561, 1.0
        %v3610 = vadd.f32 %v3563, 1.0
        %v3611 = vadd.f32 %v3565, 1.0
        %v3612 = vadd.f32 %v3567, 1.0
        %v3613 = vadd.f32 %v3569, 1.0
        %v3614 = vadd.f32 %v3571, 1.0
        %v3615 = vadd.f32 %v3573, 1.0
        %v3616 = vadd.f32 %v3575, 1.0
        %v3617 = vadd.f32 %v3577, 1.0
        %v3618 = vadd.f32 %v3579, 1.0
        %v3619 = vadd.f32 %v3581, 1.0
        %v3620 = vadd.f32 %v3583, 1.0
        %v3621 = vadd.f32 %v3585, 1.0
        %v3622 = vadd.f32 %v3587, 1.0
        %v3623 = vadd.f32 %v3589, 1.0
        %v3624 = vadd.f32 %v3591, 1.0
        %v3625 = vadd.f32 %v3593, 1.0
        %v3626 = vrcp.pop %v3594
        %v3627 = vmul.f32 1.0, %v3626
        %v3628 = vrcp.pop %v3595
        %v3629 = vmul.f32 1.0, %v3628
        %v3630 = vrcp.pop %v3596
        %v3631 = vmul.f32 1.0, %v3630
        %v3632 = vrcp.pop %v3597
        %v3633 = vmul.f32 1.0, %v3632
        %v3634 = vrcp.pop %v3598
        %v3635 = vmul.f32 1.0, %v3634
        %v3636 = vrcp.pop %v3599
        %v3637 = vmul.f32 1.0, %v3636
        %v3638 = vrcp.pop %v3600
        %v3639 = vmul.f32 1.0, %v3638
        %v3640 = vrcp.pop %v3601
        %v3641 = vmul.f32 1.0, %v3640
        %v3642 = vrcp.pop %v3602
        %v3643 = vmul.f32 1.0, %v3642
        %v3644 = vrcp.pop %v3603
        %v3645 = vmul.f32 1.0, %v3644
        %v3646 = vrcp.pop %v3604
        %v3647 = vmul.f32 1.0, %v3646
        %v3648 = vrcp.pop %v3605
        %v3649 = vmul.f32 1.0, %v3648
        %v3650 = vrcp.pop %v3606
        %v3651 = vmul.f32 1.0, %v3650
        %v3652 = vrcp.pop %v3607
        %v3653 = vmul.f32 1.0, %v3652
        %v3654 = vrcp.pop %v3608
        %v3655 = vmul.f32 1.0, %v3654
        %v3656 = vrcp.pop %v3609
        %v3657 = vmul.f32 1.0, %v3656
        %v3658 = vrcp.pop %v3610
        %v3659 = vmul.f32 1.0, %v3658
        %v3660 = vrcp.pop %v3611
        %v3661 = vmul.f32 1.0, %v3660
        %v3662 = vrcp.pop %v3612
        %v3663 = vmul.f32 1.0, %v3662
        %v3664 = vrcp.pop %v3613
        %v3665 = vmul.f32 1.0, %v3664
        %v3666 = vrcp.pop %v3614
        %v3667 = vmul.f32 1.0, %v3666
        %v3668 = vrcp.pop %v3615
        %v3669 = vmul.f32 1.0, %v3668
        %v3670 = vrcp.pop %v3616
        %v3671 = vmul.f32 1.0, %v3670
        %v3672 = vrcp.pop %v3617
        %v3673 = vmul.f32 1.0, %v3672
        %v3674 = vrcp.pop %v3618
        %v3675 = vmul.f32 1.0, %v3674
        %v3676 = vrcp.pop %v3619
        %v3677 = vmul.f32 1.0, %v3676
        %v3678 = vrcp.pop %v3620
        %v3679 = vmul.f32 1.0, %v3678
        %v3680 = vrcp.pop %v3621
        %v3681 = vmul.f32 1.0, %v3680
        %v3682 = vrcp.pop %v3622
        %v3683 = vmul.f32 1.0, %v3682
        %v3684 = vrcp.pop %v3623
        %v3685 = vmul.f32 1.0, %v3684
        %v3686 = vrcp.pop %v3624
        %v3687 = vmul.f32 1.0, %v3686
        %v3688 = vrcp.pop %v3625
        %v3689 = vmul.f32 1.0, %v3688
        %v3690 = vmul.f32 %v3355, %v3627
        %v3691 = vmul.f32 %v3357, %v3629
        %v3692 = vmul.f32 %v3428, %v3631
        %v3693 = vmul.f32 %v3430, %v3633
        %v3694 = vmul.f32 %v3359, %v3635
        %v3695 = vmul.f32 %v3361, %v3637
        %v3696 = vmul.f32 %v3432, %v3639
        %v3697 = vmul.f32 %v3434, %v3641
        %v3698 = vmul.f32 %v3365, %v3643
        %v3699 = vmul.f32 %v3367, %v3645
        %v3700 = vmul.f32 %v3438, %v3647
        %v3701 = vmul.f32 %v3440, %v3649
        %v3702 = vmul.f32 %v3369, %v3651
        %v3703 = vmul.f32 %v3371, %v3653
        %v3704 = vmul.f32 %v3442, %v3655
        %v3705 = vmul.f32 %v3444, %v3657
        %v3706 = vmul.f32 %v3375, %v3659
        %v3707 = vmul.f32 %v3377, %v3661
        %v3708 = vmul.f32 %v3448, %v3663
        %v3709 = vmul.f32 %v3450, %v3665
        %v3710 = vmul.f32 %v3379, %v3667
        %v3711 = vmul.f32 %v3381, %v3669
        %v3712 = vmul.f32 %v3452, %v3671
        %v3713 = vmul.f32 %v3454, %v3673
        %v3714 = vmul.f32 %v3385, %v3675
        %v3715 = vmul.f32 %v3387, %v3677
        %v3716 = vmul.f32 %v3458, %v3679
        %v3717 = vmul.f32 %v3460, %v3681
        %v3718 = vmul.f32 %v3389, %v3683
        %v3719 = vmul.f32 %v3391, %v3685
        %v3720 = vmul.f32 %v3462, %v3687
        %v3721 = vmul.f32 %v3464, %v3689
        %v3722 = vpack.c.bf16 %v3694, %v3690
        %v3723 = vpack.c.bf16 %v3695, %v3691
        %v3724 = vpack.c.bf16 %v3696, %v3692
        %v3725 = vpack.c.bf16 %v3697, %v3693
        %v3726 = vpack.c.bf16 %v3702, %v3698
        %v3727 = vpack.c.bf16 %v3703, %v3699
        %v3728 = vpack.c.bf16 %v3704, %v3700
        %v3729 = vpack.c.bf16 %v3705, %v3701
        %v3730 = vpack.c.bf16 %v3710, %v3706
        %v3731 = vpack.c.bf16 %v3711, %v3707
        %v3732 = vpack.c.bf16 %v3712, %v3708
        %v3733 = vpack.c.bf16 %v3713, %v3709
        %v3734 = vpack.c.bf16 %v3718, %v3714
        %v3735 = vpack.c.bf16 %v3719, %v3715
        %v3736 = vpack.c.bf16 %v3720, %v3716
        %v3737 = vpack.c.bf16 %v3721, %v3717
        %v3738 = vld [vmem:[#allocation16] sm:$0xf]
        %v3739 = vld [vmem:[#allocation16 + $0x4] sm:$0xf]
        %v3740 = vld [vmem:[#allocation16 + $0x8] sm:$0xf]
        %v3741 = vld [vmem:[#allocation16 + $0xc] sm:$0xf]
        %v3742 = vld [vmem:[#allocation16 + $0x10] sm:$0xf]
        %v3743 = vld [vmem:[#allocation16 + $0x14] sm:$0xf]
        %v3744 = vld [vmem:[#allocation16 + $0x18] sm:$0xf]
        %v3745 = vld [vmem:[#allocation16 + $0x1c] sm:$0xf]
        %v3746 = vld [vmem:[#allocation16 + $0x20] sm:$0xf]
        %v3747 = vld [vmem:[#allocation16 + $0x24] sm:$0xf]
        %v3748 = vld [vmem:[#allocation16 + $0x28] sm:$0xf]
        %v3749 = vld [vmem:[#allocation16 + $0x2c] sm:$0xf]
        %v3750 = vld [vmem:[#allocation16 + $0x30] sm:$0xf]
        %v3751 = vld [vmem:[#allocation16 + $0x34] sm:$0xf]
        %v3752 = vld [vmem:[#allocation16 + $0x38] sm:$0xf]
        %v3753 = vld [vmem:[#allocation16 + $0x3c] sm:$0xf]
        %v3754 = vld [vmem:[#allocation16 + $0x40] sm:$0xf]
        %v3755 = vld [vmem:[#allocation16 + $0x44] sm:$0xf]
        %v3756 = vld [vmem:[#allocation16 + $0x48] sm:$0xf]
        %v3757 = vld [vmem:[#allocation16 + $0x4c] sm:$0xf]
        %v3758 = vld [vmem:[#allocation16 + $0x50] sm:$0xf]
        %v3759 = vld [vmem:[#allocation16 + $0x54] sm:$0xf]
        %v3760 = vld [vmem:[#allocation16 + $0x58] sm:$0xf]
        %v3761 = vld [vmem:[#allocation16 + $0x5c] sm:$0xf]
        %v3762 = vld [vmem:[#allocation16 + $0x60] sm:$0xf]
        %v3763 = vld [vmem:[#allocation16 + $0x64] sm:$0xf]
        %v3764 = vld [vmem:[#allocation16 + $0x68] sm:$0xf]
        %v3765 = vld [vmem:[#allocation16 + $0x6c] sm:$0xf]
        %v3766 = vld [vmem:[#allocation16 + $0x70] sm:$0xf]
        %v3767 = vld [vmem:[#allocation16 + $0x74] sm:$0xf]
        %v3768 = vld [vmem:[#allocation16 + $0x78] sm:$0xf]
        %v3769 = vld [vmem:[#allocation16 + $0x7c] sm:$0xf]
        %v3770 = vld [vmem:[#allocation16 + $0x80] sm:$0xf]
        %v3771 = vld [vmem:[#allocation16 + $0x84] sm:$0xf]
        %v3772 = vld [vmem:[#allocation16 + $0x88] sm:$0xf]
        %v3773 = vld [vmem:[#allocation16 + $0x8c] sm:$0xf]
        %v3774 = vld [vmem:[#allocation16 + $0x90] sm:$0xf]
        %v3775 = vld [vmem:[#allocation16 + $0x94] sm:$0xf]
        %v3776 = vld [vmem:[#allocation16 + $0x98] sm:$0xf]
        %v3777 = vld [vmem:[#allocation16 + $0x9c] sm:$0xf]
        %v3778 = vld [vmem:[#allocation16 + $0xa0] sm:$0xf]
        %v3779 = vld [vmem:[#allocation16 + $0xa4] sm:$0xf]
        %v3780 = vld [vmem:[#allocation16 + $0xa8] sm:$0xf]
        %v3781 = vld [vmem:[#allocation16 + $0xac] sm:$0xf]
        %v3782 = vld [vmem:[#allocation16 + $0xb0] sm:$0xf]
        %v3783 = vld [vmem:[#allocation16 + $0xb4] sm:$0xf]
        %v3784 = vld [vmem:[#allocation16 + $0xb8] sm:$0xf]
        %v3785 = vld [vmem:[#allocation16 + $0xbc] sm:$0xf]
        %v3786 = vld [vmem:[#allocation16 + $0xc0] sm:$0xf]
        %v3787 = vld [vmem:[#allocation16 + $0xc4] sm:$0xf]
        %v3788 = vld [vmem:[#allocation16 + $0xc8] sm:$0xf]
        %v3789 = vld [vmem:[#allocation16 + $0xcc] sm:$0xf]
        %v3790 = vld [vmem:[#allocation16 + $0xd0] sm:$0xf]
        %v3791 = vld [vmem:[#allocation16 + $0xd4] sm:$0xf]
        %v3792 = vld [vmem:[#allocation16 + $0xd8] sm:$0xf]
        %v3793 = vld [vmem:[#allocation16 + $0xdc] sm:$0xf]
        %v3794 = vld [vmem:[#allocation16 + $0xe0] sm:$0xf]
        %v3795 = vld [vmem:[#allocation16 + $0xe4] sm:$0xf]
        %v3796 = vld [vmem:[#allocation16 + $0xe8] sm:$0xf]
        %v3797 = vld [vmem:[#allocation16 + $0xec] sm:$0xf]
        %v3798 = vld [vmem:[#allocation16 + $0xf0] sm:$0xf]
        %v3799 = vld [vmem:[#allocation16 + $0xf4] sm:$0xf]
        %v3800 = vld [vmem:[#allocation16 + $0xf8] sm:$0xf]
        %v3801 = vld [vmem:[#allocation16 + $0xfc] sm:$0xf]
        %v3802 = vld [vmem:[%s14] sm:$0x1]
        %v3804 = vlaneseq
        %v3805 = vshrl.u32 %v3804, 7
        %v3806 = vsub.s32 0, %v3805
        %v3807 = vrot.slane %v3802, %v3806
        %v3873 = vunpack.c.l.b16 %v3738
        %v3874 = vunpack.c.l.b16 %v3739
        %v3875 = vunpack.c.l.b16 %v3740
        %v3876 = vunpack.c.l.b16 %v3741
        %v3877 = vunpack.c.l.b16 %v3742
        %v3878 = vunpack.c.l.b16 %v3743
        %v3879 = vunpack.c.l.b16 %v3744
        %v3880 = vunpack.c.l.b16 %v3745
        %v3881 = vunpack.c.l.b16 %v3746
        %v3882 = vunpack.c.l.b16 %v3747
        %v3883 = vunpack.c.l.b16 %v3748
        %v3884 = vunpack.c.l.b16 %v3749
        %v3885 = vunpack.c.l.b16 %v3750
        %v3886 = vunpack.c.l.b16 %v3751
        %v3887 = vunpack.c.l.b16 %v3752
        %v3888 = vunpack.c.l.b16 %v3753
        %v3889 = vunpack.c.l.b16 %v3754
        %v3890 = vunpack.c.l.b16 %v3755
        %v3891 = vunpack.c.l.b16 %v3756
        %v3892 = vunpack.c.l.b16 %v3757
        %v3893 = vunpack.c.l.b16 %v3758
        %v3894 = vunpack.c.l.b16 %v3759
        %v3895 = vunpack.c.l.b16 %v3760
        %v3896 = vunpack.c.l.b16 %v3761
        %v3897 = vunpack.c.l.b16 %v3762
        %v3898 = vunpack.c.l.b16 %v3763
        %v3899 = vunpack.c.l.b16 %v3764
        %v3900 = vunpack.c.l.b16 %v3765
        %v3901 = vunpack.c.l.b16 %v3766
        %v3902 = vunpack.c.l.b16 %v3767
        %v3903 = vunpack.c.l.b16 %v3768
        %v3904 = vunpack.c.l.b16 %v3769
        %v3905 = vunpack.c.l.b16 %v3770
        %v3906 = vunpack.c.l.b16 %v3771
        %v3907 = vunpack.c.l.b16 %v3772
        %v3908 = vunpack.c.l.b16 %v3773
        %v3909 = vunpack.c.l.b16 %v3774
        %v3910 = vunpack.c.l.b16 %v3775
        %v3911 = vunpack.c.l.b16 %v3776
        %v3912 = vunpack.c.l.b16 %v3777
        %v3913 = vunpack.c.l.b16 %v3778
        %v3914 = vunpack.c.l.b16 %v3779
        %v3915 = vunpack.c.l.b16 %v3780
        %v3916 = vunpack.c.l.b16 %v3781
        %v3917 = vunpack.c.l.b16 %v3782
        %v3918 = vunpack.c.l.b16 %v3783
        %v3919 = vunpack.c.l.b16 %v3784
        %v3920 = vunpack.c.l.b16 %v3785
        %v3921 = vunpack.c.l.b16 %v3786
        %v3922 = vunpack.c.l.b16 %v3787
        %v3923 = vunpack.c.l.b16 %v3788
        %v3924 = vunpack.c.l.b16 %v3789
        %v3925 = vunpack.c.l.b16 %v3790
        %v3926 = vunpack.c.l.b16 %v3791
        %v3927 = vunpack.c.l.b16 %v3792
        %v3928 = vunpack.c.l.b16 %v3793
        %v3929 = vunpack.c.l.b16 %v3794
        %v3930 = vunpack.c.l.b16 %v3795
        %v3931 = vunpack.c.l.b16 %v3796
        %v3932 = vunpack.c.l.b16 %v3797
        %v3933 = vunpack.c.l.b16 %v3798
        %v3934 = vunpack.c.l.b16 %v3799
        %v3935 = vunpack.c.l.b16 %v3800
        %v3936 = vunpack.c.l.b16 %v3801
        %v3937 = vpack.c.b16 %v3874, %v3873
        %v3938 = vpack.c.b16 %v3876, %v3875
        %v3939 = vpack.c.b16 %v3878, %v3877
        %v3940 = vpack.c.b16 %v3880, %v3879
        %v3941 = vpack.c.b16 %v3882, %v3881
        %v3942 = vpack.c.b16 %v3884, %v3883
        %v3943 = vpack.c.b16 %v3886, %v3885
        %v3944 = vpack.c.b16 %v3888, %v3887
        %v3945 = vpack.c.b16 %v3890, %v3889
        %v3946 = vpack.c.b16 %v3892, %v3891
        %v3947 = vpack.c.b16 %v3894, %v3893
        %v3948 = vpack.c.b16 %v3896, %v3895
        %v3949 = vpack.c.b16 %v3898, %v3897
        %v3950 = vpack.c.b16 %v3900, %v3899
        %v3951 = vpack.c.b16 %v3902, %v3901
        %v3952 = vpack.c.b16 %v3904, %v3903
        %v3953 = vpack.c.b16 %v3906, %v3905
        %v3954 = vpack.c.b16 %v3908, %v3907
        %v3955 = vpack.c.b16 %v3910, %v3909
        %v3956 = vpack.c.b16 %v3912, %v3911
        %v3957 = vpack.c.b16 %v3914, %v3913
        %v3958 = vpack.c.b16 %v3916, %v3915
        %v3959 = vpack.c.b16 %v3918, %v3917
        %v3960 = vpack.c.b16 %v3920, %v3919
        %v3961 = vpack.c.b16 %v3922, %v3921
        %v3962 = vpack.c.b16 %v3924, %v3923
        %v3963 = vpack.c.b16 %v3926, %v3925
        %v3964 = vpack.c.b16 %v3928, %v3927
        %v3965 = vpack.c.b16 %v3930, %v3929
        %v3966 = vpack.c.b16 %v3932, %v3931
        %v3967 = vpack.c.b16 %v3934, %v3933
        %v3968 = vpack.c.b16 %v3936, %v3935
        %4001 = vmatprep.subr.bf16.mxu0 0
        %4002 = vmatpush1.bf16.msra.mxu0 %v3937
        %4003 = vmatprep.subr.bf16.mxu0 0
        %4004 = vmatpush1.bf16.msra.mxu0 %v3938
        %4005 = vmatprep.subr.bf16.mxu0 0
        %4006 = vmatpush1.bf16.msra.mxu0 %v3939
        %4007 = vmatprep.subr.bf16.mxu0 0
        %4008 = vmatpush1.bf16.msra.mxu0 %v3940
        %4009 = vmatprep.subr.bf16.mxu0 0
        %4010 = vmatpush1.bf16.msra.mxu0 %v3941
        %4011 = vmatprep.subr.bf16.mxu0 0
        %4012 = vmatpush1.bf16.msra.mxu0 %v3942
        %4013 = vmatprep.subr.bf16.mxu0 0
        %4014 = vmatpush1.bf16.msra.mxu0 %v3943
        %4015 = vmatprep.subr.bf16.mxu0 0
        %4016 = vmatpush1.bf16.msra.mxu0 %v3944
        %4017 = vmatprep.subr.bf16.mxu0 0
        %4018 = vmatpush1.bf16.msra.mxu0 %v3945
        %4019 = vmatprep.subr.bf16.mxu0 0
        %4020 = vmatpush1.bf16.msra.mxu0 %v3946
        %4021 = vmatprep.subr.bf16.mxu0 0
        %4022 = vmatpush1.bf16.msra.mxu0 %v3947
        %4023 = vmatprep.subr.bf16.mxu0 0
        %4024 = vmatpush1.bf16.msra.mxu0 %v3948
        %4025 = vmatprep.subr.bf16.mxu0 0
        %4026 = vmatpush1.bf16.msra.mxu0 %v3949
        %4027 = vmatprep.subr.bf16.mxu0 0
        %4028 = vmatpush1.bf16.msra.mxu0 %v3950
        %4029 = vmatprep.subr.bf16.mxu0 0
        %4030 = vmatpush1.bf16.msra.mxu0 %v3951
        %4031 = vmatprep.subr.bf16.mxu0 0
        %4032 = vmatpush1.bf16.msra.mxu0 %v3952
        %4033 = vmatprep.mubr.bf16.mxu0 %v3723
        %4034 = vmatmul.mubr.bf16.gmra.mrb[0].mxu0 %v3722
        %v4035 = vpop.f32.mrb[0].mxu0
        %v4036 = vadd.f32 %v3807, %v4035
        %v4037 = vpop.f32.mrb[0].mxu0
        %v4038 = vpop.f32.mrb[0].mxu0
        %v4039 = vadd.f32 %v3807, %v4038
        %v4040 = vpop.f32.mrb[0].mxu0
        %4041 = vmatprep.mubr.bf16.mxu0 %v3727
        %4042 = vmatmul.mubr.bf16.gmra.mrb[0].mxu0 %v3726
        %v4043 = vpop.f32.mrb[0].mxu0
        %v4044 = vadd.f32 %v3807, %v4043
        %v4045 = vpop.f32.mrb[0].mxu0
        %v4046 = vpop.f32.mrb[0].mxu0
        %v4047 = vadd.f32 %v3807, %v4046
        %v4048 = vpop.f32.mrb[0].mxu0
        %4049 = vmatprep.mubr.bf16.mxu0 %v3731
        %4050 = vmatmul.mubr.bf16.gmra.mrb[0].mxu0 %v3730
        %v4051 = vpop.f32.mrb[0].mxu0
        %v4052 = vadd.f32 %v3807, %v4051
        %v4053 = vpop.f32.mrb[0].mxu0
        %v4054 = vpop.f32.mrb[0].mxu0
        %v4055 = vadd.f32 %v3807, %v4054
        %v4056 = vpop.f32.mrb[0].mxu0
        %4057 = vmatprep.mubr.bf16.mxu0 %v3735
        %4058 = vmatmul.mubr.bf16.gmra.mrb[0].mxu0 %v3734
        %v4059 = vpop.f32.mrb[0].mxu0
        %v4060 = vadd.f32 %v3807, %v4059
        %v4061 = vpop.f32.mrb[0].mxu0
        %v4062 = vpop.f32.mrb[0].mxu0
        %v4063 = vadd.f32 %v3807, %v4062
        %v4064 = vpop.f32.mrb[0].mxu0
        %4065 = vdwg.mxu0
        %4066 = vmatprep.subr.bf16.mxu0 0
        %4067 = vmatpush1.bf16.msra.mxu0 %v3953
        %4068 = vmatprep.subr.bf16.mxu0 0
        %4069 = vmatpush1.bf16.msra.mxu0 %v3954
        %4070 = vmatprep.subr.bf16.mxu0 0
        %4071 = vmatpush1.bf16.msra.mxu0 %v3955
        %4072 = vmatprep.subr.bf16.mxu0 0
        %4073 = vmatpush1.bf16.msra.mxu0 %v3956
        %4074 = vmatprep.subr.bf16.mxu0 0
        %4075 = vmatpush1.bf16.msra.mxu0 %v3957
        %4076 = vmatprep.subr.bf16.mxu0 0
        %4077 = vmatpush1.bf16.msra.mxu0 %v3958
        %4078 = vmatprep.subr.bf16.mxu0 0
        %4079 = vmatpush1.bf16.msra.mxu0 %v3959
        %4080 = vmatprep.subr.bf16.mxu0 0
        %4081 = vmatpush1.bf16.msra.mxu0 %v3960
        %4082 = vmatprep.subr.bf16.mxu0 0
        %4083 = vmatpush1.bf16.msra.mxu0 %v3961
        %4084 = vmatprep.subr.bf16.mxu0 0
        %4085 = vmatpush1.bf16.msra.mxu0 %v3962
        %4086 = vmatprep.subr.bf16.mxu0 0
        %4087 = vmatpush1.bf16.msra.mxu0 %v3963
        %4088 = vmatprep.subr.bf16.mxu0 0
        %4089 = vmatpush1.bf16.msra.mxu0 %v3964
        %4090 = vmatprep.subr.bf16.mxu0 0
        %4091 = vmatpush1.bf16.msra.mxu0 %v3965
        %4092 = vmatprep.subr.bf16.mxu0 0
        %4093 = vmatpush1.bf16.msra.mxu0 %v3966
        %4094 = vmatprep.subr.bf16.mxu0 0
        %4095 = vmatpush1.bf16.msra.mxu0 %v3967
        %4096 = vmatprep.subr.bf16.mxu0 0
        %4097 = vmatpush1.bf16.msra.mxu0 %v3968
        %4098 = vmatprep.mubr.bf16.mxu0 %v3725
        %4099 = vmatmul.mubr.bf16.gmra.mrb[0].mxu0 %v3724
        %v4100 = vpop.f32.mrb[0].mxu0
        %v4101 = vadd.f32 %v4036, %v4100
        %v4102 = vpop.f32.mrb[0].mxu0
        %v4103 = vpop.f32.mrb[0].mxu0
        %v4104 = vadd.f32 %v4039, %v4103
        %v4105 = vpop.f32.mrb[0].mxu0
        %4106 = vmatprep.mubr.bf16.mxu0 %v3729
        %4107 = vmatmul.mubr.bf16.gmra.mrb[0].mxu0 %v3728
        %v4108 = vpop.f32.mrb[0].mxu0
        %v4109 = vadd.f32 %v4044, %v4108
        %v4110 = vpop.f32.mrb[0].mxu0
        %v4111 = vpop.f32.mrb[0].mxu0
        %v4112 = vadd.f32 %v4047, %v4111
        %v4113 = vpop.f32.mrb[0].mxu0
        %4114 = vmatprep.mubr.bf16.mxu0 %v3733
        %4115 = vmatmul.mubr.bf16.gmra.mrb[0].mxu0 %v3732
        %v4116 = vpop.f32.mrb[0].mxu0
        %v4117 = vadd.f32 %v4052, %v4116
        %v4118 = vpop.f32.mrb[0].mxu0
        %v4119 = vpop.f32.mrb[0].mxu0
        %v4120 = vadd.f32 %v4055, %v4119
        %v4121 = vpop.f32.mrb[0].mxu0
        %4122 = vmatprep.mubr.bf16.mxu0 %v3737
        %4123 = vmatmul.mubr.bf16.gmra.mrb[0].mxu0 %v3736
        %v4124 = vpop.f32.mrb[0].mxu0
        %v4125 = vadd.f32 %v4060, %v4124
        %v4126 = vpop.f32.mrb[0].mxu0
        %v4127 = vpop.f32.mrb[0].mxu0
        %v4128 = vadd.f32 %v4063, %v4127
        %v4129 = vpop.f32.mrb[0].mxu0
        %4130 = vdwg.mxu0
        %v4131 = vadd.f32 %v2976, %v4101
        %v4132 = vadd.f32 %v2977, %v4104
        %v4133 = vadd.f32 %v2978, %v4109
        %v4134 = vadd.f32 %v2979, %v4112
        %v4135 = vadd.f32 %v2980, %v4117
        %v4136 = vadd.f32 %v2981, %v4120
        %v4137 = vadd.f32 %v2982, %v4125
        %v4138 = vadd.f32 %v2983, %v4128
        %4139 = vst [vmem:[%s611] sm:$0xff] %v4131
        %4140 = vst [vmem:[%s611 + $0x8] sm:$0xff] %v4132
        %4141 = vst [vmem:[%s611 + $0x10] sm:$0xff] %v4133
        %4142 = vst [vmem:[%s611 + $0x18] sm:$0xff] %v4134
        %4143 = vst [vmem:[%s611 + $0x20] sm:$0xff] %v4135
        %4144 = vst [vmem:[%s611 + $0x28] sm:$0xff] %v4136
        %4145 = vst [vmem:[%s611 + $0x30] sm:$0xff] %v4137
        %4146 = vst [vmem:[%s611 + $0x38] sm:$0xff] %v4138
        %s4147 = sand.u32 %s377, 1
        %s4148 = scalar_lea.sflag [#allocation7], %s4147
        %s4149 = sand.u32 %s377, 1
        %s4150 = smul.addr %s4149, 64
        %s4151 = scalar_lea.vmem [#allocation17], %s4150
        // Predicated region
        $region113: #{tpu_custom_call.1} parent=79 // pred_check
          %p4152 = pneg %p387
        $region114: #{tpu_custom_call.1} parent=79 // pred_check_branch
          %4154 = sbr.rel (%p4152) target = $region116
        $region115: #{tpu_custom_call.1} parent=79 // pred_region
          %s4155 = smul.u32 8, %s40
          %s4157 = ssub.s32 1024, 1024
          %4158 = vsyncadd %s4148, %s4157
          %s4159 = smul.addr %s39, 16
          %s4160 = sadd.s32 %s4155, %s4159
          %s4161 = smul.addr %s4160, 128
          %s4162 = scalar_lea.hbm %s15, %s4161
          %s4163 = sshll.u32 %s4151, 4
          %s4164 = int_to_ptr.vmem [resolvable:$true] %s4163
          %4169 = dma.vmem_to_hbm [thread:$0]  %s4164, 1024, %s4162, %s4148, 128, 128, 8
        $region116: #{tpu_custom_call.1} parent=79 // pred_fallthru
          _
      $region80: #{tpu_custom_call.1} parent=5 // pred_fallthru
        _
      %p4170 = scmp.le.s32.totalorder 2, %s30
      // Predicated region
      $region117: #{tpu_custom_call.1} parent=5 // pred_check
        %p4171 = pneg %p4170
      $region118: #{tpu_custom_call.1} parent=5 // pred_check_branch
        %4173 = sbr.rel (%p4171) target = $region120
      $region119: #{tpu_custom_call.1} parent=5 // pred_region
        %s4174 = ssub.s32 %s30, 2
        // Predicated region
        $region121: #{tpu_custom_call.1} parent=119 // pred_check
          %p4175 = pneg %p393
        $region122: #{tpu_custom_call.1} parent=119 // pred_check_branch
          %4177 = sbr.rel (%p4175) target = $region124
        $region123: #{tpu_custom_call.1} parent=119 // pred_region
          %s4178 = sand.u32 %s378, 1
          %s4179 = scalar_lea.sflag [#allocation7], %s4178
          %s4180 = sand.u32 %s378, 1
          %s4181 = smul.addr %s4180, 64
          %s4182 = scalar_lea.vmem [#allocation17], %s4181
          %4183 = dma.done %s4179, 1024
        $region124: #{tpu_custom_call.1} parent=119 // pred_fallthru
          _
      $region120: #{tpu_custom_call.1} parent=5 // pred_fallthru
        _
    $region6: #{tpu_custom_call.1} parent=1 // loop_footer
      %s34 = sadd.s32 1, %s30
    $region7: #{tpu_custom_call.1} parent=1 // loop_footer_branch
      %29 = sbr.rel target = $region3
    $region8: #{tpu_custom_call.1} parent=1 // loop_exit
      _
    %4184 = vsyncpa [#allocation6], 1
    %s4185 = scalar_lea.sflag [#allocation6], 1
    %4186 = vsyncpa %s4185, 1
    %4187 = vsyncpa [#allocation9], 1
    %4188 = vsyncpa [#allocation12], 1
    %4189 = vsyncpa [#allocation15], 1
    %4190 = vsyncpa [#allocation7], 1
    %s4191 = scalar_lea.sflag [#allocation7], 1
    %4192 = vsyncpa %s4191, 1

</llo_original>
